<compile_context>
chip_gen: v6e
topology: v6e:2x2x1
jax: 0.10.0
libtpu: 0.0.40
codegen_flags: <defaults>
</compile_context>

<pallas_src>
import functools
import math

import jax
import jax.numpy as jnp
from jax.experimental import pallas as pl
from jax.experimental.pallas import tpu as pltpu


# ---------------------------------------------------------------------------
# Helpers
# ---------------------------------------------------------------------------

def _row_tile(M):
    """Row tile for [M, *] slabs.

    Prefers 256-multiples (v6e/v7x MXU), caps at 512 rows (VMEM), and keeps
    >= 2 grid steps whenever M allows (v7x has 2 TensorCores).  Grids use
    pl.cdiv, so non-divisible M just yields a masked edge block.
    """
    if M <= 8:
        return M
    if M <= 512:
        half = (M + 1) // 2
        return max(8, ((half + 7) // 8) * 8)     # ~M/2, multiple of 8
    if M >= 1024:
        return 512
    return 256


def _cparams(n_grid_dims, est_vmem_bytes):
    """Compiler params: parallel grid axes + a VMEM limit sized from the
    actual block/buffer footprint (clamped to 32..56 MiB)."""
    limit = int(min(max(est_vmem_bytes + (8 << 20), 32 << 20), 56 << 20))
    return pltpu.CompilerParams(
        dimension_semantics=("parallel",) * n_grid_dims,
        vmem_limit_bytes=limit)


def _single_buffered(shape):
    """Constant-index weight block: ONE resident VMEM copy instead of the
    default double buffer (critical for large D / d_ff on v7x's 64 MiB)."""
    nd = len(shape)
    return pl.BlockSpec(shape, lambda *_: (0,) * nd,
                        pipeline_mode=pl.Buffered(1))


# ---------------------------------------------------------------------------
# Pallas kernels
# ---------------------------------------------------------------------------

def _attn_layer_kernel(*refs, heads, scale, eps, add_pe, q_chunk):
    """Fused: (+PE) -> QKV proj -> MHA -> out proj -> +residual -> LayerNorm1.

    One grid step per batch element; heads are a leading batch dim of every
    matmul (no lane-dim head slices, no concatenation, no transposes).
    """
    if add_pe:
        (x_ref, pe_ref, mask_ref, wq_ref, wk_ref, wv_ref, bq_ref, bk_ref,
         bv_ref, wo_ref, bo_ref, g_ref, be_ref, o_ref) = refs
    else:
        (x_ref, mask_ref, wq_ref, wk_ref, wv_ref, bq_ref, bk_ref,
         bv_ref, wo_ref, bo_ref, g_ref, be_ref, o_ref) = refs
        pe_ref = None

    x = x_ref[0].astype(jnp.float32)                         # (S, D)
    if add_pe:
        x = x + pe_ref[...]
    s, d = x.shape

    # Head-batched Q/K/V projections: weights are (H, D, dh), so each einsum
    # is a single batched MXU matmul with full-D contraction.
    xb = jnp.broadcast_to(x.astype(jnp.bfloat16)[None], (heads, s, d))
    q = (jnp.einsum('hsd,hdf->hsf', xb, wq_ref[...],
                    preferred_element_type=jnp.float32)
         + bq_ref[...]).astype(jnp.bfloat16)                 # (H, S, dh)
    k = (jnp.einsum('hsd,hdf->hsf', xb, wk_ref[...],
                    preferred_element_type=jnp.float32)
         + bk_ref[...]).astype(jnp.bfloat16)
    v = (jnp.einsum('hsd,hdf->hsf', xb, wv_ref[...],
                    preferred_element_type=jnp.float32)
         + bv_ref[...]).astype(jnp.bfloat16)

    # K/V stay VMEM-resident; Q is processed in chunks so the live score
    # tensor is bounded to (H, q_chunk, S) f32.
    # TODO(synk): for very long sequences switch to flash-style online softmax
    #             over K/V tiles instead of keeping the full K/V in VMEM.
    for start in range(0, s, q_chunk):
        size = min(q_chunk, s - start)
        qc = q[:, start:start + size, :]                     # (H, TQ, dh)
        sc = jnp.einsum('hqd,hkd->hqk', qc, k,
                        preferred_element_type=jnp.float32) * scale
        sc = sc + mask_ref[start:start + size, :][None, :, :]
        mx = jnp.max(sc, axis=-1, keepdims=True)
        p = jnp.exp(sc - mx)
        p = p * pl.reciprocal(jnp.sum(p, axis=-1, keepdims=True), approx=True)
        oc = jnp.einsum('hqk,hkd->hqd', p.astype(jnp.bfloat16), v,
                        preferred_element_type=jnp.float32)  # (H, TQ, dh)

        # Output projection per head (wo is (H, dh, D)) then summed over heads
        # -- same FLOPs as concat + (S,D)x(D,D), zero lane shuffles.
        y = jnp.einsum('hqd,hdf->hqf', oc.astype(jnp.bfloat16), wo_ref[...],
                       preferred_element_type=jnp.float32)   # (H, TQ, D)
        y = jnp.sum(y, axis=0) + bo_ref[...]                 # (TQ, D)

        r = x[start:start + size, :] + y                     # residual (f32)
        mu = jnp.mean(r, axis=-1, keepdims=True)
        var = jnp.mean((r - mu) ** 2, axis=-1, keepdims=True)
        out = (r - mu) * jax.lax.rsqrt(var + eps) * g_ref[...] + be_ref[...]
        if size == s:
            o_ref[0] = out.astype(o_ref.dtype)
        else:
            o_ref[0, start:start + size, :] = out.astype(o_ref.dtype)


def _ffn_res_ln_kernel(x_ref, w1_ref, b1_ref, w2_ref, b2_ref, g_ref, be_ref,
                       o_ref, *, eps):
    """Fused: FFN (w1 -> ReLU -> w2) + residual add + LayerNorm2."""
    xr = x_ref[...]                                          # read tile ONCE
    h = jnp.dot(xr.astype(jnp.bfloat16), w1_ref[...],
                preferred_element_type=jnp.float32) + b1_ref[...]
    h = jnp.maximum(h, 0.0)                                  # ReLU
    y = jnp.dot(h.astype(jnp.bfloat16), w2_ref[...],
                preferred_element_type=jnp.float32) + b2_ref[...]
    r = xr.astype(jnp.float32) + y                           # residual (f32)
    mu = jnp.mean(r, axis=-1, keepdims=True)
    var = jnp.mean((r - mu) ** 2, axis=-1, keepdims=True)
    o_ref[...] = ((r - mu) * jax.lax.rsqrt(var + eps) * g_ref[...]
                  + be_ref[...]).astype(o_ref.dtype)


def _linear_kernel(x_ref, w_ref, b_ref, o_ref):
    y = jnp.dot(x_ref[...].astype(jnp.bfloat16), w_ref[...],
                preferred_element_type=jnp.float32) + b_ref[...]
    o_ref[...] = y.astype(o_ref.dtype)


# ---------------------------------------------------------------------------
# Pallas wrappers
# ---------------------------------------------------------------------------

def pallas_attn_layer(x, layer, mask, *, heads, eps, pe=None):
    B, S, D = x.shape
    dh = D // heads
    add_pe = pe is not None
    q_chunk = min(S, 512)
    kernel = functools.partial(_attn_layer_kernel, heads=heads,
                               scale=1.0 / math.sqrt(dh), eps=eps,
                               add_pe=add_pe, q_chunk=q_chunk)

    xspec = pl.BlockSpec((1, S, D), lambda b: (b, 0, 0))
    vec = lambda n: pl.BlockSpec((1, n), lambda b: (0, 0))
    bhead = pl.BlockSpec((heads, 1, dh), lambda b: (0, 0, 0))

    in_specs = [xspec]
    args = [x]
    if add_pe:
        in_specs.append(pl.BlockSpec((S, D), lambda b: (0, 0)))
        args.append(pe)
    in_specs += [
        pl.BlockSpec((S, S), lambda b: (0, 0)),   # additive mask
        _single_buffered((heads, D, dh)),         # wq
        _single_buffered((heads, D, dh)),         # wk
        _single_buffered((heads, D, dh)),         # wv
        bhead, bhead, bhead,                      # bq, bk, bv
        _single_buffered((heads, dh, D)),         # wo
        vec(D), vec(D), vec(D),                   # bo, gamma1, beta1
    ]
    args += [mask, layer["wq"], layer["wk"], layer["wv"],
             layer["bq"], layer["bk"], layer["bv"], layer["wo"],
             layer["bo"].reshape(1, D), layer["g1"].reshape(1, D),
             layer["be1"].reshape(1, D)]

    est = (2 * S * D * (x.dtype.itemsize + 2)        # x + bf16 out, 2 buffers
           + 4 * heads * D * dh * 2                  # weights (bf16, 1 buffer)
           + 2 * S * S * 4                           # mask (2 buffers)
           + 4 * heads * q_chunk * S * 4             # transient scores/probs
           + 8 * heads * S * dh * 4)                 # q/k/v + x broadcast

    return pl.pallas_call(
        kernel,
        out_shape=jax.ShapeDtypeStruct((B, S, D), jnp.bfloat16),
        grid=(B,),
        in_specs=in_specs,
        out_specs=pl.BlockSpec((1, S, D), lambda b: (b, 0, 0)),
        compiler_params=_cparams(1, est),
    )(*args)


def pallas_ffn_res_ln(x2d, layer, *, eps):
    M, D = x2d.shape
    F = layer["w1"].shape[1]
    TM = _row_tile(M)
    est = (4 * TM * D * x2d.dtype.itemsize          # x + out blocks, 2 buffers
           + 2 * D * F * 2                          # w1 + w2 (bf16, 1 buffer)
           + TM * F * 4 + 2 * TM * D * 4)           # transient h / residual
    return pl.pallas_call(
        functools.partial(_ffn_res_ln_kernel, eps=eps),
        out_shape=jax.ShapeDtypeStruct((M, D), jnp.bfloat16),
        grid=(pl.cdiv(M, TM),),
        in_specs=[pl.BlockSpec((TM, D), lambda i: (i, 0)),
                  _single_buffered((D, F)),
                  pl.BlockSpec((1, F), lambda i: (0, 0)),
                  _single_buffered((F, D)),
                  pl.BlockSpec((1, D), lambda i: (0, 0)),
                  pl.BlockSpec((1, D), lambda i: (0, 0)),
                  pl.BlockSpec((1, D), lambda i: (0, 0))],
        out_specs=pl.BlockSpec((TM, D), lambda i: (i, 0)),
        compiler_params=_cparams(1, est),
    )(x2d, layer["w1"], layer["b1"].reshape(1, F), layer["w2"],
      layer["b2"].reshape(1, D), layer["g2"].reshape(1, D),
      layer["be2"].reshape(1, D))


def pallas_vocab_proj(x2d, w, b, *, out_dtype=jnp.float32, tn=512):
    """Final vocab projection, tiled over both rows and the (padded) vocab."""
    M, K = x2d.shape
    N = w.shape[1]                       # padded to a multiple of 128
    TM = _row_tile(M)
    TN = N if N <= tn else tn            # 128-multiple either way
    est = 2 * (TM * K * x2d.dtype.itemsize + K * TN * 2
               + TM * TN * jnp.dtype(out_dtype).itemsize) + TM * TN * 4
    return pl.pallas_call(
        _linear_kernel,
        out_shape=jax.ShapeDtypeStruct((M, N), out_dtype),
        grid=(pl.cdiv(M, TM), pl.cdiv(N, TN)),
        in_specs=[pl.BlockSpec((TM, K), lambda i, j: (i, 0)),
                  pl.BlockSpec((K, TN), lambda i, j: (0, j)),
                  pl.BlockSpec((1, TN), lambda i, j: (0, j))],
        out_specs=pl.BlockSpec((TM, TN), lambda i, j: (i, j)),
        compiler_params=_cparams(2, est),
    )(x2d, w, b.reshape(1, N))


# ---------------------------------------------------------------------------
# Model: parameter init + forward
# ---------------------------------------------------------------------------

def make_positional_encoding(max_len, d):
    pos = jnp.arange(max_len, dtype=jnp.float32)[:, None]
    div = jnp.exp(jnp.arange(0, d, 2, dtype=jnp.float32) *
                  (-math.log(10000.0) / d))
    pe = jnp.zeros((max_len, d), dtype=jnp.float32)
    pe = pe.at[:, 0::2].set(jnp.sin(pos * div))
    pe = pe.at[:, 1::2].set(jnp.cos(pos * div))
    return pe


def init_decoder_params(key, token_size, n_layers, d, heads, d_ff):
    assert d % heads == 0
    dh = d // heads

    def dense(k, fan_in, fan_out):
        kw, kb = jax.random.split(k)
        lim = 1.0 / math.sqrt(fan_in)
        w = jax.random.uniform(kw, (fan_in, fan_out), jnp.float32, -lim, lim)
        b = jax.random.uniform(kb, (fan_out,), jnp.float32, -lim, lim)
        return w, b

    def head_cols(w):   # (D, D) -> (H, D, dh): per-head output columns
        return jnp.transpose(w.reshape(d, heads, dh), (1, 0, 2))

    layers = []
    for _ in range(n_layers):
        key, *ks = jax.random.split(key, 7)
        wq, bq = dense(ks[0], d, d)
        wk, bk = dense(ks[1], d, d)
        wv, bv = dense(ks[2], d, d)
        wo, bo = dense(ks[3], d, d)
        w1, b1 = dense(ks[4], d, d_ff)
        w2, b2 = dense(ks[5], d_ff, d)
        layers.append(dict(
            # Head-major projection weights, pre-cast to bf16 (MXU operands).
            wq=head_cols(wq).astype(jnp.bfloat16),
            wk=head_cols(wk).astype(jnp.bfloat16),
            wv=head_cols(wv).astype(jnp.bfloat16),
            bq=bq.reshape(heads, 1, dh),
            bk=bk.reshape(heads, 1, dh),
            bv=bv.reshape(heads, 1, dh),
            wo=wo.reshape(heads, dh, d).astype(jnp.bfloat16),   # (H, dh, D)
            bo=bo,
            w1=w1.astype(jnp.bfloat16), b1=b1,
            w2=w2.astype(jnp.bfloat16), b2=b2,
            g1=jnp.ones((d,), jnp.float32), be1=jnp.zeros((d,), jnp.float32),
            g2=jnp.ones((d,), jnp.float32), be2=jnp.zeros((d,), jnp.float32)))
    key, ko = jax.random.split(key)
    w_out, b_out = dense(ko, d, token_size)
    vpad = (-token_size) % 128           # lane-dense stores for the logits
    w_out = jnp.pad(w_out, ((0, 0), (0, vpad))).astype(jnp.bfloat16)
    b_out = jnp.pad(b_out, (0, vpad))
    return dict(layers=layers, w_out=w_out, b_out=b_out)


def decoder_forward(params, pe, x, mask, *, heads, eps, token_size):
    B, S, D = x.shape
    layers = params["layers"]
    # Positional encoding is fused into the first layer's attention kernel.
    # TODO(synk): n_layers == 0 would need a standalone PE-add kernel.
    h = x
    for li, layer in enumerate(layers):
        h = pallas_attn_layer(h, layer, mask, heads=heads, eps=eps,
                              pe=pe[:S] if li == 0 else None)       # bf16 out
        h = pallas_ffn_res_ln(h.reshape(B * S, D), layer,
                              eps=eps).reshape(B, S, D)              # bf16 out
    logits = pallas_vocab_proj(h.reshape(B * S, D),
                               params["w_out"], params["b_out"])
    return logits[:, :token_size].reshape(B, S, token_size)


# ---------------------------------------------------------------------------
# main
# ---------------------------------------------------------------------------

if __name__ == "__main__":
    # small deterministic config
    token_size = 50
    n_layers = 2
    embedding_dim = 32
    heads = 4
    d_ff = 64
    eps = 1e-5
    B, S = 2, 8

    key = jax.random.PRNGKey(0)
    kx, kp = jax.random.split(key)

    # x is already embedded (Decoder.forward never uses self.embedding_layer)
    x = jax.random.normal(kx, (B, S, embedding_dim), dtype=jnp.float32)

    # causal additive mask [S, S]: 0 where allowed, -1e9 where masked
    causal = jnp.tril(jnp.ones((S, S), dtype=jnp.float32))
    mask = jnp.where(causal > 0, 0.0, -1e9).astype(jnp.float32)

    params = init_decoder_params(kp, token_size, n_layers,
                                 embedding_dim, heads, d_ff)
    pe = make_positional_encoding(512, embedding_dim)

    fwd = jax.jit(functools.partial(decoder_forward, heads=heads, eps=eps,
                                    token_size=token_size))
    out = jax.block_until_ready(fwd(params, pe, x, mask))
    assert out.shape == (B, S, token_size)
    assert bool(jnp.all(jnp.isfinite(out)))
    print("KERNEL_OK")
</pallas_src>

<mosaic_0001>
module attributes {stable_mosaic.version = 11 : i64} {
  func.func @_linear_kernel(%arg0: i32, %arg1: i32, %arg2: memref<8x32xbf16, #tpu.memory_space<vmem>>, %arg3: memref<32x128xbf16, #tpu.memory_space<vmem>>, %arg4: memref<1x128xf32, #tpu.memory_space<vmem>>, %arg5: memref<8x128xf32, #tpu.memory_space<vmem>>) attributes {dimension_semantics = [#tpu.dimension_semantics<parallel>, #tpu.dimension_semantics<parallel>], iteration_bounds = array<i64: 2, 1>, scalar_prefetch = 0 : i64, scratch_operands = 0 : i64, tpu.core_type = #tpu.core_type<tc>, window_params = [{transform_indices = @transform_0, window_bounds = array<i64: 8, 32>}, {transform_indices = @transform_1, window_bounds = array<i64: 32, 128>}, {transform_indices = @transform_2, window_bounds = array<i64: 1, 128>}, {transform_indices = @transform_3, window_bounds = array<i64: 8, 128>}]} {
    %c0 = arith.constant 0 : index
    %c0_0 = arith.constant 0 : index
    %0 = vector.load %arg2[%c0, %c0_0] : memref<8x32xbf16, #tpu.memory_space<vmem>>, vector<8x32xbf16>
    %c0_1 = arith.constant 0 : index
    %c0_2 = arith.constant 0 : index
    %1 = vector.load %arg3[%c0_1, %c0_2] : memref<32x128xbf16, #tpu.memory_space<vmem>>, vector<32x128xbf16>
    %cst = arith.constant dense<0.000000e+00> : vector<8x128xf32>
    %2 = tpu.matmul %0, %1, %cst {dimension_numbers = #tpu.dot_dimension_numbers<[1], [0], [0], [1], [0, 0, 1, 1], [], []>} : vector<8x32xbf16>, vector<32x128xbf16>, vector<8x128xf32> -> vector<8x128xf32>
    %c0_3 = arith.constant 0 : index
    %c0_4 = arith.constant 0 : index
    %3 = vector.load %arg4[%c0_3, %c0_4] : memref<1x128xf32, #tpu.memory_space<vmem>>, vector<1x128xf32>
    %4 = vector.broadcast %3 : vector<1x128xf32> to vector<8x128xf32>
    %5 = arith.addf %2, %4 : vector<8x128xf32>
    %c0_5 = arith.constant 0 : index
    %c0_6 = arith.constant 0 : index
    %6 = vector.load %arg5[%c0_5, %c0_6] : memref<8x128xf32, #tpu.memory_space<vmem>>, vector<8x128xf32>
    tpu.vector_store %arg5[%c0_5, %c0_6], %5 {strides = array<i32>} : memref<8x128xf32, #tpu.memory_space<vmem>>, vector<8x128xf32>,
    return
  }
  func.func @transform_0(%arg0: i32, %arg1: i32) -> (i32, i32) {
    %c0_i32 = arith.constant 0 : i32
    %c0_i32_0 = arith.constant 0 : i32
    return %arg0, %c0_i32 : i32, i32
  }
  func.func @transform_1(%arg0: i32, %arg1: i32) -> (i32, i32) {
    %c0_i32 = arith.constant 0 : i32
    %c0_i32_0 = arith.constant 0 : i32
    return %c0_i32, %arg1 : i32, i32
  }
  func.func @transform_2(%arg0: i32, %arg1: i32) -> (i32, i32) {
    %c0_i32 = arith.constant 0 : i32
    %c0_i32_0 = arith.constant 0 : i32
    return %c0_i32, %arg1 : i32, i32
  }
  func.func @transform_3(%arg0: i32, %arg1: i32) -> (i32, i32) {
    %c0_i32 = arith.constant 0 : i32
    return %arg0, %arg1 : i32, i32
  }
}

module attributes {stable_mosaic.version = 11 : i64} {
  func.func @_attn_layer_kernel(%arg0: i32, %arg1: memref<1x8x32xf32, #tpu.memory_space<vmem>>, %arg2: memref<8x32xf32, #tpu.memory_space<vmem>>, %arg3: memref<8x8xf32, #tpu.memory_space<vmem>>, %arg4: memref<4x32x8xbf16, #tpu.memory_space<vmem>>, %arg5: memref<4x32x8xbf16, #tpu.memory_space<vmem>>, %arg6: memref<4x32x8xbf16, #tpu.memory_space<vmem>>, %arg7: memref<4x1x8xf32, #tpu.memory_space<vmem>>, %arg8: memref<4x1x8xf32, #tpu.memory_space<vmem>>, %arg9: memref<4x1x8xf32, #tpu.memory_space<vmem>>, %arg10: memref<4x8x32xbf16, #tpu.memory_space<vmem>>, %arg11: memref<1x32xf32, #tpu.memory_space<vmem>>, %arg12: memref<1x32xf32, #tpu.memory_space<vmem>>, %arg13: memref<1x32xf32, #tpu.memory_space<vmem>>, %arg14: memref<1x8x32xbf16, #tpu.memory_space<vmem>>) attributes {dimension_semantics = [#tpu.dimension_semantics<parallel>], iteration_bounds = array<i64: 2>, scalar_prefetch = 0 : i64, scratch_operands = 0 : i64, tpu.core_type = #tpu.core_type<tc>, window_params = [{transform_indices = @transform_0, window_bounds = array<i64: 1, 8, 32>}, {pipeline_mode = #tpu.pipeline_mode<synchronous>, transform_indices = @transform_1, window_bounds = array<i64: 8, 32>}, {pipeline_mode = #tpu.pipeline_mode<synchronous>, transform_indices = @transform_2, window_bounds = array<i64: 8, 8>}, {pipeline_mode = #tpu.pipeline_mode<synchronous>, transform_indices = @transform_3, window_bounds = array<i64: 4, 32, 8>}, {pipeline_mode = #tpu.pipeline_mode<synchronous>, transform_indices = @transform_4, window_bounds = array<i64: 4, 32, 8>}, {pipeline_mode = #tpu.pipeline_mode<synchronous>, transform_indices = @transform_5, window_bounds = array<i64: 4, 32, 8>}, {pipeline_mode = #tpu.pipeline_mode<synchronous>, transform_indices = @transform_6, window_bounds = array<i64: 4, 1, 8>}, {pipeline_mode = #tpu.pipeline_mode<synchronous>, transform_indices = @transform_7, window_bounds = array<i64: 4, 1, 8>}, {pipeline_mode = #tpu.pipeline_mode<synchronous>, transform_indices = @transform_8, window_bounds = array<i64: 4, 1, 8>}, {pipeline_mode = #tpu.pipeline_mode<synchronous>, transform_indices = @transform_9, window_bounds = array<i64: 4, 8, 32>}, {pipeline_mode = #tpu.pipeline_mode<synchronous>, transform_indices = @transform_10, window_bounds = array<i64: 1, 32>}, {pipeline_mode = #tpu.pipeline_mode<synchronous>, transform_indices = @transform_11, window_bounds = array<i64: 1, 32>}, {pipeline_mode = #tpu.pipeline_mode<synchronous>, transform_indices = @transform_12, window_bounds = array<i64: 1, 32>}, {transform_indices = @transform_13, window_bounds = array<i64: 1, 8, 32>}]} {
    %c0 = arith.constant 0 : index
    %c0_0 = arith.constant 0 : index
    %c0_1 = arith.constant 0 : index
    %0 = vector.load %arg1[%c0, %c0_0, %c0_1] : memref<1x8x32xf32, #tpu.memory_space<vmem>>, vector<1x8x32xf32>
    %1 = vector.shape_cast %0 : vector<1x8x32xf32> to vector<8x32xf32>
    %c0_2 = arith.constant 0 : index
    %c0_3 = arith.constant 0 : index
    %2 = vector.load %arg2[%c0_2, %c0_3] : memref<8x32xf32, #tpu.memory_space<vmem>>, vector<8x32xf32>
    %3 = arith.addf %1, %2 : vector<8x32xf32>
    %4 = arith.truncf %3 : vector<8x32xf32> to vector<8x32xbf16>
    %5 = vector.shape_cast %4 : vector<8x32xbf16> to vector<1x8x32xbf16>
    %6 = vector.shape_cast %5 : vector<1x8x32xbf16> to vector<1x8x32xbf16>
    %7 = vector.broadcast %6 : vector<1x8x32xbf16> to vector<4x8x32xbf16>
    %c0_4 = arith.constant 0 : index
    %c0_5 = arith.constant 0 : index
    %c0_6 = arith.constant 0 : index
    %8 = vector.load %arg4[%c0_4, %c0_5, %c0_6] : memref<4x32x8xbf16, #tpu.memory_space<vmem>>, vector<4x32x8xbf16>
    "tpu.trace_start"() <{level = 10 : i32, message = "hsd,hdf->hsf"}> : () -> ()
    %cst = arith.constant dense<0.000000e+00> : vector<4x8x8xf32>
    %9 = tpu.matmul %7, %8, %cst {dimension_numbers = #tpu.dot_dimension_numbers<[2], [1], [1], [2], [0, 0, 0, 1, 1, 2], [0], [0]>} : vector<4x8x32xbf16>, vector<4x32x8xbf16>, vector<4x8x8xf32> -> vector<4x8x8xf32>
    "tpu.trace_stop"() : () -> ()
    %c0_7 = arith.constant 0 : index
    %c0_8 = arith.constant 0 : index
    %c0_9 = arith.constant 0 : index
    %10 = vector.load %arg7[%c0_7, %c0_8, %c0_9] : memref<4x1x8xf32, #tpu.memory_space<vmem>>, vector<4x1x8xf32>
    %11 = vector.broadcast %10 : vector<4x1x8xf32> to vector<4x8x8xf32>
    %12 = arith.addf %9, %11 : vector<4x8x8xf32>
    %13 = arith.truncf %12 : vector<4x8x8xf32> to vector<4x8x8xbf16>
    %c0_10 = arith.constant 0 : index
    %c0_11 = arith.constant 0 : index
    %c0_12 = arith.constant 0 : index
    %14 = vector.load %arg5[%c0_10, %c0_11, %c0_12] : memref<4x32x8xbf16, #tpu.memory_space<vmem>>, vector<4x32x8xbf16>
    "tpu.trace_start"() <{level = 10 : i32, message = "hsd,hdf->hsf"}> : () -> ()
    %cst_13 = arith.constant dense<0.000000e+00> : vector<4x8x8xf32>
    %15 = tpu.matmul %7, %14, %cst_13 {dimension_numbers = #tpu.dot_dimension_numbers<[2], [1], [1], [2], [0, 0, 0, 1, 1, 2], [0], [0]>} : vector<4x8x32xbf16>, vector<4x32x8xbf16>, vector<4x8x8xf32> -> vector<4x8x8xf32>
    "tpu.trace_stop"() : () -> ()
    %c0_14 = arith.constant 0 : index
    %c0_15 = arith.constant 0 : index
    %c0_16 = arith.constant 0 : index
    %16 = vector.load %arg8[%c0_14, %c0_15, %c0_16] : memref<4x1x8xf32, #tpu.memory_space<vmem>>, vector<4x1x8xf32>
    %17 = vector.broadcast %16 : vector<4x1x8xf32> to vector<4x8x8xf32>
    %18 = arith.addf %15, %17 : vector<4x8x8xf32>
    %19 = arith.truncf %18 : vector<4x8x8xf32> to vector<4x8x8xbf16>
    %c0_17 = arith.constant 0 : index
    %c0_18 = arith.constant 0 : index
    %c0_19 = arith.constant 0 : index
    %20 = vector.load %arg6[%c0_17, %c0_18, %c0_19] : memref<4x32x8xbf16, #tpu.memory_space<vmem>>, vector<4x32x8xbf16>
    "tpu.trace_start"() <{level = 10 : i32, message = "hsd,hdf->hsf"}> : () -> ()
    %cst_20 = arith.constant dense<0.000000e+00> : vector<4x8x8xf32>
    %21 = tpu.matmul %7, %20, %cst_20 {dimension_numbers = #tpu.dot_dimension_numbers<[2], [1], [1], [2], [0, 0, 0, 1, 1, 2], [0], [0]>} : vector<4x8x32xbf16>, vector<4x32x8xbf16>, vector<4x8x8xf32> -> vector<4x8x8xf32>
    "tpu.trace_stop"() : () -> ()
    %c0_21 = arith.constant 0 : index
    %c0_22 = arith.constant 0 : index
    %c0_23 = arith.constant 0 : index
    %22 = vector.load %arg9[%c0_21, %c0_22, %c0_23] : memref<4x1x8xf32, #tpu.memory_space<vmem>>, vector<4x1x8xf32>
    %23 = vector.broadcast %22 : vector<4x1x8xf32> to vector<4x8x8xf32>
    %24 = arith.addf %21, %23 : vector<4x8x8xf32>
    %25 = arith.truncf %24 : vector<4x8x8xf32> to vector<4x8x8xbf16>
    "tpu.trace_start"() <{level = 10 : i32, message = "hqd,hkd->hqk"}> : () -> ()
    %cst_24 = arith.constant dense<0.000000e+00> : vector<4x8x8xf32>
    %26 = tpu.matmul %13, %19, %cst_24 {dimension_numbers = #tpu.dot_dimension_numbers<[2], [2], [1], [1], [0, 0, 0, 1, 1, 1], [0], [0]>} : vector<4x8x8xbf16>, vector<4x8x8xbf16>, vector<4x8x8xf32> -> vector<4x8x8xf32>
    "tpu.trace_stop"() : () -> ()
    %cst_25 = arith.constant 0.353553385 : f32
    %27 = vector.broadcast %cst_25 : f32 to vector<4x8x8xf32>
    %28 = arith.mulf %26, %27 : vector<4x8x8xf32>
    %c0_26 = arith.constant 0 : index
    %c0_27 = arith.constant 0 : index
    %29 = vector.load %arg3[%c0_26, %c0_27] : memref<8x8xf32, #tpu.memory_space<vmem>>, vector<8x8xf32>
    %30 = vector.shape_cast %29 : vector<8x8xf32> to vector<1x8x8xf32>
    %31 = vector.broadcast %30 : vector<1x8x8xf32> to vector<4x8x8xf32>
    %32 = arith.addf %28, %31 : vector<4x8x8xf32>
    %cst_28 = arith.constant dense<0xFF800000> : vector<4x8xf32>
    %33 = vector.multi_reduction <maximumf>, %32, %cst_28 [2] : vector<4x8x8xf32> to vector<4x8xf32>
    %34 = vector.shape_cast %33 : vector<4x8xf32> to vector<4x8x1xf32>
    %35 = vector.broadcast %34 : vector<4x8x1xf32> to vector<4x8x8xf32>
    %36 = arith.subf %32, %35 : vector<4x8x8xf32>
    %37 = math.exp %36 : vector<4x8x8xf32>
    %cst_29 = arith.constant dense<0.000000e+00> : vector<4x8xf32>
    %38 = vector.multi_reduction <add>, %37, %cst_29 [2] : vector<4x8x8xf32> to vector<4x8xf32>
    %39 = vector.shape_cast %38 : vector<4x8xf32> to vector<4x8x1xf32>
    %40 = tpu.reciprocal %39 {approx = true} : vector<4x8x1xf32> -> vector<4x8x1xf32>
    %41 = vector.broadcast %40 : vector<4x8x1xf32> to vector<4x8x8xf32>
    %42 = arith.mulf %37, %41 : vector<4x8x8xf32>
    %43 = arith.truncf %42 : vector<4x8x8xf32> to vector<4x8x8xbf16>
    "tpu.trace_start"() <{level = 10 : i32, message = "hqk,hkd->hqd"}> : () -> ()
    %cst_30 = arith.constant dense<0.000000e+00> : vector<4x8x8xf32>
    %44 = tpu.matmul %43, %25, %cst_30 {dimension_numbers = #tpu.dot_dimension_numbers<[2], [1], [1], [2], [0, 0, 0, 1, 1, 2], [0], [0]>} : vector<4x8x8xbf16>, vector<4x8x8xbf16>, vector<4x8x8xf32> -> vector<4x8x8xf32>
    "tpu.trace_stop"() : () -> ()
    %45 = arith.truncf %44 : vector<4x8x8xf32> to vector<4x8x8xbf16>
    %c0_31 = arith.constant 0 : index
    %c0_32 = arith.constant 0 : index
    %c0_33 = arith.constant 0 : index
    %46 = vector.load %arg10[%c0_31, %c0_32, %c0_33] : memref<4x8x32xbf16, #tpu.memory_space<vmem>>, vector<4x8x32xbf16>
    "tpu.trace_start"() <{level = 10 : i32, message = "hqd,hdf->hqf"}> : () -> ()
    %cst_34 = arith.constant dense<0.000000e+00> : vector<4x8x32xf32>
    %47 = tpu.matmul %45, %46, %cst_34 {dimension_numbers = #tpu.dot_dimension_numbers<[2], [1], [1], [2], [0, 0, 0, 1, 1, 2], [0], [0]>} : vector<4x8x8xbf16>, vector<4x8x32xbf16>, vector<4x8x32xf32> -> vector<4x8x32xf32>
    "tpu.trace_stop"() : () -> ()
    %cst_35 = arith.constant dense<0.000000e+00> : vector<8x32xf32>
    %48 = vector.multi_reduction <add>, %47, %cst_35 [0] : vector<4x8x32xf32> to vector<8x32xf32>
    %c0_36 = arith.constant 0 : index
    %c0_37 = arith.constant 0 : index
    %49 = vector.load %arg11[%c0_36, %c0_37] : memref<1x32xf32, #tpu.memory_space<vmem>>, vector<1x32xf32>
    %50 = vector.broadcast %49 : vector<1x32xf32> to vector<8x32xf32>
    %51 = arith.addf %48, %50 : vector<8x32xf32>
    %52 = arith.addf %3, %51 : vector<8x32xf32>
    %cst_38 = arith.constant dense<0.000000e+00> : vector<8xf32>
    %53 = vector.multi_reduction <add>, %52, %cst_38 [1] : vector<8x32xf32> to vector<8xf32>
    %54 = vector.shape_cast %53 : vector<8xf32> to vector<8x1xf32>
    %cst_39 = arith.constant 3.200000e+01 : f32
    %55 = vector.broadcast %cst_39 : f32 to vector<8x1xf32>
    %56 = arith.divf %54, %55 : vector<8x1xf32>
    %57 = vector.broadcast %56 : vector<8x1xf32> to vector<8x32xf32>
    %58 = arith.subf %52, %57 : vector<8x32xf32>
    %59 = arith.mulf %58, %58 : vector<8x32xf32>
    %cst_40 = arith.constant dense<0.000000e+00> : vector<8xf32>
    %60 = vector.multi_reduction <add>, %59, %cst_40 [1] : vector<8x32xf32> to vector<8xf32>
    %61 = vector.shape_cast %60 : vector<8xf32> to vector<8x1xf32>
    %cst_41 = arith.constant 3.200000e+01 : f32
    %62 = vector.broadcast %cst_41 : f32 to vector<8x1xf32>
    %63 = arith.divf %61, %62 : vector<8x1xf32>
    %64 = vector.broadcast %56 : vector<8x1xf32> to vector<8x32xf32>
    %65 = arith.subf %52, %64 : vector<8x32xf32>
    %cst_42 = arith.constant 9.99999974E-6 : f32
    %66 = vector.broadcast %cst_42 : f32 to vector<8x1xf32>
    %67 = arith.addf %63, %66 : vector<8x1xf32>
    %68 = math.rsqrt %67 : vector<8x1xf32>
    %69 = vector.broadcast %68 : vector<8x1xf32> to vector<8x32xf32>
    %70 = arith.mulf %65, %69 : vector<8x32xf32>
    %c0_43 = arith.constant 0 : index
    %c0_44 = arith.constant 0 : index
    %71 = vector.load %arg12[%c0_43, %c0_44] : memref<1x32xf32, #tpu.memory_space<vmem>>, vector<1x32xf32>
    %72 = vector.broadcast %71 : vector<1x32xf32> to vector<8x32xf32>
    %73 = arith.mulf %70, %72 : vector<8x32xf32>
    %c0_45 = arith.constant 0 : index
    %c0_46 = arith.constant 0 : index
    %74 = vector.load %arg13[%c0_45, %c0_46] : memref<1x32xf32, #tpu.memory_space<vmem>>, vector<1x32xf32>
    %75 = vector.broadcast %74 : vector<1x32xf32> to vector<8x32xf32>
    %76 = arith.addf %73, %75 : vector<8x32xf32>
    %77 = arith.truncf %76 : vector<8x32xf32> to vector<8x32xbf16>
    %c0_47 = arith.constant 0 : index
    %c0_48 = arith.constant 0 : index
    %c0_49 = arith.constant 0 : index
    %78 = vector.load %arg14[%c0_47, %c0_48, %c0_49] : memref<1x8x32xbf16, #tpu.memory_space<vmem>>, vector<1x8x32xbf16>
    %79 = vector.shape_cast %78 : vector<1x8x32xbf16> to vector<8x32xbf16>
    %80 = vector.shape_cast %77 : vector<8x32xbf16> to vector<1x8x32xbf16>
    tpu.vector_store %arg14[%c0_47, %c0_48, %c0_49], %80 {strides = array<i32>} : memref<1x8x32xbf16, #tpu.memory_space<vmem>>, vector<1x8x32xbf16>,
    return
  }
  func.func @transform_0(%arg0: i32) -> (i32, i32, i32) {
    %c0_i32 = arith.constant 0 : i32
    %c0_i32_0 = arith.constant 0 : i32
    %c0_i32_1 = arith.constant 0 : i32
    return %arg0, %c0_i32, %c0_i32_0 : i32, i32, i32
  }
  func.func @transform_1(%arg0: i32) -> (i32, i32) {
    %c0_i32 = arith.constant 0 : i32
    %c0_i32_0 = arith.constant 0 : i32
    %c0_i32_1 = arith.constant 0 : i32
    return %c0_i32, %c0_i32_0 : i32, i32
  }
  func.func @transform_2(%arg0: i32) -> (i32, i32) {
    %c0_i32 = arith.constant 0 : i32
    %c0_i32_0 = arith.constant 0 : i32
    %c0_i32_1 = arith.constant 0 : i32
    return %c0_i32, %c0_i32_0 : i32, i32
  }
  func.func @transform_3(%arg0: i32) -> (i32, i32, i32) {
    %c0_i32 = arith.constant 0 : i32
    %c0_i32_0 = arith.constant 0 : i32
    %c0_i32_1 = arith.constant 0 : i32
    %c0_i32_2 = arith.constant 0 : i32
    return %c0_i32, %c0_i32_0, %c0_i32_1 : i32, i32, i32
  }
  func.func @transform_4(%arg0: i32) -> (i32, i32, i32) {
    %c0_i32 = arith.constant 0 : i32
    %c0_i32_0 = arith.constant 0 : i32
    %c0_i32_1 = arith.constant 0 : i32
    %c0_i32_2 = arith.constant 0 : i32
    return %c0_i32, %c0_i32_0, %c0_i32_1 : i32, i32, i32
  }
  func.func @transform_5(%arg0: i32) -> (i32, i32, i32) {
    %c0_i32 = arith.constant 0 : i32
    %c0_i32_0 = arith.constant 0 : i32
    %c0_i32_1 = arith.constant 0 : i32
    %c0_i32_2 = arith.constant 0 : i32
    return %c0_i32, %c0_i32_0, %c0_i32_1 : i32, i32, i32
  }
  func.func @transform_6(%arg0: i32) -> (i32, i32, i32) {
    %c0_i32 = arith.constant 0 : i32
    %c0_i32_0 = arith.constant 0 : i32
    %c0_i32_1 = arith.constant 0 : i32
    %c0_i32_2 = arith.constant 0 : i32
    return %c0_i32, %c0_i32_0, %c0_i32_1 : i32, i32, i32
  }
  func.func @transform_7(%arg0: i32) -> (i32, i32, i32) {
    %c0_i32 = arith.constant 0 : i32
    %c0_i32_0 = arith.constant 0 : i32
    %c0_i32_1 = arith.constant 0 : i32
    %c0_i32_2 = arith.constant 0 : i32
    return %c0_i32, %c0_i32_0, %c0_i32_1 : i32, i32, i32
  }
  func.func @transform_8(%arg0: i32) -> (i32, i32, i32) {
    %c0_i32 = arith.constant 0 : i32
    %c0_i32_0 = arith.constant 0 : i32
    %c0_i32_1 = arith.constant 0 : i32
    %c0_i32_2 = arith.constant 0 : i32
    return %c0_i32, %c0_i32_0, %c0_i32_1 : i32, i32, i32
  }
  func.func @transform_9(%arg0: i32) -> (i32, i32, i32) {
    %c0_i32 = arith.constant 0 : i32
    %c0_i32_0 = arith.constant 0 : i32
    %c0_i32_1 = arith.constant 0 : i32
    %c0_i32_2 = arith.constant 0 : i32
    return %c0_i32, %c0_i32_0, %c0_i32_1 : i32, i32, i32
  }
  func.func @transform_10(%arg0: i32) -> (i32, i32) {
    %c0_i32 = arith.constant 0 : i32
    %c0_i32_0 = arith.constant 0 : i32
    %c0_i32_1 = arith.constant 0 : i32
    return %c0_i32, %c0_i32_0 : i32, i32
  }
  func.func @transform_11(%arg0: i32) -> (i32, i32) {
    %c0_i32 = arith.constant 0 : i32
    %c0_i32_0 = arith.constant 0 : i32
    %c0_i32_1 = arith.constant 0 : i32
    return %c0_i32, %c0_i32_0 : i32, i32
  }
  func.func @transform_12(%arg0: i32) -> (i32, i32) {
    %c0_i32 = arith.constant 0 : i32
    %c0_i32_0 = arith.constant 0 : i32
    %c0_i32_1 = arith.constant 0 : i32
    return %c0_i32, %c0_i32_0 : i32, i32
  }
  func.func @transform_13(%arg0: i32) -> (i32, i32, i32) {
    %c0_i32 = arith.constant 0 : i32
    %c0_i32_0 = arith.constant 0 : i32
    %c0_i32_1 = arith.constant 0 : i32
    return %arg0, %c0_i32, %c0_i32_0 : i32, i32, i32
  }
}

module attributes {stable_mosaic.version = 11 : i64} {
  func.func @_ffn_res_ln_kernel(%arg0: i32, %arg1: memref<8x32xbf16, #tpu.memory_space<vmem>>, %arg2: memref<32x64xbf16, #tpu.memory_space<vmem>>, %arg3: memref<1x64xf32, #tpu.memory_space<vmem>>, %arg4: memref<64x32xbf16, #tpu.memory_space<vmem>>, %arg5: memref<1x32xf32, #tpu.memory_space<vmem>>, %arg6: memref<1x32xf32, #tpu.memory_space<vmem>>, %arg7: memref<1x32xf32, #tpu.memory_space<vmem>>, %arg8: memref<8x32xbf16, #tpu.memory_space<vmem>>) attributes {dimension_semantics = [#tpu.dimension_semantics<parallel>], iteration_bounds = array<i64: 2>, scalar_prefetch = 0 : i64, scratch_operands = 0 : i64, tpu.core_type = #tpu.core_type<tc>, window_params = [{transform_indices = @transform_0, window_bounds = array<i64: 8, 32>}, {pipeline_mode = #tpu.pipeline_mode<synchronous>, transform_indices = @transform_1, window_bounds = array<i64: 32, 64>}, {pipeline_mode = #tpu.pipeline_mode<synchronous>, transform_indices = @transform_2, window_bounds = array<i64: 1, 64>}, {pipeline_mode = #tpu.pipeline_mode<synchronous>, transform_indices = @transform_3, window_bounds = array<i64: 64, 32>}, {pipeline_mode = #tpu.pipeline_mode<synchronous>, transform_indices = @transform_4, window_bounds = array<i64: 1, 32>}, {pipeline_mode = #tpu.pipeline_mode<synchronous>, transform_indices = @transform_5, window_bounds = array<i64: 1, 32>}, {pipeline_mode = #tpu.pipeline_mode<synchronous>, transform_indices = @transform_6, window_bounds = array<i64: 1, 32>}, {transform_indices = @transform_7, window_bounds = array<i64: 8, 32>}]} {
    %c0 = arith.constant 0 : index
    %c0_0 = arith.constant 0 : index
    %0 = vector.load %arg1[%c0, %c0_0] : memref<8x32xbf16, #tpu.memory_space<vmem>>, vector<8x32xbf16>
    %c0_1 = arith.constant 0 : index
    %c0_2 = arith.constant 0 : index
    %1 = vector.load %arg2[%c0_1, %c0_2] : memref<32x64xbf16, #tpu.memory_space<vmem>>, vector<32x64xbf16>
    %cst = arith.constant dense<0.000000e+00> : vector<8x64xf32>
    %2 = tpu.matmul %0, %1, %cst {dimension_numbers = #tpu.dot_dimension_numbers<[1], [0], [0], [1], [0, 0, 1, 1], [], []>} : vector<8x32xbf16>, vector<32x64xbf16>, vector<8x64xf32> -> vector<8x64xf32>
    %c0_3 = arith.constant 0 : index
    %c0_4 = arith.constant 0 : index
    %3 = vector.load %arg3[%c0_3, %c0_4] : memref<1x64xf32, #tpu.memory_space<vmem>>, vector<1x64xf32>
    %4 = vector.broadcast %3 : vector<1x64xf32> to vector<8x64xf32>
    %5 = arith.addf %2, %4 : vector<8x64xf32>
    %cst_5 = arith.constant 0.000000e+00 : f32
    %6 = vector.broadcast %cst_5 : f32 to vector<8x64xf32>
    %7 = arith.maximumf %5, %6 : vector<8x64xf32>
    %8 = arith.truncf %7 : vector<8x64xf32> to vector<8x64xbf16>
    %c0_6 = arith.constant 0 : index
    %c0_7 = arith.constant 0 : index
    %9 = vector.load %arg4[%c0_6, %c0_7] : memref<64x32xbf16, #tpu.memory_space<vmem>>, vector<64x32xbf16>
    %cst_8 = arith.constant dense<0.000000e+00> : vector<8x32xf32>
    %10 = tpu.matmul %8, %9, %cst_8 {dimension_numbers = #tpu.dot_dimension_numbers<[1], [0], [0], [1], [0, 0, 1, 1], [], []>} : vector<8x64xbf16>, vector<64x32xbf16>, vector<8x32xf32> -> vector<8x32xf32>
    %c0_9 = arith.constant 0 : index
    %c0_10 = arith.constant 0 : index
    %11 = vector.load %arg5[%c0_9, %c0_10] : memref<1x32xf32, #tpu.memory_space<vmem>>, vector<1x32xf32>
    %12 = vector.broadcast %11 : vector<1x32xf32> to vector<8x32xf32>
    %13 = arith.addf %10, %12 : vector<8x32xf32>
    %14 = arith.extf %0 : vector<8x32xbf16> to vector<8x32xf32>
    %15 = arith.addf %14, %13 : vector<8x32xf32>
    %cst_11 = arith.constant dense<0.000000e+00> : vector<8xf32>
    %16 = vector.multi_reduction <add>, %15, %cst_11 [1] : vector<8x32xf32> to vector<8xf32>
    %17 = vector.shape_cast %16 : vector<8xf32> to vector<8x1xf32>
    %cst_12 = arith.constant 3.200000e+01 : f32
    %18 = vector.broadcast %cst_12 : f32 to vector<8x1xf32>
    %19 = arith.divf %17, %18 : vector<8x1xf32>
    %20 = vector.broadcast %19 : vector<8x1xf32> to vector<8x32xf32>
    %21 = arith.subf %15, %20 : vector<8x32xf32>
    %22 = arith.mulf %21, %21 : vector<8x32xf32>
    %cst_13 = arith.constant dense<0.000000e+00> : vector<8xf32>
    %23 = vector.multi_reduction <add>, %22, %cst_13 [1] : vector<8x32xf32> to vector<8xf32>
    %24 = vector.shape_cast %23 : vector<8xf32> to vector<8x1xf32>
    %cst_14 = arith.constant 3.200000e+01 : f32
    %25 = vector.broadcast %cst_14 : f32 to vector<8x1xf32>
    %26 = arith.divf %24, %25 : vector<8x1xf32>
    %27 = vector.broadcast %19 : vector<8x1xf32> to vector<8x32xf32>
    %28 = arith.subf %15, %27 : vector<8x32xf32>
    %cst_15 = arith.constant 9.99999974E-6 : f32
    %29 = vector.broadcast %cst_15 : f32 to vector<8x1xf32>
    %30 = arith.addf %26, %29 : vector<8x1xf32>
    %31 = math.rsqrt %30 : vector<8x1xf32>
    %32 = vector.broadcast %31 : vector<8x1xf32> to vector<8x32xf32>
    %33 = arith.mulf %28, %32 : vector<8x32xf32>
    %c0_16 = arith.constant 0 : index
    %c0_17 = arith.constant 0 : index
    %34 = vector.load %arg6[%c0_16, %c0_17] : memref<1x32xf32, #tpu.memory_space<vmem>>, vector<1x32xf32>
    %35 = vector.broadcast %34 : vector<1x32xf32> to vector<8x32xf32>
    %36 = arith.mulf %33, %35 : vector<8x32xf32>
    %c0_18 = arith.constant 0 : index
    %c0_19 = arith.constant 0 : index
    %37 = vector.load %arg7[%c0_18, %c0_19] : memref<1x32xf32, #tpu.memory_space<vmem>>, vector<1x32xf32>
    %38 = vector.broadcast %37 : vector<1x32xf32> to vector<8x32xf32>
    %39 = arith.addf %36, %38 : vector<8x32xf32>
    %40 = arith.truncf %39 : vector<8x32xf32> to vector<8x32xbf16>
    %c0_20 = arith.constant 0 : index
    %c0_21 = arith.constant 0 : index
    %41 = vector.load %arg8[%c0_20, %c0_21] : memref<8x32xbf16, #tpu.memory_space<vmem>>, vector<8x32xbf16>
    tpu.vector_store %arg8[%c0_20, %c0_21], %40 {strides = array<i32>} : memref<8x32xbf16, #tpu.memory_space<vmem>>, vector<8x32xbf16>,
    return
  }
  func.func @transform_0(%arg0: i32) -> (i32, i32) {
    %c0_i32 = arith.constant 0 : i32
    %c0_i32_0 = arith.constant 0 : i32
    return %arg0, %c0_i32 : i32, i32
  }
  func.func @transform_1(%arg0: i32) -> (i32, i32) {
    %c0_i32 = arith.constant 0 : i32
    %c0_i32_0 = arith.constant 0 : i32
    %c0_i32_1 = arith.constant 0 : i32
    return %c0_i32, %c0_i32_0 : i32, i32
  }
  func.func @transform_2(%arg0: i32) -> (i32, i32) {
    %c0_i32 = arith.constant 0 : i32
    %c0_i32_0 = arith.constant 0 : i32
    %c0_i32_1 = arith.constant 0 : i32
    return %c0_i32, %c0_i32_0 : i32, i32
  }
  func.func @transform_3(%arg0: i32) -> (i32, i32) {
    %c0_i32 = arith.constant 0 : i32
    %c0_i32_0 = arith.constant 0 : i32
    %c0_i32_1 = arith.constant 0 : i32
    return %c0_i32, %c0_i32_0 : i32, i32
  }
  func.func @transform_4(%arg0: i32) -> (i32, i32) {
    %c0_i32 = arith.constant 0 : i32
    %c0_i32_0 = arith.constant 0 : i32
    %c0_i32_1 = arith.constant 0 : i32
    return %c0_i32, %c0_i32_0 : i32, i32
  }
  func.func @transform_5(%arg0: i32) -> (i32, i32) {
    %c0_i32 = arith.constant 0 : i32
    %c0_i32_0 = arith.constant 0 : i32
    %c0_i32_1 = arith.constant 0 : i32
    return %c0_i32, %c0_i32_0 : i32, i32
  }
  func.func @transform_6(%arg0: i32) -> (i32, i32) {
    %c0_i32 = arith.constant 0 : i32
    %c0_i32_0 = arith.constant 0 : i32
    %c0_i32_1 = arith.constant 0 : i32
    return %c0_i32, %c0_i32_0 : i32, i32
  }
  func.func @transform_7(%arg0: i32) -> (i32, i32) {
    %c0_i32 = arith.constant 0 : i32
    %c0_i32_0 = arith.constant 0 : i32
    return %arg0, %c0_i32 : i32, i32
  }
}

module attributes {stable_mosaic.version = 11 : i64} {
  func.func @_attn_layer_kernel(%arg0: i32, %arg1: memref<1x8x32xbf16, #tpu.memory_space<vmem>>, %arg2: memref<8x8xf32, #tpu.memory_space<vmem>>, %arg3: memref<4x32x8xbf16, #tpu.memory_space<vmem>>, %arg4: memref<4x32x8xbf16, #tpu.memory_space<vmem>>, %arg5: memref<4x32x8xbf16, #tpu.memory_space<vmem>>, %arg6: memref<4x1x8xf32, #tpu.memory_space<vmem>>, %arg7: memref<4x1x8xf32, #tpu.memory_space<vmem>>, %arg8: memref<4x1x8xf32, #tpu.memory_space<vmem>>, %arg9: memref<4x8x32xbf16, #tpu.memory_space<vmem>>, %arg10: memref<1x32xf32, #tpu.memory_space<vmem>>, %arg11: memref<1x32xf32, #tpu.memory_space<vmem>>, %arg12: memref<1x32xf32, #tpu.memory_space<vmem>>, %arg13: memref<1x8x32xbf16, #tpu.memory_space<vmem>>) attributes {dimension_semantics = [#tpu.dimension_semantics<parallel>], iteration_bounds = array<i64: 2>, scalar_prefetch = 0 : i64, scratch_operands = 0 : i64, tpu.core_type = #tpu.core_type<tc>, window_params = [{transform_indices = @transform_0, window_bounds = array<i64: 1, 8, 32>}, {pipeline_mode = #tpu.pipeline_mode<synchronous>, transform_indices = @transform_1, window_bounds = array<i64: 8, 8>}, {pipeline_mode = #tpu.pipeline_mode<synchronous>, transform_indices = @transform_2, window_bounds = array<i64: 4, 32, 8>}, {pipeline_mode = #tpu.pipeline_mode<synchronous>, transform_indices = @transform_3, window_bounds = array<i64: 4, 32, 8>}, {pipeline_mode = #tpu.pipeline_mode<synchronous>, transform_indices = @transform_4, window_bounds = array<i64: 4, 32, 8>}, {pipeline_mode = #tpu.pipeline_mode<synchronous>, transform_indices = @transform_5, window_bounds = array<i64: 4, 1, 8>}, {pipeline_mode = #tpu.pipeline_mode<synchronous>, transform_indices = @transform_6, window_bounds = array<i64: 4, 1, 8>}, {pipeline_mode = #tpu.pipeline_mode<synchronous>, transform_indices = @transform_7, window_bounds = array<i64: 4, 1, 8>}, {pipeline_mode = #tpu.pipeline_mode<synchronous>, transform_indices = @transform_8, window_bounds = array<i64: 4, 8, 32>}, {pipeline_mode = #tpu.pipeline_mode<synchronous>, transform_indices = @transform_9, window_bounds = array<i64: 1, 32>}, {pipeline_mode = #tpu.pipeline_mode<synchronous>, transform_indices = @transform_10, window_bounds = array<i64: 1, 32>}, {pipeline_mode = #tpu.pipeline_mode<synchronous>, transform_indices = @transform_11, window_bounds = array<i64: 1, 32>}, {transform_indices = @transform_12, window_bounds = array<i64: 1, 8, 32>}]} {
    %c0 = arith.constant 0 : index
    %c0_0 = arith.constant 0 : index
    %c0_1 = arith.constant 0 : index
    %0 = vector.load %arg1[%c0, %c0_0, %c0_1] : memref<1x8x32xbf16, #tpu.memory_space<vmem>>, vector<1x8x32xbf16>
    %1 = vector.shape_cast %0 : vector<1x8x32xbf16> to vector<8x32xbf16>
    %2 = arith.extf %1 : vector<8x32xbf16> to vector<8x32xf32>
    %3 = arith.truncf %2 : vector<8x32xf32> to vector<8x32xbf16>
    %4 = vector.shape_cast %3 : vector<8x32xbf16> to vector<1x8x32xbf16>
    %5 = vector.shape_cast %4 : vector<1x8x32xbf16> to vector<1x8x32xbf16>
    %6 = vector.broadcast %5 : vector<1x8x32xbf16> to vector<4x8x32xbf16>
    %c0_2 = arith.constant 0 : index
    %c0_3 = arith.constant 0 : index
    %c0_4 = arith.constant 0 : index
    %7 = vector.load %arg3[%c0_2, %c0_3, %c0_4] : memref<4x32x8xbf16, #tpu.memory_space<vmem>>, vector<4x32x8xbf16>
    "tpu.trace_start"() <{level = 10 : i32, message = "hsd,hdf->hsf"}> : () -> ()
    %cst = arith.constant dense<0.000000e+00> : vector<4x8x8xf32>
    %8 = tpu.matmul %6, %7, %cst {dimension_numbers = #tpu.dot_dimension_numbers<[2], [1], [1], [2], [0, 0, 0, 1, 1, 2], [0], [0]>} : vector<4x8x32xbf16>, vector<4x32x8xbf16>, vector<4x8x8xf32> -> vector<4x8x8xf32>
    "tpu.trace_stop"() : () -> ()
    %c0_5 = arith.constant 0 : index
    %c0_6 = arith.constant 0 : index
    %c0_7 = arith.constant 0 : index
    %9 = vector.load %arg6[%c0_5, %c0_6, %c0_7] : memref<4x1x8xf32, #tpu.memory_space<vmem>>, vector<4x1x8xf32>
    %10 = vector.broadcast %9 : vector<4x1x8xf32> to vector<4x8x8xf32>
    %11 = arith.addf %8, %10 : vector<4x8x8xf32>
    %12 = arith.truncf %11 : vector<4x8x8xf32> to vector<4x8x8xbf16>
    %c0_8 = arith.constant 0 : index
    %c0_9 = arith.constant 0 : index
    %c0_10 = arith.constant 0 : index
    %13 = vector.load %arg4[%c0_8, %c0_9, %c0_10] : memref<4x32x8xbf16, #tpu.memory_space<vmem>>, vector<4x32x8xbf16>
    "tpu.trace_start"() <{level = 10 : i32, message = "hsd,hdf->hsf"}> : () -> ()
    %cst_11 = arith.constant dense<0.000000e+00> : vector<4x8x8xf32>
    %14 = tpu.matmul %6, %13, %cst_11 {dimension_numbers = #tpu.dot_dimension_numbers<[2], [1], [1], [2], [0, 0, 0, 1, 1, 2], [0], [0]>} : vector<4x8x32xbf16>, vector<4x32x8xbf16>, vector<4x8x8xf32> -> vector<4x8x8xf32>
    "tpu.trace_stop"() : () -> ()
    %c0_12 = arith.constant 0 : index
    %c0_13 = arith.constant 0 : index
    %c0_14 = arith.constant 0 : index
    %15 = vector.load %arg7[%c0_12, %c0_13, %c0_14] : memref<4x1x8xf32, #tpu.memory_space<vmem>>, vector<4x1x8xf32>
    %16 = vector.broadcast %15 : vector<4x1x8xf32> to vector<4x8x8xf32>
    %17 = arith.addf %14, %16 : vector<4x8x8xf32>
    %18 = arith.truncf %17 : vector<4x8x8xf32> to vector<4x8x8xbf16>
    %c0_15 = arith.constant 0 : index
    %c0_16 = arith.constant 0 : index
    %c0_17 = arith.constant 0 : index
    %19 = vector.load %arg5[%c0_15, %c0_16, %c0_17] : memref<4x32x8xbf16, #tpu.memory_space<vmem>>, vector<4x32x8xbf16>
    "tpu.trace_start"() <{level = 10 : i32, message = "hsd,hdf->hsf"}> : () -> ()
    %cst_18 = arith.constant dense<0.000000e+00> : vector<4x8x8xf32>
    %20 = tpu.matmul %6, %19, %cst_18 {dimension_numbers = #tpu.dot_dimension_numbers<[2], [1], [1], [2], [0, 0, 0, 1, 1, 2], [0], [0]>} : vector<4x8x32xbf16>, vector<4x32x8xbf16>, vector<4x8x8xf32> -> vector<4x8x8xf32>
    "tpu.trace_stop"() : () -> ()
    %c0_19 = arith.constant 0 : index
    %c0_20 = arith.constant 0 : index
    %c0_21 = arith.constant 0 : index
    %21 = vector.load %arg8[%c0_19, %c0_20, %c0_21] : memref<4x1x8xf32, #tpu.memory_space<vmem>>, vector<4x1x8xf32>
    %22 = vector.broadcast %21 : vector<4x1x8xf32> to vector<4x8x8xf32>
    %23 = arith.addf %20, %22 : vector<4x8x8xf32>
    %24 = arith.truncf %23 : vector<4x8x8xf32> to vector<4x8x8xbf16>
    "tpu.trace_start"() <{level = 10 : i32, message = "hqd,hkd->hqk"}> : () -> ()
    %cst_22 = arith.constant dense<0.000000e+00> : vector<4x8x8xf32>
    %25 = tpu.matmul %12, %18, %cst_22 {dimension_numbers = #tpu.dot_dimension_numbers<[2], [2], [1], [1], [0, 0, 0, 1, 1, 1], [0], [0]>} : vector<4x8x8xbf16>, vector<4x8x8xbf16>, vector<4x8x8xf32> -> vector<4x8x8xf32>
    "tpu.trace_stop"() : () -> ()
    %cst_23 = arith.constant 0.353553385 : f32
    %26 = vector.broadcast %cst_23 : f32 to vector<4x8x8xf32>
    %27 = arith.mulf %25, %26 : vector<4x8x8xf32>
    %c0_24 = arith.constant 0 : index
    %c0_25 = arith.constant 0 : index
    %28 = vector.load %arg2[%c0_24, %c0_25] : memref<8x8xf32, #tpu.memory_space<vmem>>, vector<8x8xf32>
    %29 = vector.shape_cast %28 : vector<8x8xf32> to vector<1x8x8xf32>
    %30 = vector.broadcast %29 : vector<1x8x8xf32> to vector<4x8x8xf32>
    %31 = arith.addf %27, %30 : vector<4x8x8xf32>
    %cst_26 = arith.constant dense<0xFF800000> : vector<4x8xf32>
    %32 = vector.multi_reduction <maximumf>, %31, %cst_26 [2] : vector<4x8x8xf32> to vector<4x8xf32>
    %33 = vector.shape_cast %32 : vector<4x8xf32> to vector<4x8x1xf32>
    %34 = vector.broadcast %33 : vector<4x8x1xf32> to vector<4x8x8xf32>
    %35 = arith.subf %31, %34 : vector<4x8x8xf32>
    %36 = math.exp %35 : vector<4x8x8xf32>
    %cst_27 = arith.constant dense<0.000000e+00> : vector<4x8xf32>
    %37 = vector.multi_reduction <add>, %36, %cst_27 [2] : vector<4x8x8xf32> to vector<4x8xf32>
    %38 = vector.shape_cast %37 : vector<4x8xf32> to vector<4x8x1xf32>
    %39 = tpu.reciprocal %38 {approx = true} : vector<4x8x1xf32> -> vector<4x8x1xf32>
    %40 = vector.broadcast %39 : vector<4x8x1xf32> to vector<4x8x8xf32>
    %41 = arith.mulf %36, %40 : vector<4x8x8xf32>
    %42 = arith.truncf %41 : vector<4x8x8xf32> to vector<4x8x8xbf16>
    "tpu.trace_start"() <{level = 10 : i32, message = "hqk,hkd->hqd"}> : () -> ()
    %cst_28 = arith.constant dense<0.000000e+00> : vector<4x8x8xf32>
    %43 = tpu.matmul %42, %24, %cst_28 {dimension_numbers = #tpu.dot_dimension_numbers<[2], [1], [1], [2], [0, 0, 0, 1, 1, 2], [0], [0]>} : vector<4x8x8xbf16>, vector<4x8x8xbf16>, vector<4x8x8xf32> -> vector<4x8x8xf32>
    "tpu.trace_stop"() : () -> ()
    %44 = arith.truncf %43 : vector<4x8x8xf32> to vector<4x8x8xbf16>
    %c0_29 = arith.constant 0 : index
    %c0_30 = arith.constant 0 : index
    %c0_31 = arith.constant 0 : index
    %45 = vector.load %arg9[%c0_29, %c0_30, %c0_31] : memref<4x8x32xbf16, #tpu.memory_space<vmem>>, vector<4x8x32xbf16>
    "tpu.trace_start"() <{level = 10 : i32, message = "hqd,hdf->hqf"}> : () -> ()
    %cst_32 = arith.constant dense<0.000000e+00> : vector<4x8x32xf32>
    %46 = tpu.matmul %44, %45, %cst_32 {dimension_numbers = #tpu.dot_dimension_numbers<[2], [1], [1], [2], [0, 0, 0, 1, 1, 2], [0], [0]>} : vector<4x8x8xbf16>, vector<4x8x32xbf16>, vector<4x8x32xf32> -> vector<4x8x32xf32>
    "tpu.trace_stop"() : () -> ()
    %cst_33 = arith.constant dense<0.000000e+00> : vector<8x32xf32>
    %47 = vector.multi_reduction <add>, %46, %cst_33 [0] : vector<4x8x32xf32> to vector<8x32xf32>
    %c0_34 = arith.constant 0 : index
    %c0_35 = arith.constant 0 : index
    %48 = vector.load %arg10[%c0_34, %c0_35] : memref<1x32xf32, #tpu.memory_space<vmem>>, vector<1x32xf32>
    %49 = vector.broadcast %48 : vector<1x32xf32> to vector<8x32xf32>
    %50 = arith.addf %47, %49 : vector<8x32xf32>
    %51 = arith.addf %2, %50 : vector<8x32xf32>
    %cst_36 = arith.constant dense<0.000000e+00> : vector<8xf32>
    %52 = vector.multi_reduction <add>, %51, %cst_36 [1] : vector<8x32xf32> to vector<8xf32>
    %53 = vector.shape_cast %52 : vector<8xf32> to vector<8x1xf32>
    %cst_37 = arith.constant 3.200000e+01 : f32
    %54 = vector.broadcast %cst_37 : f32 to vector<8x1xf32>
    %55 = arith.divf %53, %54 : vector<8x1xf32>
    %56 = vector.broadcast %55 : vector<8x1xf32> to vector<8x32xf32>
    %57 = arith.subf %51, %56 : vector<8x32xf32>
    %58 = arith.mulf %57, %57 : vector<8x32xf32>
    %cst_38 = arith.constant dense<0.000000e+00> : vector<8xf32>
    %59 = vector.multi_reduction <add>, %58, %cst_38 [1] : vector<8x32xf32> to vector<8xf32>
    %60 = vector.shape_cast %59 : vector<8xf32> to vector<8x1xf32>
    %cst_39 = arith.constant 3.200000e+01 : f32
    %61 = vector.broadcast %cst_39 : f32 to vector<8x1xf32>
    %62 = arith.divf %60, %61 : vector<8x1xf32>
    %63 = vector.broadcast %55 : vector<8x1xf32> to vector<8x32xf32>
    %64 = arith.subf %51, %63 : vector<8x32xf32>
    %cst_40 = arith.constant 9.99999974E-6 : f32
    %65 = vector.broadcast %cst_40 : f32 to vector<8x1xf32>
    %66 = arith.addf %62, %65 : vector<8x1xf32>
    %67 = math.rsqrt %66 : vector<8x1xf32>
    %68 = vector.broadcast %67 : vector<8x1xf32> to vector<8x32xf32>
    %69 = arith.mulf %64, %68 : vector<8x32xf32>
    %c0_41 = arith.constant 0 : index
    %c0_42 = arith.constant 0 : index
    %70 = vector.load %arg11[%c0_41, %c0_42] : memref<1x32xf32, #tpu.memory_space<vmem>>, vector<1x32xf32>
    %71 = vector.broadcast %70 : vector<1x32xf32> to vector<8x32xf32>
    %72 = arith.mulf %69, %71 : vector<8x32xf32>
    %c0_43 = arith.constant 0 : index
    %c0_44 = arith.constant 0 : index
    %73 = vector.load %arg12[%c0_43, %c0_44] : memref<1x32xf32, #tpu.memory_space<vmem>>, vector<1x32xf32>
    %74 = vector.broadcast %73 : vector<1x32xf32> to vector<8x32xf32>
    %75 = arith.addf %72, %74 : vector<8x32xf32>
    %76 = arith.truncf %75 : vector<8x32xf32> to vector<8x32xbf16>
    %c0_45 = arith.constant 0 : index
    %c0_46 = arith.constant 0 : index
    %c0_47 = arith.constant 0 : index
    %77 = vector.load %arg13[%c0_45, %c0_46, %c0_47] : memref<1x8x32xbf16, #tpu.memory_space<vmem>>, vector<1x8x32xbf16>
    %78 = vector.shape_cast %77 : vector<1x8x32xbf16> to vector<8x32xbf16>
    %79 = vector.shape_cast %76 : vector<8x32xbf16> to vector<1x8x32xbf16>
    tpu.vector_store %arg13[%c0_45, %c0_46, %c0_47], %79 {strides = array<i32>} : memref<1x8x32xbf16, #tpu.memory_space<vmem>>, vector<1x8x32xbf16>,
    return
  }
  func.func @transform_0(%arg0: i32) -> (i32, i32, i32) {
    %c0_i32 = arith.constant 0 : i32
    %c0_i32_0 = arith.constant 0 : i32
    %c0_i32_1 = arith.constant 0 : i32
    return %arg0, %c0_i32, %c0_i32_0 : i32, i32, i32
  }
  func.func @transform_1(%arg0: i32) -> (i32, i32) {
    %c0_i32 = arith.constant 0 : i32
    %c0_i32_0 = arith.constant 0 : i32
    %c0_i32_1 = arith.constant 0 : i32
    return %c0_i32, %c0_i32_0 : i32, i32
  }
  func.func @transform_2(%arg0: i32) -> (i32, i32, i32) {
    %c0_i32 = arith.constant 0 : i32
    %c0_i32_0 = arith.constant 0 : i32
    %c0_i32_1 = arith.constant 0 : i32
    %c0_i32_2 = arith.constant 0 : i32
    return %c0_i32, %c0_i32_0, %c0_i32_1 : i32, i32, i32
  }
  func.func @transform_3(%arg0: i32) -> (i32, i32, i32) {
    %c0_i32 = arith.constant 0 : i32
    %c0_i32_0 = arith.constant 0 : i32
    %c0_i32_1 = arith.constant 0 : i32
    %c0_i32_2 = arith.constant 0 : i32
    return %c0_i32, %c0_i32_0, %c0_i32_1 : i32, i32, i32
  }
  func.func @transform_4(%arg0: i32) -> (i32, i32, i32) {
    %c0_i32 = arith.constant 0 : i32
    %c0_i32_0 = arith.constant 0 : i32
    %c0_i32_1 = arith.constant 0 : i32
    %c0_i32_2 = arith.constant 0 : i32
    return %c0_i32, %c0_i32_0, %c0_i32_1 : i32, i32, i32
  }
  func.func @transform_5(%arg0: i32) -> (i32, i32, i32) {
    %c0_i32 = arith.constant 0 : i32
    %c0_i32_0 = arith.constant 0 : i32
    %c0_i32_1 = arith.constant 0 : i32
    %c0_i32_2 = arith.constant 0 : i32
    return %c0_i32, %c0_i32_0, %c0_i32_1 : i32, i32, i32
  }
  func.func @transform_6(%arg0: i32) -> (i32, i32, i32) {
    %c0_i32 = arith.constant 0 : i32
    %c0_i32_0 = arith.constant 0 : i32
    %c0_i32_1 = arith.constant 0 : i32
    %c0_i32_2 = arith.constant 0 : i32
    return %c0_i32, %c0_i32_0, %c0_i32_1 : i32, i32, i32
  }
  func.func @transform_7(%arg0: i32) -> (i32, i32, i32) {
    %c0_i32 = arith.constant 0 : i32
    %c0_i32_0 = arith.constant 0 : i32
    %c0_i32_1 = arith.constant 0 : i32
    %c0_i32_2 = arith.constant 0 : i32
    return %c0_i32, %c0_i32_0, %c0_i32_1 : i32, i32, i32
  }
  func.func @transform_8(%arg0: i32) -> (i32, i32, i32) {
    %c0_i32 = arith.constant 0 : i32
    %c0_i32_0 = arith.constant 0 : i32
    %c0_i32_1 = arith.constant 0 : i32
    %c0_i32_2 = arith.constant 0 : i32
    return %c0_i32, %c0_i32_0, %c0_i32_1 : i32, i32, i32
  }
  func.func @transform_9(%arg0: i32) -> (i32, i32) {
    %c0_i32 = arith.constant 0 : i32
    %c0_i32_0 = arith.constant 0 : i32
    %c0_i32_1 = arith.constant 0 : i32
    return %c0_i32, %c0_i32_0 : i32, i32
  }
  func.func @transform_10(%arg0: i32) -> (i32, i32) {
    %c0_i32 = arith.constant 0 : i32
    %c0_i32_0 = arith.constant 0 : i32
    %c0_i32_1 = arith.constant 0 : i32
    return %c0_i32, %c0_i32_0 : i32, i32
  }
  func.func @transform_11(%arg0: i32) -> (i32, i32) {
    %c0_i32 = arith.constant 0 : i32
    %c0_i32_0 = arith.constant 0 : i32
    %c0_i32_1 = arith.constant 0 : i32
    return %c0_i32, %c0_i32_0 : i32, i32
  }
  func.func @transform_12(%arg0: i32) -> (i32, i32, i32) {
    %c0_i32 = arith.constant 0 : i32
    %c0_i32_0 = arith.constant 0 : i32
    %c0_i32_1 = arith.constant 0 : i32
    return %arg0, %c0_i32, %c0_i32_0 : i32, i32, i32
  }
}

</mosaic_0001>

<llo_original>
// kernel: decoder_forward.9
$region0: #{decoder_forward.9}
  #allocation0 [shape = 'u32[]', space=smem, size = 0x4, offset = 0x4, fixed_abs, tag = 'smem constant byte address 0x4 - core index']
  #allocation1 [shape = 'u32[144,128]{1,0:T(1,128)}', space=vmem, size = 0x12000, scoped, tag = 'internal scratch']
  %s0 = inlined_call_operand.vmem [shape: bf16[16,32], index: 0, kind: input, shape index: {}]
  %s1 = inlined_call_operand.vmem [shape: bf16[32,128], index: 1, kind: input, shape index: {}]
  %s2 = inlined_call_operand.vmem [shape: f32[1,128], index: 2, kind: input, shape index: {}]
  %s3 = inlined_call_operand.vmem [shape: f32[16,128], index: 3, kind: output, shape index: {}]
  %s4 = sld [smem:[#allocation0]]
  $region45: #{decoder_forward.9} parent=0
    _
  %s6 = ssub.s32 1, %s4
  %s7 = scalar_select 0, %s6, %s4
  loop: start=0, step=1, limit=4
  $region2: #{decoder_forward.9} parent=0 // loop_pre_header
    _
  $region3: #{decoder_forward.9} parent=0 // loop_header
    %s9 = sphi 0, %s13
    %p10 = scmp.ge.s32.totalorder %s9, 4
    %s16 = sphi 0, %s28
    %s17 = sphi 0, %s24
    %s18 = sphi 0, %s16
    %s19 = sphi 0, %s17
    %s20 = sphi 0, %s18
    %s21 = sphi 0, %s19
    %s31 = sphi 0, %s33
    %s34 = sphi 0, %s31
    %s35 = sphi 0, %s34
    %s51 = sphi 0, %s35
    %s57 = sphi 0, %s59
    %s60 = sphi 0, %s57
    %s61 = sphi 0, %s60
    %s77 = sphi 0, %s61
    %s83 = sphi 0, %s85
    %s86 = sphi 0, %s83
    %s87 = sphi 0, %s86
    %s103 = sphi 0, %s87
    %s111 = sphi 0, %s113
    %s114 = sphi 0, %s111
    %s115 = sphi 0, %s114
    %s131 = sphi 0, %s115
  $region4: #{decoder_forward.9} parent=0 // loop_header_branch
    %12 = sbr.rel (%p10) target = $region8
  $region5: #{decoder_forward.9} parent=0 // loop_body
    %s14 = ssub.s32 %s9, 1
    %s15 = ssub.s32 %s9, 2
    %s22 = sadd.s32 1, %s17
    %p23 = scmp.ge.s32.totalorder %s22, 1
    %s24 = scalar_select %p23, 0, %s22
    %s25 = sadd.s32 1, %s16
    %s26 = scalar_select %p23, %s25, %s16
    %p27 = scmp.ge.s32.totalorder %s26, 2
    %s28 = scalar_select %p27, 0, %s26
    %s29 = ssub.s32 %s16, %s28
    %p30 = scmp.eq.s32.totalorder %s29, 0
    %s32 = sadd.s32 %s31, 1
    %s33 = scalar_select %p30, %s31, %s32
    %p36 = pneg %p30
    %p37 = scmp.eq.s32.totalorder %s9, 1
    %p38 = por %p36, %p37
    %p39 = scmp.ne.s32.totalorder %s31, %s34
    %p40 = scmp.eq.s32.totalorder %s9, 0
    %p41 = por %p39, %p40
    %p42 = scmp.ne.s32.totalorder %s31, %s34
    %p43 = scmp.eq.s32.totalorder %s14, 1
    %p44 = por %p42, %p43
    %p45 = scmp.ne.s32.totalorder %s34, %s35
    %p46 = scmp.eq.s32.totalorder %s14, 0
    %p47 = por %p45, %p46
    %p48 = scmp.ne.s32.totalorder %s34, %s35
    %p49 = scmp.eq.s32.totalorder %s15, 1
    %p50 = por %p48, %p49
    %p52 = scmp.ne.s32.totalorder %s35, %s51
    %p53 = scmp.eq.s32.totalorder %s15, 0
    %p54 = por %p52, %p53
    %s55 = ssub.s32 %s17, %s24
    %p56 = scmp.eq.s32.totalorder %s55, 0
    %s58 = sadd.s32 %s57, 1
    %s59 = scalar_select %p56, %s57, %s58
    %p62 = pneg %p56
    %p63 = scmp.eq.s32.totalorder %s9, 1
    %p64 = por %p62, %p63
    %p65 = scmp.ne.s32.totalorder %s57, %s60
    %p66 = scmp.eq.s32.totalorder %s9, 0
    %p67 = por %p65, %p66
    %p68 = scmp.ne.s32.totalorder %s57, %s60
    %p69 = scmp.eq.s32.totalorder %s14, 1
    %p70 = por %p68, %p69
    %p71 = scmp.ne.s32.totalorder %s60, %s61
    %p72 = scmp.eq.s32.totalorder %s14, 0
    %p73 = por %p71, %p72
    %p74 = scmp.ne.s32.totalorder %s60, %s61
    %p75 = scmp.eq.s32.totalorder %s15, 1
    %p76 = por %p74, %p75
    %p78 = scmp.ne.s32.totalorder %s61, %s77
    %p79 = scmp.eq.s32.totalorder %s15, 0
    %p80 = por %p78, %p79
    %s81 = ssub.s32 %s17, %s24
    %p82 = scmp.eq.s32.totalorder %s81, 0
    %s84 = sadd.s32 %s83, 1
    %s85 = scalar_select %p82, %s83, %s84
    %p88 = pneg %p82
    %p89 = scmp.eq.s32.totalorder %s9, 1
    %p90 = por %p88, %p89
    %p91 = scmp.ne.s32.totalorder %s83, %s86
    %p92 = scmp.eq.s32.totalorder %s9, 0
    %p93 = por %p91, %p92
    %p94 = scmp.ne.s32.totalorder %s83, %s86
    %p95 = scmp.eq.s32.totalorder %s14, 1
    %p96 = por %p94, %p95
    %p97 = scmp.ne.s32.totalorder %s86, %s87
    %p98 = scmp.eq.s32.totalorder %s14, 0
    %p99 = por %p97, %p98
    %p100 = scmp.ne.s32.totalorder %s86, %s87
    %p101 = scmp.eq.s32.totalorder %s15, 1
    %p102 = por %p100, %p101
    %p104 = scmp.ne.s32.totalorder %s87, %s103
    %p105 = scmp.eq.s32.totalorder %s15, 0
    %p106 = por %p104, %p105
    %s107 = ssub.s32 %s16, %s28
    %s108 = ssub.s32 %s17, %s24
    %s109 = sor.u32 %s107, %s108
    %p110 = scmp.eq.s32.totalorder %s109, 0
    %s112 = sadd.s32 %s111, 1
    %s113 = scalar_select %p110, %s111, %s112
    %p116 = pneg %p110
    %p117 = scmp.eq.s32.totalorder %s9, 1
    %p118 = por %p116, %p117
    %p119 = scmp.ne.s32.totalorder %s111, %s114
    %p120 = scmp.eq.s32.totalorder %s9, 0
    %p121 = por %p119, %p120
    %p122 = scmp.ne.s32.totalorder %s111, %s114
    %p123 = scmp.eq.s32.totalorder %s14, 1
    %p124 = por %p122, %p123
    %p125 = scmp.ne.s32.totalorder %s114, %s115
    %p126 = scmp.eq.s32.totalorder %s14, 0
    %p127 = por %p125, %p126
    %p128 = scmp.ne.s32.totalorder %s114, %s115
    %p129 = scmp.eq.s32.totalorder %s15, 1
    %p130 = por %p128, %p129
    %p132 = scmp.ne.s32.totalorder %s115, %s131
    %p133 = scmp.eq.s32.totalorder %s15, 0
    %p134 = por %p132, %p133
    %p135 = scmp.le.s32.totalorder 1, %s9
    %p136 = scmp.lt.s32.totalorder %s9, 3
    %p137 = pnand %p135, %p136
    %p138 = pneg %p137
    // Predicated region
    $region9: #{decoder_forward.9} parent=5 // pred_check
      _
    $region10: #{decoder_forward.9} parent=5 // pred_check_branch
      %140 = sbr.rel (%p137) target = $region12
    $region11: #{decoder_forward.9} parent=5 // pred_region
      %s141 = ssub.s32 %s9, 1
      // Predicated region
      $region13: #{decoder_forward.9} parent=11 // pred_check
        %p142 = pneg %p73
      $region14: #{decoder_forward.9} parent=11 // pred_check_branch
        %144 = sbr.rel (%p142) target = $region16
      $region15: #{decoder_forward.9} parent=11 // pred_region
        %p145 = scmp.lt.s32.totalorder %s19, 0
        %s146 = scalar_select %p145, %s19, 0
        %s147 = smul.addr %s146, 4
        %s148 = scalar_lea.vmem %s1, %s147
      $region16: #{decoder_forward.9} parent=11 // pred_fallthru
        _
      // Predicated region
      $region17: #{decoder_forward.9} parent=11 // pred_check
        %p149 = pneg %p99
      $region18: #{decoder_forward.9} parent=11 // pred_check_branch
        %151 = sbr.rel (%p149) target = $region20
      $region19: #{decoder_forward.9} parent=11 // pred_region
        %p152 = scmp.lt.s32.totalorder %s19, 0
        %s153 = scalar_select %p152, %s19, 0
        %s154 = scalar_lea.vmem %s2, %s153
      $region20: #{decoder_forward.9} parent=11 // pred_fallthru
        _
    $region12: #{decoder_forward.9} parent=5 // pred_fallthru
      _
    %p155 = scmp.lt.s32.totalorder %s9, 2
    // Predicated region
    $region21: #{decoder_forward.9} parent=5 // pred_check
      %p156 = pneg %p155
    $region22: #{decoder_forward.9} parent=5 // pred_check_branch
      %158 = sbr.rel (%p156) target = $region24
    $region23: #{decoder_forward.9} parent=5 // pred_region
      // Predicated region
      $region25: #{decoder_forward.9} parent=23 // pred_check
        %p159 = pneg %p41
      $region26: #{decoder_forward.9} parent=23 // pred_check_branch
        %161 = sbr.rel (%p159) target = $region28
      $region27: #{decoder_forward.9} parent=23 // pred_region
        %p162 = scmp.lt.s32.totalorder %s16, 1
        %s163 = scalar_select %p162, %s16, 1
        %s164 = smul.addr %s163, 4
        %s165 = scalar_lea.vmem %s0, %s164
      $region28: #{decoder_forward.9} parent=23 // pred_fallthru
        _
    $region24: #{decoder_forward.9} parent=5 // pred_fallthru
      _
    %p166 = scmp.le.s32.totalorder 1, %s9
    %p167 = scmp.lt.s32.totalorder %s9, 3
    %p168 = pnand %p166, %p167
    %p169 = pneg %p168
    // Predicated region
    $region29: #{decoder_forward.9} parent=5 // pred_check
      _
    $region30: #{decoder_forward.9} parent=5 // pred_check_branch
      %171 = sbr.rel (%p168) target = $region32
    $region31: #{decoder_forward.9} parent=5 // pred_region
      %s172 = ssub.s32 %s9, 1
      %p173 = scmp.lt.s32.totalorder %s18, 1
      %s174 = scalar_select %p173, %s18, 1
      %s175 = smul.addr %s174, 4
      %s176 = scalar_lea.vmem %s0, %s175
      %p177 = pneg %p47
      %p178 = pneg %p44
      %p179 = scmp.lt.s32.totalorder %s19, 0
      %s180 = scalar_select %p179, %s19, 0
      %s181 = smul.addr %s180, 4
      %s182 = scalar_lea.vmem %s1, %s181
      %p183 = pneg %p73
      %p184 = pneg %p70
      %p185 = scmp.lt.s32.totalorder %s19, 0
      %s186 = scalar_select %p185, %s19, 0
      %s187 = scalar_lea.vmem %s2, %s186
      %p188 = pneg %p99
      %p189 = pneg %p96
      %p190 = pneg %p127
      %p191 = pneg %p124
      %p192 = scmp.lt.s32.totalorder %s18, 1
      %s193 = scalar_select %p192, %s18, 1
      %p194 = scmp.lt.s32.totalorder %s19, 0
      %s195 = scalar_select %p194, %s19, 0
      %s196 = sadd.s32 %s195, %s193
      %s197 = smul.addr %s196, 8
      %s198 = scalar_lea.vmem %s3, %s197
      %p199 = scmp.lt.s32.totalorder %s18, 1
      %s200 = scalar_select %p199, %s18, 1
      %s201 = smul.addr %s200, 4
      %s202 = scalar_lea.vmem %s0, %s201
      %p203 = scmp.lt.s32.totalorder %s19, 0
      %s204 = scalar_select %p203, %s19, 0
      %s205 = smul.addr %s204, 4
      %s206 = scalar_lea.vmem %s1, %s205
      %p207 = scmp.lt.s32.totalorder %s19, 0
      %s208 = scalar_select %p207, %s19, 0
      %s209 = scalar_lea.vmem %s2, %s208
      %p210 = scmp.lt.s32.totalorder %s18, 1
      %s211 = scalar_select %p210, %s18, 1
      %p212 = scmp.lt.s32.totalorder %s19, 0
      %s213 = scalar_select %p212, %s19, 0
      %s214 = sadd.s32 %s213, %s211
      %s215 = smul.addr %s214, 8
      %s216 = scalar_lea.vmem %s3, %s215
      %v218 = vld [vmem:[%s202] sm:$0xf]
      %v219 = vld [vmem:[%s206] sm:$0xf]
      %v220 = vld [vmem:[%s206 + $0x4] sm:$0xf]
      %v221 = vld [vmem:[%s206 + $0x8] sm:$0xf]
      %v222 = vld [vmem:[%s206 + $0xc] sm:$0xf]
      %v223 = vld [vmem:[%s209] sm:$0x1]
      %v225 = vlaneseq
      %v226 = vshrl.u32 %v225, 7
      %v227 = vsub.s32 0, %v226
      %v228 = vrot.slane %v223, %v227
      %v234 = vunpack.c.l.b16 %v219
      %v235 = vunpack.c.l.b16 %v220
      %v236 = vunpack.c.l.b16 %v221
      %v237 = vunpack.c.l.b16 %v222
      %v238 = vpack.c.b16 %v235, %v234
      %v239 = vpack.c.b16 %v237, %v236
      %vm242 = vcmask 261120
      %v244 = vsel %vm242, %v218, 0
      %246 = vmatprep.subr.bf16.mxu0 0
      %247 = vmatpush1.bf16.msra.mxu0 0
      %248 = vmatprep.subr.bf16.mxu0 0
      %249 = vmatpush1.bf16.msra.mxu0 0
      %250 = vmatprep.subr.bf16.mxu0 0
      %251 = vmatpush1.bf16.msra.mxu0 0
      %252 = vmatprep.subr.bf16.mxu0 0
      %253 = vmatpush1.bf16.msra.mxu0 0
      %254 = vmatprep.subr.bf16.mxu0 0
      %255 = vmatpush1.bf16.msra.mxu0 0
      %256 = vmatprep.subr.bf16.mxu0 0
      %257 = vmatpush1.bf16.msra.mxu0 0
      %258 = vmatprep.subr.bf16.mxu0 0
      %259 = vmatpush1.bf16.msra.mxu0 %v239
      %260 = vmatprep.subr.bf16.mxu0 0
      %261 = vmatpush1.bf16.msra.mxu0 %v238
      %262 = vmatprep.subr.bf16.mxu0 0
      %263 = vmatpush2.bf16.msra.mxu0 0
      %264 = vmatprep.subr.bf16.mxu0 0
      %265 = vmatpush2.bf16.msra.mxu0 0
      %266 = vmatprep.subr.bf16.mxu0 0
      %267 = vmatpush2.bf16.msra.mxu0 0
      %268 = vmatprep.subr.bf16.mxu0 0
      %269 = vmatpush2.bf16.msra.mxu0 0
      %270 = vmatprep.subr.bf16.mxu0 0
      %271 = vmatpush2.bf16.msra.mxu0 0
      %272 = vmatprep.subr.bf16.mxu0 0
      %273 = vmatpush2.bf16.msra.mxu0 0
      %274 = vmatprep.subr.bf16.mxu0 0
      %275 = vmatpush2.bf16.msra.mxu0 0
      %276 = vmatprep.subr.bf16.mxu0 0
      %277 = vmatpush2.bf16.msra.mxu0 0
      %278 = vmatprep.mubr.bf16.mxu0 0
      %279 = vmatmul.mubr.bf16.gmra.mxu0 %v244
      %v280 = vpop.f32.mrf.mxu0
      %v281 = vadd.f32 %v228, %v280
      %v282 = vpop.f32.mrf.mxu0
      %v283 = vpop.f32.mrf.mxu0
      %v284 = vpop.f32.mrf.mxu0
      %285 = vdwg.mxu0
      %286 = vst [vmem:[%s216] sm:$0xff] %v281
      %p287 = scmp.lt.s32.totalorder %s18, 1
      %s288 = scalar_select %p287, %s18, 1
      %p289 = scmp.lt.s32.totalorder %s19, 0
      %s290 = scalar_select %p289, %s19, 0
      %s291 = sadd.s32 %s290, %s288
      %s292 = smul.addr %s291, 8
      %s293 = scalar_lea.vmem %s3, %s292
      // Predicated region
      $region33: #{decoder_forward.9} parent=31 // pred_check
        %p294 = pneg %p124
      $region34: #{decoder_forward.9} parent=31 // pred_check_branch
        %296 = sbr.rel (%p294) target = $region36
      $region35: #{decoder_forward.9} parent=31 // pred_region
        _
      $region36: #{decoder_forward.9} parent=31 // pred_fallthru
        _
    $region32: #{decoder_forward.9} parent=5 // pred_fallthru
      _
    %p297 = scmp.le.s32.totalorder 2, %s9
    // Predicated region
    $region37: #{decoder_forward.9} parent=5 // pred_check
      %p298 = pneg %p297
    $region38: #{decoder_forward.9} parent=5 // pred_check_branch
      %300 = sbr.rel (%p298) target = $region40
    $region39: #{decoder_forward.9} parent=5 // pred_region
      %s301 = ssub.s32 %s9, 2
      // Predicated region
      $region41: #{decoder_forward.9} parent=39 // pred_check
        %p302 = pneg %p130
      $region42: #{decoder_forward.9} parent=39 // pred_check_branch
        %304 = sbr.rel (%p302) target = $region44
      $region43: #{decoder_forward.9} parent=39 // pred_region
        %p305 = scmp.lt.s32.totalorder %s20, 1
        %s306 = scalar_select %p305, %s20, 1
        %p307 = scmp.lt.s32.totalorder %s21, 0
        %s308 = scalar_select %p307, %s21, 0
        %s309 = sadd.s32 %s308, %s306
        %s310 = smul.addr %s309, 8
        %s311 = scalar_lea.vmem %s3, %s310
      $region44: #{decoder_forward.9} parent=39 // pred_fallthru
        _
    $region40: #{decoder_forward.9} parent=5 // pred_fallthru
      _
  $region6: #{decoder_forward.9} parent=0 // loop_footer
    %s13 = sadd.s32 1, %s9
  $region7: #{decoder_forward.9} parent=0 // loop_footer_branch
    %8 = sbr.rel target = $region3
  $region8: #{decoder_forward.9} parent=0 // loop_exit
    _

// kernel: decoder_forward.6
$region0: #{decoder_forward.6}
  #allocation0 [shape = 'u32[]', space=smem, size = 0x4, offset = 0x4, fixed_abs, tag = 'smem constant byte address 0x4 - core index']
  #allocation1 [shape = 'u32[144,128]{1,0:T(1,128)}', space=vmem, size = 0x12000, scoped, tag = 'internal scratch']
  %s0 = inlined_call_operand.vmem [shape: bf16[16,32], index: 0, kind: input, shape index: {}]
  %s1 = inlined_call_operand.vmem [shape: bf16[32,64], index: 1, kind: input, shape index: {}]
  %s2 = inlined_call_operand.vmem [shape: f32[1,64], index: 2, kind: input, shape index: {}]
  %s3 = inlined_call_operand.vmem [shape: bf16[64,32], index: 3, kind: input, shape index: {}]
  %s4 = inlined_call_operand.vmem [shape: f32[1,32], index: 4, kind: input, shape index: {}]
  %s5 = inlined_call_operand.vmem [shape: f32[1,32], index: 5, kind: input, shape index: {}]
  %s6 = inlined_call_operand.vmem [shape: f32[1,32], index: 6, kind: input, shape index: {}]
  %s7 = inlined_call_operand.vmem [shape: bf16[16,32], index: 7, kind: output, shape index: {}]
  %s8 = sld [smem:[#allocation0]]
  $region61: #{decoder_forward.6} parent=0
    _
  %s10 = ssub.s32 1, %s8
  %s11 = scalar_select 0, %s10, %s8
  loop: start=0, step=1, limit=4
  $region2: #{decoder_forward.6} parent=0 // loop_pre_header
    _
  $region3: #{decoder_forward.6} parent=0 // loop_header
    %s13 = sphi 0, %s17
    %p14 = scmp.ge.s32.totalorder %s13, 4
    %s23 = sphi 0, %s25
    %s26 = sphi 0, %s23
    %s27 = sphi 0, %s26
    %s43 = sphi 0, %s27
    %s47 = sphi 0, %s47
    %s49 = sphi 0, %s47
    %s50 = sphi 0, %s49
    %s64 = sphi 0, %s50
    %s68 = sphi 0, %s68
    %s70 = sphi 0, %s68
    %s71 = sphi 0, %s70
    %s85 = sphi 0, %s71
    %s89 = sphi 0, %s89
    %s91 = sphi 0, %s89
    %s92 = sphi 0, %s91
    %s106 = sphi 0, %s92
    %s110 = sphi 0, %s110
    %s112 = sphi 0, %s110
    %s113 = sphi 0, %s112
    %s127 = sphi 0, %s113
    %s131 = sphi 0, %s131
    %s133 = sphi 0, %s131
    %s134 = sphi 0, %s133
    %s148 = sphi 0, %s134
    %s152 = sphi 0, %s152
    %s154 = sphi 0, %s152
    %s155 = sphi 0, %s154
    %s169 = sphi 0, %s155
    %s175 = sphi 0, %s177
    %s178 = sphi 0, %s175
    %s179 = sphi 0, %s178
    %s195 = sphi 0, %s179
  $region4: #{decoder_forward.6} parent=0 // loop_header_branch
    %16 = sbr.rel (%p14) target = $region8
  $region5: #{decoder_forward.6} parent=0 // loop_body
    %s18 = ssub.s32 %s13, 1
    %s19 = ssub.s32 %s13, 2
    %s20 = sadd.s32 %s13, 1
    %s21 = ssub.s32 %s13, %s20
    %p22 = scmp.eq.s32.totalorder %s21, 0
    %s24 = sadd.s32 %s23, 1
    %s25 = scalar_select %p22, %s23, %s24
    %p28 = pneg %p22
    %p29 = scmp.eq.s32.totalorder %s13, 1
    %p30 = por %p28, %p29
    %p31 = scmp.ne.s32.totalorder %s23, %s26
    %p32 = scmp.eq.s32.totalorder %s13, 0
    %p33 = por %p31, %p32
    %p34 = scmp.ne.s32.totalorder %s23, %s26
    %p35 = scmp.eq.s32.totalorder %s18, 1
    %p36 = por %p34, %p35
    %p37 = scmp.ne.s32.totalorder %s26, %s27
    %p38 = scmp.eq.s32.totalorder %s18, 0
    %p39 = por %p37, %p38
    %p40 = scmp.ne.s32.totalorder %s26, %s27
    %p41 = scmp.eq.s32.totalorder %s19, 1
    %p42 = por %p40, %p41
    %p44 = scmp.ne.s32.totalorder %s27, %s43
    %p45 = scmp.eq.s32.totalorder %s19, 0
    %p46 = por %p44, %p45
    %s48 = sadd.s32 %s47, 1
    %p51 = scmp.eq.s32.totalorder %s13, 1
    %p52 = scmp.ne.s32.totalorder %s47, %s49
    %p53 = scmp.eq.s32.totalorder %s13, 0
    %p54 = por %p52, %p53
    %p55 = scmp.ne.s32.totalorder %s47, %s49
    %p56 = scmp.eq.s32.totalorder %s18, 1
    %p57 = por %p55, %p56
    %p58 = scmp.ne.s32.totalorder %s49, %s50
    %p59 = scmp.eq.s32.totalorder %s18, 0
    %p60 = por %p58, %p59
    %p61 = scmp.ne.s32.totalorder %s49, %s50
    %p62 = scmp.eq.s32.totalorder %s19, 1
    %p63 = por %p61, %p62
    %p65 = scmp.ne.s32.totalorder %s50, %s64
    %p66 = scmp.eq.s32.totalorder %s19, 0
    %p67 = por %p65, %p66
    %s69 = sadd.s32 %s68, 1
    %p72 = scmp.eq.s32.totalorder %s13, 1
    %p73 = scmp.ne.s32.totalorder %s68, %s70
    %p74 = scmp.eq.s32.totalorder %s13, 0
    %p75 = por %p73, %p74
    %p76 = scmp.ne.s32.totalorder %s68, %s70
    %p77 = scmp.eq.s32.totalorder %s18, 1
    %p78 = por %p76, %p77
    %p79 = scmp.ne.s32.totalorder %s70, %s71
    %p80 = scmp.eq.s32.totalorder %s18, 0
    %p81 = por %p79, %p80
    %p82 = scmp.ne.s32.totalorder %s70, %s71
    %p83 = scmp.eq.s32.totalorder %s19, 1
    %p84 = por %p82, %p83
    %p86 = scmp.ne.s32.totalorder %s71, %s85
    %p87 = scmp.eq.s32.totalorder %s19, 0
    %p88 = por %p86, %p87
    %s90 = sadd.s32 %s89, 1
    %p93 = scmp.eq.s32.totalorder %s13, 1
    %p94 = scmp.ne.s32.totalorder %s89, %s91
    %p95 = scmp.eq.s32.totalorder %s13, 0
    %p96 = por %p94, %p95
    %p97 = scmp.ne.s32.totalorder %s89, %s91
    %p98 = scmp.eq.s32.totalorder %s18, 1
    %p99 = por %p97, %p98
    %p100 = scmp.ne.s32.totalorder %s91, %s92
    %p101 = scmp.eq.s32.totalorder %s18, 0
    %p102 = por %p100, %p101
    %p103 = scmp.ne.s32.totalorder %s91, %s92
    %p104 = scmp.eq.s32.totalorder %s19, 1
    %p105 = por %p103, %p104
    %p107 = scmp.ne.s32.totalorder %s92, %s106
    %p108 = scmp.eq.s32.totalorder %s19, 0
    %p109 = por %p107, %p108
    %s111 = sadd.s32 %s110, 1
    %p114 = scmp.eq.s32.totalorder %s13, 1
    %p115 = scmp.ne.s32.totalorder %s110, %s112
    %p116 = scmp.eq.s32.totalorder %s13, 0
    %p117 = por %p115, %p116
    %p118 = scmp.ne.s32.totalorder %s110, %s112
    %p119 = scmp.eq.s32.totalorder %s18, 1
    %p120 = por %p118, %p119
    %p121 = scmp.ne.s32.totalorder %s112, %s113
    %p122 = scmp.eq.s32.totalorder %s18, 0
    %p123 = por %p121, %p122
    %p124 = scmp.ne.s32.totalorder %s112, %s113
    %p125 = scmp.eq.s32.totalorder %s19, 1
    %p126 = por %p124, %p125
    %p128 = scmp.ne.s32.totalorder %s113, %s127
    %p129 = scmp.eq.s32.totalorder %s19, 0
    %p130 = por %p128, %p129
    %s132 = sadd.s32 %s131, 1
    %p135 = scmp.eq.s32.totalorder %s13, 1
    %p136 = scmp.ne.s32.totalorder %s131, %s133
    %p137 = scmp.eq.s32.totalorder %s13, 0
    %p138 = por %p136, %p137
    %p139 = scmp.ne.s32.totalorder %s131, %s133
    %p140 = scmp.eq.s32.totalorder %s18, 1
    %p141 = por %p139, %p140
    %p142 = scmp.ne.s32.totalorder %s133, %s134
    %p143 = scmp.eq.s32.totalorder %s18, 0
    %p144 = por %p142, %p143
    %p145 = scmp.ne.s32.totalorder %s133, %s134
    %p146 = scmp.eq.s32.totalorder %s19, 1
    %p147 = por %p145, %p146
    %p149 = scmp.ne.s32.totalorder %s134, %s148
    %p150 = scmp.eq.s32.totalorder %s19, 0
    %p151 = por %p149, %p150
    %s153 = sadd.s32 %s152, 1
    %p156 = scmp.eq.s32.totalorder %s13, 1
    %p157 = scmp.ne.s32.totalorder %s152, %s154
    %p158 = scmp.eq.s32.totalorder %s13, 0
    %p159 = por %p157, %p158
    %p160 = scmp.ne.s32.totalorder %s152, %s154
    %p161 = scmp.eq.s32.totalorder %s18, 1
    %p162 = por %p160, %p161
    %p163 = scmp.ne.s32.totalorder %s154, %s155
    %p164 = scmp.eq.s32.totalorder %s18, 0
    %p165 = por %p163, %p164
    %p166 = scmp.ne.s32.totalorder %s154, %s155
    %p167 = scmp.eq.s32.totalorder %s19, 1
    %p168 = por %p166, %p167
    %p170 = scmp.ne.s32.totalorder %s155, %s169
    %p171 = scmp.eq.s32.totalorder %s19, 0
    %p172 = por %p170, %p171
    %s173 = ssub.s32 %s13, %s20
    %p174 = scmp.eq.s32.totalorder %s173, 0
    %s176 = sadd.s32 %s175, 1
    %s177 = scalar_select %p174, %s175, %s176
    %p180 = pneg %p174
    %p181 = scmp.eq.s32.totalorder %s13, 1
    %p182 = por %p180, %p181
    %p183 = scmp.ne.s32.totalorder %s175, %s178
    %p184 = scmp.eq.s32.totalorder %s13, 0
    %p185 = por %p183, %p184
    %p186 = scmp.ne.s32.totalorder %s175, %s178
    %p187 = scmp.eq.s32.totalorder %s18, 1
    %p188 = por %p186, %p187
    %p189 = scmp.ne.s32.totalorder %s178, %s179
    %p190 = scmp.eq.s32.totalorder %s18, 0
    %p191 = por %p189, %p190
    %p192 = scmp.ne.s32.totalorder %s178, %s179
    %p193 = scmp.eq.s32.totalorder %s19, 1
    %p194 = por %p192, %p193
    %p196 = scmp.ne.s32.totalorder %s179, %s195
    %p197 = scmp.eq.s32.totalorder %s19, 0
    %p198 = por %p196, %p197
    %p199 = scmp.le.s32.totalorder 1, %s13
    %p200 = scmp.lt.s32.totalorder %s13, 3
    %p201 = pnand %p199, %p200
    %p202 = pneg %p201
    // Predicated region
    $region9: #{decoder_forward.6} parent=5 // pred_check
      _
    $region10: #{decoder_forward.6} parent=5 // pred_check_branch
      %204 = sbr.rel (%p201) target = $region12
    $region11: #{decoder_forward.6} parent=5 // pred_region
      %s205 = ssub.s32 %s13, 1
      // Predicated region
      $region13: #{decoder_forward.6} parent=11 // pred_check
        %p206 = pneg %p60
      $region14: #{decoder_forward.6} parent=11 // pred_check_branch
        %208 = sbr.rel (%p206) target = $region16
      $region15: #{decoder_forward.6} parent=11 // pred_region
        _
      $region16: #{decoder_forward.6} parent=11 // pred_fallthru
        _
      // Predicated region
      $region17: #{decoder_forward.6} parent=11 // pred_check
        %p209 = pneg %p81
      $region18: #{decoder_forward.6} parent=11 // pred_check_branch
        %211 = sbr.rel (%p209) target = $region20
      $region19: #{decoder_forward.6} parent=11 // pred_region
        _
      $region20: #{decoder_forward.6} parent=11 // pred_fallthru
        _
      // Predicated region
      $region21: #{decoder_forward.6} parent=11 // pred_check
        %p212 = pneg %p102
      $region22: #{decoder_forward.6} parent=11 // pred_check_branch
        %214 = sbr.rel (%p212) target = $region24
      $region23: #{decoder_forward.6} parent=11 // pred_region
        _
      $region24: #{decoder_forward.6} parent=11 // pred_fallthru
        _
      // Predicated region
      $region25: #{decoder_forward.6} parent=11 // pred_check
        %p215 = pneg %p123
      $region26: #{decoder_forward.6} parent=11 // pred_check_branch
        %217 = sbr.rel (%p215) target = $region28
      $region27: #{decoder_forward.6} parent=11 // pred_region
        _
      $region28: #{decoder_forward.6} parent=11 // pred_fallthru
        _
      // Predicated region
      $region29: #{decoder_forward.6} parent=11 // pred_check
        %p218 = pneg %p144
      $region30: #{decoder_forward.6} parent=11 // pred_check_branch
        %220 = sbr.rel (%p218) target = $region32
      $region31: #{decoder_forward.6} parent=11 // pred_region
        _
      $region32: #{decoder_forward.6} parent=11 // pred_fallthru
        _
      // Predicated region
      $region33: #{decoder_forward.6} parent=11 // pred_check
        %p221 = pneg %p165
      $region34: #{decoder_forward.6} parent=11 // pred_check_branch
        %223 = sbr.rel (%p221) target = $region36
      $region35: #{decoder_forward.6} parent=11 // pred_region
        _
      $region36: #{decoder_forward.6} parent=11 // pred_fallthru
        _
    $region12: #{decoder_forward.6} parent=5 // pred_fallthru
      _
    %p224 = scmp.lt.s32.totalorder %s13, 2
    // Predicated region
    $region37: #{decoder_forward.6} parent=5 // pred_check
      %p225 = pneg %p224
    $region38: #{decoder_forward.6} parent=5 // pred_check_branch
      %227 = sbr.rel (%p225) target = $region40
    $region39: #{decoder_forward.6} parent=5 // pred_region
      // Predicated region
      $region41: #{decoder_forward.6} parent=39 // pred_check
        %p228 = pneg %p33
      $region42: #{decoder_forward.6} parent=39 // pred_check_branch
        %230 = sbr.rel (%p228) target = $region44
      $region43: #{decoder_forward.6} parent=39 // pred_region
        %p231 = scmp.lt.s32.totalorder %s13, 1
        %s232 = scalar_select %p231, %s13, 1
        %s233 = smul.addr %s232, 4
        %s234 = scalar_lea.vmem %s0, %s233
      $region44: #{decoder_forward.6} parent=39 // pred_fallthru
        _
    $region40: #{decoder_forward.6} parent=5 // pred_fallthru
      _
    %p235 = scmp.le.s32.totalorder 1, %s13
    %p236 = scmp.lt.s32.totalorder %s13, 3
    %p237 = pnand %p235, %p236
    %p238 = pneg %p237
    // Predicated region
    $region45: #{decoder_forward.6} parent=5 // pred_check
      _
    $region46: #{decoder_forward.6} parent=5 // pred_check_branch
      %240 = sbr.rel (%p237) target = $region48
    $region47: #{decoder_forward.6} parent=5 // pred_region
      %s241 = ssub.s32 %s13, 1
      %p242 = scmp.lt.s32.totalorder %s18, 1
      %s243 = scalar_select %p242, %s18, 1
      %s244 = smul.addr %s243, 4
      %s245 = scalar_lea.vmem %s0, %s244
      %p246 = pneg %p39
      %p247 = pneg %p36
      %p248 = pneg %p60
      %p249 = pneg %p57
      %p250 = pneg %p81
      %p251 = pneg %p78
      %p252 = pneg %p102
      %p253 = pneg %p99
      %p254 = pneg %p123
      %p255 = pneg %p120
      %p256 = pneg %p144
      %p257 = pneg %p141
      %p258 = pneg %p165
      %p259 = pneg %p162
      %p260 = pneg %p191
      %p261 = pneg %p188
      %p262 = scmp.lt.s32.totalorder %s18, 1
      %s263 = scalar_select %p262, %s18, 1
      %s264 = smul.addr %s263, 4
      %s265 = scalar_lea.vmem %s7, %s264
      %p266 = scmp.lt.s32.totalorder %s18, 1
      %s267 = scalar_select %p266, %s18, 1
      %s268 = smul.addr %s267, 4
      %s269 = scalar_lea.vmem %s0, %s268
      %p270 = scmp.lt.s32.totalorder %s18, 1
      %s271 = scalar_select %p270, %s18, 1
      %s272 = smul.addr %s271, 4
      %s273 = scalar_lea.vmem %s7, %s272
      %v275 = vld [vmem:[%s269] sm:$0xf]
      %v276 = vld [vmem:[%s1] sm:$0xf]
      %v277 = vld [vmem:[%s1 + $0x4] sm:$0xf]
      %v278 = vld [vmem:[%s1 + $0x8] sm:$0xf]
      %v279 = vld [vmem:[%s1 + $0xc] sm:$0xf]
      %v280 = vld [vmem:[%s2] sm:$0x1]
      %v282 = vlaneseq
      %v283 = vshrl.u32 %v282, 7
      %v284 = vsub.s32 0, %v283
      %v285 = vrot.slane %v280, %v284
      %v291 = vunpack.c.l.b16 %v276
      %v292 = vunpack.c.l.b16 %v277
      %v293 = vunpack.c.l.b16 %v278
      %v294 = vunpack.c.l.b16 %v279
      %v295 = vpack.c.b16 %v292, %v291
      %v296 = vpack.c.b16 %v294, %v293
      %vm299 = vcmask 261120
      %v301 = vsel %vm299, %v275, 0
      %303 = vmatprep.subr.bf16.mxu0 0
      %304 = vmatpush1.bf16.msra.mxu0 0
      %305 = vmatprep.subr.bf16.mxu0 0
      %306 = vmatpush1.bf16.msra.mxu0 0
      %307 = vmatprep.subr.bf16.mxu0 0
      %308 = vmatpush1.bf16.msra.mxu0 0
      %309 = vmatprep.subr.bf16.mxu0 0
      %310 = vmatpush1.bf16.msra.mxu0 0
      %311 = vmatprep.subr.bf16.mxu0 0
      %312 = vmatpush1.bf16.msra.mxu0 0
      %313 = vmatprep.subr.bf16.mxu0 0
      %314 = vmatpush1.bf16.msra.mxu0 0
      %315 = vmatprep.subr.bf16.mxu0 0
      %316 = vmatpush1.bf16.msra.mxu0 %v296
      %317 = vmatprep.subr.bf16.mxu0 0
      %318 = vmatpush1.bf16.msra.mxu0 %v295
      %319 = vmatprep.subr.bf16.mxu0 0
      %320 = vmatpush2.bf16.msra.mxu0 0
      %321 = vmatprep.subr.bf16.mxu0 0
      %322 = vmatpush2.bf16.msra.mxu0 0
      %323 = vmatprep.subr.bf16.mxu0 0
      %324 = vmatpush2.bf16.msra.mxu0 0
      %325 = vmatprep.subr.bf16.mxu0 0
      %326 = vmatpush2.bf16.msra.mxu0 0
      %327 = vmatprep.subr.bf16.mxu0 0
      %328 = vmatpush2.bf16.msra.mxu0 0
      %329 = vmatprep.subr.bf16.mxu0 0
      %330 = vmatpush2.bf16.msra.mxu0 0
      %331 = vmatprep.subr.bf16.mxu0 0
      %332 = vmatpush2.bf16.msra.mxu0 0
      %333 = vmatprep.subr.bf16.mxu0 0
      %334 = vmatpush2.bf16.msra.mxu0 0
      %335 = vmatprep.mubr.bf16.mxu0 0
      %336 = vmatmul.mubr.bf16.gmra.mxu0 %v301
      %v337 = vpop.f32.mrf.mxu0
      %v338 = vadd.f32 %v285, %v337
      %v339 = vpop.f32.mrf.mxu0
      %v340 = vpop.f32.mrf.mxu0
      %v341 = vpop.f32.mrf.mxu0
      %342 = vdwg.mxu0
      %v343 = vmax.f32 %v338, 0.0
      %v344 = vpack.c.bf16 %v343, %v343
      %v345 = vld [vmem:[%s3] sm:$0xf]
      %v346 = vld [vmem:[%s3 + $0x4] sm:$0xf]
      %v347 = vld [vmem:[%s3 + $0x8] sm:$0xf]
      %v348 = vld [vmem:[%s3 + $0xc] sm:$0xf]
      %v349 = vld [vmem:[%s3 + $0x10] sm:$0xf]
      %v350 = vld [vmem:[%s3 + $0x14] sm:$0xf]
      %v351 = vld [vmem:[%s3 + $0x18] sm:$0xf]
      %v352 = vld [vmem:[%s3 + $0x1c] sm:$0xf]
      %v353 = vld [vmem:[%s4] sm:$0x1]
      %v355 = vlaneseq
      %v356 = vshrl.u32 %v355, 7
      %v357 = vsub.s32 0, %v356
      %v358 = vrot.slane %v353, %v357
      %v368 = vunpack.c.l.b16 %v345
      %v369 = vunpack.c.l.b16 %v346
      %v370 = vunpack.c.l.b16 %v347
      %v371 = vunpack.c.l.b16 %v348
      %v372 = vunpack.c.l.b16 %v349
      %v373 = vunpack.c.l.b16 %v350
      %v374 = vunpack.c.l.b16 %v351
      %v375 = vunpack.c.l.b16 %v352
      %v376 = vpack.c.b16 %v369, %v368
      %v377 = vpack.c.b16 %v371, %v370
      %v378 = vpack.c.b16 %v373, %v372
      %v379 = vpack.c.b16 %v375, %v374
      %vm384 = vcmask 523264
      %v386 = vsel %vm384, %v344, 0
      %388 = vmatprep.subr.bf16.mxu0 0
      %389 = vmatpush1.bf16.msra.mxu0 0
      %390 = vmatprep.subr.bf16.mxu0 0
      %391 = vmatpush1.bf16.msra.mxu0 0
      %392 = vmatprep.subr.bf16.mxu0 0
      %393 = vmatpush1.bf16.msra.mxu0 0
      %394 = vmatprep.subr.bf16.mxu0 0
      %395 = vmatpush1.bf16.msra.mxu0 0
      %396 = vmatprep.subr.bf16.mxu0 0
      %397 = vmatpush1.bf16.msra.mxu0 %v379
      %398 = vmatprep.subr.bf16.mxu0 0
      %399 = vmatpush1.bf16.msra.mxu0 %v378
      %400 = vmatprep.subr.bf16.mxu0 0
      %401 = vmatpush1.bf16.msra.mxu0 %v377
      %402 = vmatprep.subr.bf16.mxu0 0
      %403 = vmatpush1.bf16.msra.mxu0 %v376
      %404 = vmatprep.subr.bf16.mxu0 0
      %405 = vmatpush2.bf16.msra.mxu0 0
      %406 = vmatprep.subr.bf16.mxu0 0
      %407 = vmatpush2.bf16.msra.mxu0 0
      %408 = vmatprep.subr.bf16.mxu0 0
      %409 = vmatpush2.bf16.msra.mxu0 0
      %410 = vmatprep.subr.bf16.mxu0 0
      %411 = vmatpush2.bf16.msra.mxu0 0
      %412 = vmatprep.subr.bf16.mxu0 0
      %413 = vmatpush2.bf16.msra.mxu0 0
      %414 = vmatprep.subr.bf16.mxu0 0
      %415 = vmatpush2.bf16.msra.mxu0 0
      %416 = vmatprep.subr.bf16.mxu0 0
      %417 = vmatpush2.bf16.msra.mxu0 0
      %418 = vmatprep.subr.bf16.mxu0 0
      %419 = vmatpush2.bf16.msra.mxu0 0
      %420 = vmatprep.mubr.bf16.mxu0 0
      %421 = vmatmul.mubr.bf16.gmra.mxu0 %v386
      %v422 = vpop.f32.mrf.mxu0
      %v423 = vadd.f32 %v358, %v422
      %v424 = vpop.f32.mrf.mxu0
      %v425 = vpop.f32.mrf.mxu0
      %v426 = vpop.f32.mrf.mxu0
      %427 = vdwg.mxu0
      %v428 = vunpack.c.l.bf16 %v275
      %v429 = vadd.f32 %v428, %v423
      %v430 = vsel %vm299, %v429, 0.0
      %431 = vadd.xlane.f32.xlu0 %v430
      %v432 = vpop.xlane.xlu0 %431
      %v433 = vrcp.pop 32.0
      %v434 = vmul.f32 %v432, %v433
      %v435 = vsub.f32 %v429, %v434
      %v436 = vmul.f32 %v435, %v435
      %v437 = vsel %vm299, %v436, 0.0
      %438 = vadd.xlane.f32.xlu0 %v437
      %v439 = vpop.xlane.xlu0 %438
      %v440 = vmul.f32 %v439, %v433
      %v441 = vadd.f32 %v440, 1e-05
      %v442 = vrsqrt.pop %v441
      %v443 = vmul.f32 %v435, %v442
      %v444 = vld [vmem:[%s5] sm:$0x1]
      %v446 = vlaneseq
      %v447 = vshrl.u32 %v446, 7
      %v448 = vsub.s32 0, %v447
      %v449 = vrot.slane %v444, %v448
      %v451 = vmul.f32 %v443, %v449
      %v452 = vld [vmem:[%s6] sm:$0x1]
      %v454 = vlaneseq
      %v455 = vshrl.u32 %v454, 7
      %v456 = vsub.s32 0, %v455
      %v457 = vrot.slane %v452, %v456
      %v459 = vadd.f32 %v451, %v457
      %v460 = vpack.c.bf16 %v459, %v459
      %vm461 = vcmask 257024
      %462 = vst.msk [vmem:[%s273] sm:$0xf] %vm461, %v460
      %p463 = scmp.lt.s32.totalorder %s18, 1
      %s464 = scalar_select %p463, %s18, 1
      %s465 = smul.addr %s464, 4
      %s466 = scalar_lea.vmem %s7, %s465
      // Predicated region
      $region49: #{decoder_forward.6} parent=47 // pred_check
        %p467 = pneg %p188
      $region50: #{decoder_forward.6} parent=47 // pred_check_branch
        %469 = sbr.rel (%p467) target = $region52
      $region51: #{decoder_forward.6} parent=47 // pred_region
        _
      $region52: #{decoder_forward.6} parent=47 // pred_fallthru
        _
    $region48: #{decoder_forward.6} parent=5 // pred_fallthru
      _
    %p470 = scmp.le.s32.totalorder 2, %s13
    // Predicated region
    $region53: #{decoder_forward.6} parent=5 // pred_check
      %p471 = pneg %p470
    $region54: #{decoder_forward.6} parent=5 // pred_check_branch
      %473 = sbr.rel (%p471) target = $region56
    $region55: #{decoder_forward.6} parent=5 // pred_region
      %s474 = ssub.s32 %s13, 2
      // Predicated region
      $region57: #{decoder_forward.6} parent=55 // pred_check
        %p475 = pneg %p194
      $region58: #{decoder_forward.6} parent=55 // pred_check_branch
        %477 = sbr.rel (%p475) target = $region60
      $region59: #{decoder_forward.6} parent=55 // pred_region
        %p478 = scmp.lt.s32.totalorder %s19, 1
        %s479 = scalar_select %p478, %s19, 1
        %s480 = smul.addr %s479, 4
        %s481 = scalar_lea.vmem %s7, %s480
      $region60: #{decoder_forward.6} parent=55 // pred_fallthru
        _
    $region56: #{decoder_forward.6} parent=5 // pred_fallthru
      _
  $region6: #{decoder_forward.6} parent=0 // loop_footer
    %s17 = sadd.s32 1, %s13
  $region7: #{decoder_forward.6} parent=0 // loop_footer_branch
    %12 = sbr.rel target = $region3
  $region8: #{decoder_forward.6} parent=0 // loop_exit
    _

// kernel: decoder_forward.5
$region0: #{decoder_forward.5}
  #allocation0 [shape = 'u32[]', space=smem, size = 0x4, offset = 0x4, fixed_abs, tag = 'smem constant byte address 0x4 - core index']
  #allocation1 [shape = 'u32[144,128]{1,0:T(1,128)}', space=vmem, size = 0x12000, scoped, tag = 'internal scratch']
  %s0 = inlined_call_operand.vmem [shape: f32[2,8,32], index: 0, kind: input, shape index: {}]
  %s1 = inlined_call_operand.vmem [shape: f32[8,32], index: 1, kind: input, shape index: {}]
  %s2 = inlined_call_operand.vmem [shape: f32[8,8], index: 2, kind: input, shape index: {}]
  %s3 = inlined_call_operand.vmem [shape: bf16[4,32,8], index: 3, kind: input, shape index: {}]
  %s4 = inlined_call_operand.vmem [shape: bf16[4,32,8], index: 4, kind: input, shape index: {}]
  %s5 = inlined_call_operand.vmem [shape: bf16[4,32,8], index: 5, kind: input, shape index: {}]
  %s6 = inlined_call_operand.vmem [shape: f32[4,1,8], index: 6, kind: input, shape index: {}]
  %s7 = inlined_call_operand.vmem [shape: f32[4,1,8], index: 7, kind: input, shape index: {}]
  %s8 = inlined_call_operand.vmem [shape: f32[4,1,8], index: 8, kind: input, shape index: {}]
  %s9 = inlined_call_operand.vmem [shape: bf16[4,8,32], index: 9, kind: input, shape index: {}]
  %s10 = inlined_call_operand.vmem [shape: f32[1,32], index: 10, kind: input, shape index: {}]
  %s11 = inlined_call_operand.vmem [shape: f32[1,32], index: 11, kind: input, shape index: {}]
  %s12 = inlined_call_operand.vmem [shape: f32[1,32], index: 12, kind: input, shape index: {}]
  %s13 = inlined_call_operand.vmem [shape: bf16[2,8,32], index: 13, kind: output, shape index: {}]
  %s14 = sld [smem:[#allocation0]]
  $region85: #{decoder_forward.5} parent=0
    _
  %s16 = ssub.s32 1, %s14
  %s17 = scalar_select 0, %s16, %s14
  loop: start=0, step=1, limit=4
  $region2: #{decoder_forward.5} parent=0 // loop_pre_header
    _
  $region3: #{decoder_forward.5} parent=0 // loop_header
    %s19 = sphi 0, %s23
    %p20 = scmp.ge.s32.totalorder %s19, 4
    %s29 = sphi 0, %s31
    %s32 = sphi 0, %s29
    %s33 = sphi 0, %s32
    %s49 = sphi 0, %s33
    %s53 = sphi 0, %s53
    %s55 = sphi 0, %s53
    %s56 = sphi 0, %s55
    %s70 = sphi 0, %s56
    %s74 = sphi 0, %s74
    %s76 = sphi 0, %s74
    %s77 = sphi 0, %s76
    %s91 = sphi 0, %s77
    %s95 = sphi 0, %s95
    %s97 = sphi 0, %s95
    %s98 = sphi 0, %s97
    %s112 = sphi 0, %s98
    %s116 = sphi 0, %s116
    %s118 = sphi 0, %s116
    %s119 = sphi 0, %s118
    %s133 = sphi 0, %s119
    %s137 = sphi 0, %s137
    %s139 = sphi 0, %s137
    %s140 = sphi 0, %s139
    %s154 = sphi 0, %s140
    %s158 = sphi 0, %s158
    %s160 = sphi 0, %s158
    %s161 = sphi 0, %s160
    %s175 = sphi 0, %s161
    %s179 = sphi 0, %s179
    %s181 = sphi 0, %s179
    %s182 = sphi 0, %s181
    %s196 = sphi 0, %s182
    %s200 = sphi 0, %s200
    %s202 = sphi 0, %s200
    %s203 = sphi 0, %s202
    %s217 = sphi 0, %s203
    %s221 = sphi 0, %s221
    %s223 = sphi 0, %s221
    %s224 = sphi 0, %s223
    %s238 = sphi 0, %s224
    %s242 = sphi 0, %s242
    %s244 = sphi 0, %s242
    %s245 = sphi 0, %s244
    %s259 = sphi 0, %s245
    %s263 = sphi 0, %s263
    %s265 = sphi 0, %s263
    %s266 = sphi 0, %s265
    %s280 = sphi 0, %s266
    %s284 = sphi 0, %s284
    %s286 = sphi 0, %s284
    %s287 = sphi 0, %s286
    %s301 = sphi 0, %s287
    %s307 = sphi 0, %s309
    %s310 = sphi 0, %s307
    %s311 = sphi 0, %s310
    %s327 = sphi 0, %s311
  $region4: #{decoder_forward.5} parent=0 // loop_header_branch
    %22 = sbr.rel (%p20) target = $region8
  $region5: #{decoder_forward.5} parent=0 // loop_body
    %s24 = ssub.s32 %s19, 1
    %s25 = ssub.s32 %s19, 2
    %s26 = sadd.s32 %s19, 1
    %s27 = ssub.s32 %s19, %s26
    %p28 = scmp.eq.s32.totalorder %s27, 0
    %s30 = sadd.s32 %s29, 1
    %s31 = scalar_select %p28, %s29, %s30
    %p34 = pneg %p28
    %p35 = scmp.eq.s32.totalorder %s19, 1
    %p36 = por %p34, %p35
    %p37 = scmp.ne.s32.totalorder %s29, %s32
    %p38 = scmp.eq.s32.totalorder %s19, 0
    %p39 = por %p37, %p38
    %p40 = scmp.ne.s32.totalorder %s29, %s32
    %p41 = scmp.eq.s32.totalorder %s24, 1
    %p42 = por %p40, %p41
    %p43 = scmp.ne.s32.totalorder %s32, %s33
    %p44 = scmp.eq.s32.totalorder %s24, 0
    %p45 = por %p43, %p44
    %p46 = scmp.ne.s32.totalorder %s32, %s33
    %p47 = scmp.eq.s32.totalorder %s25, 1
    %p48 = por %p46, %p47
    %p50 = scmp.ne.s32.totalorder %s33, %s49
    %p51 = scmp.eq.s32.totalorder %s25, 0
    %p52 = por %p50, %p51
    %s54 = sadd.s32 %s53, 1
    %p57 = scmp.eq.s32.totalorder %s19, 1
    %p58 = scmp.ne.s32.totalorder %s53, %s55
    %p59 = scmp.eq.s32.totalorder %s19, 0
    %p60 = por %p58, %p59
    %p61 = scmp.ne.s32.totalorder %s53, %s55
    %p62 = scmp.eq.s32.totalorder %s24, 1
    %p63 = por %p61, %p62
    %p64 = scmp.ne.s32.totalorder %s55, %s56
    %p65 = scmp.eq.s32.totalorder %s24, 0
    %p66 = por %p64, %p65
    %p67 = scmp.ne.s32.totalorder %s55, %s56
    %p68 = scmp.eq.s32.totalorder %s25, 1
    %p69 = por %p67, %p68
    %p71 = scmp.ne.s32.totalorder %s56, %s70
    %p72 = scmp.eq.s32.totalorder %s25, 0
    %p73 = por %p71, %p72
    %s75 = sadd.s32 %s74, 1
    %p78 = scmp.eq.s32.totalorder %s19, 1
    %p79 = scmp.ne.s32.totalorder %s74, %s76
    %p80 = scmp.eq.s32.totalorder %s19, 0
    %p81 = por %p79, %p80
    %p82 = scmp.ne.s32.totalorder %s74, %s76
    %p83 = scmp.eq.s32.totalorder %s24, 1
    %p84 = por %p82, %p83
    %p85 = scmp.ne.s32.totalorder %s76, %s77
    %p86 = scmp.eq.s32.totalorder %s24, 0
    %p87 = por %p85, %p86
    %p88 = scmp.ne.s32.totalorder %s76, %s77
    %p89 = scmp.eq.s32.totalorder %s25, 1
    %p90 = por %p88, %p89
    %p92 = scmp.ne.s32.totalorder %s77, %s91
    %p93 = scmp.eq.s32.totalorder %s25, 0
    %p94 = por %p92, %p93
    %s96 = sadd.s32 %s95, 1
    %p99 = scmp.eq.s32.totalorder %s19, 1
    %p100 = scmp.ne.s32.totalorder %s95, %s97
    %p101 = scmp.eq.s32.totalorder %s19, 0
    %p102 = por %p100, %p101
    %p103 = scmp.ne.s32.totalorder %s95, %s97
    %p104 = scmp.eq.s32.totalorder %s24, 1
    %p105 = por %p103, %p104
    %p106 = scmp.ne.s32.totalorder %s97, %s98
    %p107 = scmp.eq.s32.totalorder %s24, 0
    %p108 = por %p106, %p107
    %p109 = scmp.ne.s32.totalorder %s97, %s98
    %p110 = scmp.eq.s32.totalorder %s25, 1
    %p111 = por %p109, %p110
    %p113 = scmp.ne.s32.totalorder %s98, %s112
    %p114 = scmp.eq.s32.totalorder %s25, 0
    %p115 = por %p113, %p114
    %s117 = sadd.s32 %s116, 1
    %p120 = scmp.eq.s32.totalorder %s19, 1
    %p121 = scmp.ne.s32.totalorder %s116, %s118
    %p122 = scmp.eq.s32.totalorder %s19, 0
    %p123 = por %p121, %p122
    %p124 = scmp.ne.s32.totalorder %s116, %s118
    %p125 = scmp.eq.s32.totalorder %s24, 1
    %p126 = por %p124, %p125
    %p127 = scmp.ne.s32.totalorder %s118, %s119
    %p128 = scmp.eq.s32.totalorder %s24, 0
    %p129 = por %p127, %p128
    %p130 = scmp.ne.s32.totalorder %s118, %s119
    %p131 = scmp.eq.s32.totalorder %s25, 1
    %p132 = por %p130, %p131
    %p134 = scmp.ne.s32.totalorder %s119, %s133
    %p135 = scmp.eq.s32.totalorder %s25, 0
    %p136 = por %p134, %p135
    %s138 = sadd.s32 %s137, 1
    %p141 = scmp.eq.s32.totalorder %s19, 1
    %p142 = scmp.ne.s32.totalorder %s137, %s139
    %p143 = scmp.eq.s32.totalorder %s19, 0
    %p144 = por %p142, %p143
    %p145 = scmp.ne.s32.totalorder %s137, %s139
    %p146 = scmp.eq.s32.totalorder %s24, 1
    %p147 = por %p145, %p146
    %p148 = scmp.ne.s32.totalorder %s139, %s140
    %p149 = scmp.eq.s32.totalorder %s24, 0
    %p150 = por %p148, %p149
    %p151 = scmp.ne.s32.totalorder %s139, %s140
    %p152 = scmp.eq.s32.totalorder %s25, 1
    %p153 = por %p151, %p152
    %p155 = scmp.ne.s32.totalorder %s140, %s154
    %p156 = scmp.eq.s32.totalorder %s25, 0
    %p157 = por %p155, %p156
    %s159 = sadd.s32 %s158, 1
    %p162 = scmp.eq.s32.totalorder %s19, 1
    %p163 = scmp.ne.s32.totalorder %s158, %s160
    %p164 = scmp.eq.s32.totalorder %s19, 0
    %p165 = por %p163, %p164
    %p166 = scmp.ne.s32.totalorder %s158, %s160
    %p167 = scmp.eq.s32.totalorder %s24, 1
    %p168 = por %p166, %p167
    %p169 = scmp.ne.s32.totalorder %s160, %s161
    %p170 = scmp.eq.s32.totalorder %s24, 0
    %p171 = por %p169, %p170
    %p172 = scmp.ne.s32.totalorder %s160, %s161
    %p173 = scmp.eq.s32.totalorder %s25, 1
    %p174 = por %p172, %p173
    %p176 = scmp.ne.s32.totalorder %s161, %s175
    %p177 = scmp.eq.s32.totalorder %s25, 0
    %p178 = por %p176, %p177
    %s180 = sadd.s32 %s179, 1
    %p183 = scmp.eq.s32.totalorder %s19, 1
    %p184 = scmp.ne.s32.totalorder %s179, %s181
    %p185 = scmp.eq.s32.totalorder %s19, 0
    %p186 = por %p184, %p185
    %p187 = scmp.ne.s32.totalorder %s179, %s181
    %p188 = scmp.eq.s32.totalorder %s24, 1
    %p189 = por %p187, %p188
    %p190 = scmp.ne.s32.totalorder %s181, %s182
    %p191 = scmp.eq.s32.totalorder %s24, 0
    %p192 = por %p190, %p191
    %p193 = scmp.ne.s32.totalorder %s181, %s182
    %p194 = scmp.eq.s32.totalorder %s25, 1
    %p195 = por %p193, %p194
    %p197 = scmp.ne.s32.totalorder %s182, %s196
    %p198 = scmp.eq.s32.totalorder %s25, 0
    %p199 = por %p197, %p198
    %s201 = sadd.s32 %s200, 1
    %p204 = scmp.eq.s32.totalorder %s19, 1
    %p205 = scmp.ne.s32.totalorder %s200, %s202
    %p206 = scmp.eq.s32.totalorder %s19, 0
    %p207 = por %p205, %p206
    %p208 = scmp.ne.s32.totalorder %s200, %s202
    %p209 = scmp.eq.s32.totalorder %s24, 1
    %p210 = por %p208, %p209
    %p211 = scmp.ne.s32.totalorder %s202, %s203
    %p212 = scmp.eq.s32.totalorder %s24, 0
    %p213 = por %p211, %p212
    %p214 = scmp.ne.s32.totalorder %s202, %s203
    %p215 = scmp.eq.s32.totalorder %s25, 1
    %p216 = por %p214, %p215
    %p218 = scmp.ne.s32.totalorder %s203, %s217
    %p219 = scmp.eq.s32.totalorder %s25, 0
    %p220 = por %p218, %p219
    %s222 = sadd.s32 %s221, 1
    %p225 = scmp.eq.s32.totalorder %s19, 1
    %p226 = scmp.ne.s32.totalorder %s221, %s223
    %p227 = scmp.eq.s32.totalorder %s19, 0
    %p228 = por %p226, %p227
    %p229 = scmp.ne.s32.totalorder %s221, %s223
    %p230 = scmp.eq.s32.totalorder %s24, 1
    %p231 = por %p229, %p230
    %p232 = scmp.ne.s32.totalorder %s223, %s224
    %p233 = scmp.eq.s32.totalorder %s24, 0
    %p234 = por %p232, %p233
    %p235 = scmp.ne.s32.totalorder %s223, %s224
    %p236 = scmp.eq.s32.totalorder %s25, 1
    %p237 = por %p235, %p236
    %p239 = scmp.ne.s32.totalorder %s224, %s238
    %p240 = scmp.eq.s32.totalorder %s25, 0
    %p241 = por %p239, %p240
    %s243 = sadd.s32 %s242, 1
    %p246 = scmp.eq.s32.totalorder %s19, 1
    %p247 = scmp.ne.s32.totalorder %s242, %s244
    %p248 = scmp.eq.s32.totalorder %s19, 0
    %p249 = por %p247, %p248
    %p250 = scmp.ne.s32.totalorder %s242, %s244
    %p251 = scmp.eq.s32.totalorder %s24, 1
    %p252 = por %p250, %p251
    %p253 = scmp.ne.s32.totalorder %s244, %s245
    %p254 = scmp.eq.s32.totalorder %s24, 0
    %p255 = por %p253, %p254
    %p256 = scmp.ne.s32.totalorder %s244, %s245
    %p257 = scmp.eq.s32.totalorder %s25, 1
    %p258 = por %p256, %p257
    %p260 = scmp.ne.s32.totalorder %s245, %s259
    %p261 = scmp.eq.s32.totalorder %s25, 0
    %p262 = por %p260, %p261
    %s264 = sadd.s32 %s263, 1
    %p267 = scmp.eq.s32.totalorder %s19, 1
    %p268 = scmp.ne.s32.totalorder %s263, %s265
    %p269 = scmp.eq.s32.totalorder %s19, 0
    %p270 = por %p268, %p269
    %p271 = scmp.ne.s32.totalorder %s263, %s265
    %p272 = scmp.eq.s32.totalorder %s24, 1
    %p273 = por %p271, %p272
    %p274 = scmp.ne.s32.totalorder %s265, %s266
    %p275 = scmp.eq.s32.totalorder %s24, 0
    %p276 = por %p274, %p275
    %p277 = scmp.ne.s32.totalorder %s265, %s266
    %p278 = scmp.eq.s32.totalorder %s25, 1
    %p279 = por %p277, %p278
    %p281 = scmp.ne.s32.totalorder %s266, %s280
    %p282 = scmp.eq.s32.totalorder %s25, 0
    %p283 = por %p281, %p282
    %s285 = sadd.s32 %s284, 1
    %p288 = scmp.eq.s32.totalorder %s19, 1
    %p289 = scmp.ne.s32.totalorder %s284, %s286
    %p290 = scmp.eq.s32.totalorder %s19, 0
    %p291 = por %p289, %p290
    %p292 = scmp.ne.s32.totalorder %s284, %s286
    %p293 = scmp.eq.s32.totalorder %s24, 1
    %p294 = por %p292, %p293
    %p295 = scmp.ne.s32.totalorder %s286, %s287
    %p296 = scmp.eq.s32.totalorder %s24, 0
    %p297 = por %p295, %p296
    %p298 = scmp.ne.s32.totalorder %s286, %s287
    %p299 = scmp.eq.s32.totalorder %s25, 1
    %p300 = por %p298, %p299
    %p302 = scmp.ne.s32.totalorder %s287, %s301
    %p303 = scmp.eq.s32.totalorder %s25, 0
    %p304 = por %p302, %p303
    %s305 = ssub.s32 %s19, %s26
    %p306 = scmp.eq.s32.totalorder %s305, 0
    %s308 = sadd.s32 %s307, 1
    %s309 = scalar_select %p306, %s307, %s308
    %p312 = pneg %p306
    %p313 = scmp.eq.s32.totalorder %s19, 1
    %p314 = por %p312, %p313
    %p315 = scmp.ne.s32.totalorder %s307, %s310
    %p316 = scmp.eq.s32.totalorder %s19, 0
    %p317 = por %p315, %p316
    %p318 = scmp.ne.s32.totalorder %s307, %s310
    %p319 = scmp.eq.s32.totalorder %s24, 1
    %p320 = por %p318, %p319
    %p321 = scmp.ne.s32.totalorder %s310, %s311
    %p322 = scmp.eq.s32.totalorder %s24, 0
    %p323 = por %p321, %p322
    %p324 = scmp.ne.s32.totalorder %s310, %s311
    %p325 = scmp.eq.s32.totalorder %s25, 1
    %p326 = por %p324, %p325
    %p328 = scmp.ne.s32.totalorder %s311, %s327
    %p329 = scmp.eq.s32.totalorder %s25, 0
    %p330 = por %p328, %p329
    %p331 = scmp.le.s32.totalorder 1, %s19
    %p332 = scmp.lt.s32.totalorder %s19, 3
    %p333 = pnand %p331, %p332
    %p334 = pneg %p333
    // Predicated region
    $region9: #{decoder_forward.5} parent=5 // pred_check
      _
    $region10: #{decoder_forward.5} parent=5 // pred_check_branch
      %336 = sbr.rel (%p333) target = $region12
    $region11: #{decoder_forward.5} parent=5 // pred_region
      %s337 = ssub.s32 %s19, 1
      // Predicated region
      $region13: #{decoder_forward.5} parent=11 // pred_check
        %p338 = pneg %p66
      $region14: #{decoder_forward.5} parent=11 // pred_check_branch
        %340 = sbr.rel (%p338) target = $region16
      $region15: #{decoder_forward.5} parent=11 // pred_region
        _
      $region16: #{decoder_forward.5} parent=11 // pred_fallthru
        _
      // Predicated region
      $region17: #{decoder_forward.5} parent=11 // pred_check
        %p341 = pneg %p87
      $region18: #{decoder_forward.5} parent=11 // pred_check_branch
        %343 = sbr.rel (%p341) target = $region20
      $region19: #{decoder_forward.5} parent=11 // pred_region
        _
      $region20: #{decoder_forward.5} parent=11 // pred_fallthru
        _
      // Predicated region
      $region21: #{decoder_forward.5} parent=11 // pred_check
        %p344 = pneg %p108
      $region22: #{decoder_forward.5} parent=11 // pred_check_branch
        %346 = sbr.rel (%p344) target = $region24
      $region23: #{decoder_forward.5} parent=11 // pred_region
        _
      $region24: #{decoder_forward.5} parent=11 // pred_fallthru
        _
      // Predicated region
      $region25: #{decoder_forward.5} parent=11 // pred_check
        %p347 = pneg %p129
      $region26: #{decoder_forward.5} parent=11 // pred_check_branch
        %349 = sbr.rel (%p347) target = $region28
      $region27: #{decoder_forward.5} parent=11 // pred_region
        _
      $region28: #{decoder_forward.5} parent=11 // pred_fallthru
        _
      // Predicated region
      $region29: #{decoder_forward.5} parent=11 // pred_check
        %p350 = pneg %p150
      $region30: #{decoder_forward.5} parent=11 // pred_check_branch
        %352 = sbr.rel (%p350) target = $region32
      $region31: #{decoder_forward.5} parent=11 // pred_region
        _
      $region32: #{decoder_forward.5} parent=11 // pred_fallthru
        _
      // Predicated region
      $region33: #{decoder_forward.5} parent=11 // pred_check
        %p353 = pneg %p171
      $region34: #{decoder_forward.5} parent=11 // pred_check_branch
        %355 = sbr.rel (%p353) target = $region36
      $region35: #{decoder_forward.5} parent=11 // pred_region
        _
      $region36: #{decoder_forward.5} parent=11 // pred_fallthru
        _
      // Predicated region
      $region37: #{decoder_forward.5} parent=11 // pred_check
        %p356 = pneg %p192
      $region38: #{decoder_forward.5} parent=11 // pred_check_branch
        %358 = sbr.rel (%p356) target = $region40
      $region39: #{decoder_forward.5} parent=11 // pred_region
        _
      $region40: #{decoder_forward.5} parent=11 // pred_fallthru
        _
      // Predicated region
      $region41: #{decoder_forward.5} parent=11 // pred_check
        %p359 = pneg %p213
      $region42: #{decoder_forward.5} parent=11 // pred_check_branch
        %361 = sbr.rel (%p359) target = $region44
      $region43: #{decoder_forward.5} parent=11 // pred_region
        _
      $region44: #{decoder_forward.5} parent=11 // pred_fallthru
        _
      // Predicated region
      $region45: #{decoder_forward.5} parent=11 // pred_check
        %p362 = pneg %p234
      $region46: #{decoder_forward.5} parent=11 // pred_check_branch
        %364 = sbr.rel (%p362) target = $region48
      $region47: #{decoder_forward.5} parent=11 // pred_region
        _
      $region48: #{decoder_forward.5} parent=11 // pred_fallthru
        _
      // Predicated region
      $region49: #{decoder_forward.5} parent=11 // pred_check
        %p365 = pneg %p255
      $region50: #{decoder_forward.5} parent=11 // pred_check_branch
        %367 = sbr.rel (%p365) target = $region52
      $region51: #{decoder_forward.5} parent=11 // pred_region
        _
      $region52: #{decoder_forward.5} parent=11 // pred_fallthru
        _
      // Predicated region
      $region53: #{decoder_forward.5} parent=11 // pred_check
        %p368 = pneg %p276
      $region54: #{decoder_forward.5} parent=11 // pred_check_branch
        %370 = sbr.rel (%p368) target = $region56
      $region55: #{decoder_forward.5} parent=11 // pred_region
        _
      $region56: #{decoder_forward.5} parent=11 // pred_fallthru
        _
      // Predicated region
      $region57: #{decoder_forward.5} parent=11 // pred_check
        %p371 = pneg %p297
      $region58: #{decoder_forward.5} parent=11 // pred_check_branch
        %373 = sbr.rel (%p371) target = $region60
      $region59: #{decoder_forward.5} parent=11 // pred_region
        _
      $region60: #{decoder_forward.5} parent=11 // pred_fallthru
        _
    $region12: #{decoder_forward.5} parent=5 // pred_fallthru
      _
    %p374 = scmp.lt.s32.totalorder %s19, 2
    // Predicated region
    $region61: #{decoder_forward.5} parent=5 // pred_check
      %p375 = pneg %p374
    $region62: #{decoder_forward.5} parent=5 // pred_check_branch
      %377 = sbr.rel (%p375) target = $region64
    $region63: #{decoder_forward.5} parent=5 // pred_region
      // Predicated region
      $region65: #{decoder_forward.5} parent=63 // pred_check
        %p378 = pneg %p39
      $region66: #{decoder_forward.5} parent=63 // pred_check_branch
        %380 = sbr.rel (%p378) target = $region68
      $region67: #{decoder_forward.5} parent=63 // pred_region
        %p381 = scmp.lt.s32.totalorder %s19, 1
        %s382 = scalar_select %p381, %s19, 1
        %s383 = smul.addr %s382, 8
        %s384 = scalar_lea.vmem %s0, %s383
      $region68: #{decoder_forward.5} parent=63 // pred_fallthru
        _
    $region64: #{decoder_forward.5} parent=5 // pred_fallthru
      _
    %p385 = scmp.le.s32.totalorder 1, %s19
    %p386 = scmp.lt.s32.totalorder %s19, 3
    %p387 = pnand %p385, %p386
    %p388 = pneg %p387
    // Predicated region
    $region69: #{decoder_forward.5} parent=5 // pred_check
      _
    $region70: #{decoder_forward.5} parent=5 // pred_check_branch
      %390 = sbr.rel (%p387) target = $region72
    $region71: #{decoder_forward.5} parent=5 // pred_region
      %s391 = ssub.s32 %s19, 1
      %p392 = scmp.lt.s32.totalorder %s24, 1
      %s393 = scalar_select %p392, %s24, 1
      %s394 = smul.addr %s393, 8
      %s395 = scalar_lea.vmem %s0, %s394
      %p396 = pneg %p45
      %p397 = pneg %p42
      %p398 = pneg %p66
      %p399 = pneg %p63
      %p400 = pneg %p87
      %p401 = pneg %p84
      %p402 = pneg %p108
      %p403 = pneg %p105
      %p404 = pneg %p129
      %p405 = pneg %p126
      %p406 = pneg %p150
      %p407 = pneg %p147
      %p408 = pneg %p171
      %p409 = pneg %p168
      %p410 = pneg %p192
      %p411 = pneg %p189
      %p412 = pneg %p213
      %p413 = pneg %p210
      %p414 = pneg %p234
      %p415 = pneg %p231
      %p416 = pneg %p255
      %p417 = pneg %p252
      %p418 = pneg %p276
      %p419 = pneg %p273
      %p420 = pneg %p297
      %p421 = pneg %p294
      %p422 = pneg %p323
      %p423 = pneg %p320
      %p424 = scmp.lt.s32.totalorder %s24, 1
      %s425 = scalar_select %p424, %s24, 1
      %s426 = smul.addr %s425, 4
      %s427 = scalar_lea.vmem %s13, %s426
      %p428 = scmp.lt.s32.totalorder %s24, 1
      %s429 = scalar_select %p428, %s24, 1
      %s430 = smul.addr %s429, 8
      %s431 = scalar_lea.vmem %s0, %s430
      %p432 = scmp.lt.s32.totalorder %s24, 1
      %s433 = scalar_select %p432, %s24, 1
      %s434 = smul.addr %s433, 4
      %s435 = scalar_lea.vmem %s13, %s434
      %v437 = vld [vmem:[%s431] sm:$0xff]
      %v438 = vld [vmem:[%s1] sm:$0xff]
      %v439 = vadd.f32 %v437, %v438
      %v440 = vpack.c.bf16 %v439, %v439
      %v441 = vld [vmem:[%s3] sm:$0xf]
      %v442 = vld [vmem:[%s3 + $0x4] sm:$0xf]
      %v443 = vld [vmem:[%s3 + $0x8] sm:$0xf]
      %v444 = vld [vmem:[%s3 + $0xc] sm:$0xf]
      %v445 = vld [vmem:[%s3 + $0x10] sm:$0xf]
      %v446 = vld [vmem:[%s3 + $0x14] sm:$0xf]
      %v447 = vld [vmem:[%s3 + $0x18] sm:$0xf]
      %v448 = vld [vmem:[%s3 + $0x1c] sm:$0xf]
      %v449 = vld [vmem:[%s3 + $0x20] sm:$0xf]
      %v450 = vld [vmem:[%s3 + $0x24] sm:$0xf]
      %v451 = vld [vmem:[%s3 + $0x28] sm:$0xf]
      %v452 = vld [vmem:[%s3 + $0x2c] sm:$0xf]
      %v453 = vld [vmem:[%s3 + $0x30] sm:$0xf]
      %v454 = vld [vmem:[%s3 + $0x34] sm:$0xf]
      %v455 = vld [vmem:[%s3 + $0x38] sm:$0xf]
      %v456 = vld [vmem:[%s3 + $0x3c] sm:$0xf]
      %v457 = vld [vmem:[%s6] sm:$0x1]
      %v458 = vld [vmem:[%s6 + $0x1] sm:$0x1]
      %v459 = vld [vmem:[%s6 + $0x2] sm:$0x1]
      %v460 = vld [vmem:[%s6 + $0x3] sm:$0x1]
      %v465 = vlaneseq
      %v466 = vshrl.u32 %v465, 7
      %v467 = vsub.s32 0, %v466
      %v468 = vrot.slane %v457, %v467
      %v469 = vlaneseq
      %v470 = vshrl.u32 %v469, 7
      %v471 = vsub.s32 0, %v470
      %v472 = vrot.slane %v458, %v471
      %v473 = vlaneseq
      %v474 = vshrl.u32 %v473, 7
      %v475 = vsub.s32 0, %v474
      %v476 = vrot.slane %v459, %v475
      %v477 = vlaneseq
      %v478 = vshrl.u32 %v477, 7
      %v479 = vsub.s32 0, %v478
      %v480 = vrot.slane %v460, %v479
      %v489 = vunpack.c.l.b16 %v441
      %v490 = vunpack.c.l.b16 %v442
      %v491 = vunpack.c.l.b16 %v443
      %v492 = vunpack.c.l.b16 %v444
      %v493 = vpack.c.b16 %v490, %v489
      %v494 = vpack.c.b16 %v492, %v491
      %vm497 = vcmask 261120
      %v499 = vsel %vm497, %v440, 0
      %501 = vmatprep.subr.bf16.mxu0 0
      %502 = vmatpush1.bf16.msra.mxu0 0
      %503 = vmatprep.subr.bf16.mxu0 0
      %504 = vmatpush1.bf16.msra.mxu0 0
      %505 = vmatprep.subr.bf16.mxu0 0
      %506 = vmatpush1.bf16.msra.mxu0 0
      %507 = vmatprep.subr.bf16.mxu0 0
      %508 = vmatpush1.bf16.msra.mxu0 0
      %509 = vmatprep.subr.bf16.mxu0 0
      %510 = vmatpush1.bf16.msra.mxu0 0
      %511 = vmatprep.subr.bf16.mxu0 0
      %512 = vmatpush1.bf16.msra.mxu0 0
      %513 = vmatprep.subr.bf16.mxu0 0
      %514 = vmatpush1.bf16.msra.mxu0 %v494
      %515 = vmatprep.subr.bf16.mxu0 0
      %516 = vmatpush1.bf16.msra.mxu0 %v493
      %517 = vmatprep.subr.bf16.mxu0 0
      %518 = vmatpush2.bf16.msra.mxu0 0
      %519 = vmatprep.subr.bf16.mxu0 0
      %520 = vmatpush2.bf16.msra.mxu0 0
      %521 = vmatprep.subr.bf16.mxu0 0
      %522 = vmatpush2.bf16.msra.mxu0 0
      %523 = vmatprep.subr.bf16.mxu0 0
      %524 = vmatpush2.bf16.msra.mxu0 0
      %525 = vmatprep.subr.bf16.mxu0 0
      %526 = vmatpush2.bf16.msra.mxu0 0
      %527 = vmatprep.subr.bf16.mxu0 0
      %528 = vmatpush2.bf16.msra.mxu0 0
      %529 = vmatprep.subr.bf16.mxu0 0
      %530 = vmatpush2.bf16.msra.mxu0 0
      %531 = vmatprep.subr.bf16.mxu0 0
      %532 = vmatpush2.bf16.msra.mxu0 0
      %533 = vmatprep.mubr.bf16.mxu0 0
      %534 = vmatmul.mubr.bf16.gmra.mxu0 %v499
      %v535 = vpop.f32.mrf.mxu0
      %v536 = vadd.f32 %v468, %v535
      %v537 = vpop.f32.mrf.mxu0
      %v538 = vpop.f32.mrf.mxu0
      %v539 = vpop.f32.mrf.mxu0
      %540 = vdwg.mxu0
      %v545 = vunpack.c.l.b16 %v445
      %v546 = vunpack.c.l.b16 %v446
      %v547 = vunpack.c.l.b16 %v447
      %v548 = vunpack.c.l.b16 %v448
      %v549 = vpack.c.b16 %v546, %v545
      %v550 = vpack.c.b16 %v548, %v547
      %553 = vmatprep.subr.bf16.mxu0 0
      %554 = vmatpush1.bf16.msra.mxu0 0
      %555 = vmatprep.subr.bf16.mxu0 0
      %556 = vmatpush1.bf16.msra.mxu0 0
      %557 = vmatprep.subr.bf16.mxu0 0
      %558 = vmatpush1.bf16.msra.mxu0 0
      %559 = vmatprep.subr.bf16.mxu0 0
      %560 = vmatpush1.bf16.msra.mxu0 0
      %561 = vmatprep.subr.bf16.mxu0 0
      %562 = vmatpush1.bf16.msra.mxu0 0
      %563 = vmatprep.subr.bf16.mxu0 0
      %564 = vmatpush1.bf16.msra.mxu0 0
      %565 = vmatprep.subr.bf16.mxu0 0
      %566 = vmatpush1.bf16.msra.mxu0 %v550
      %567 = vmatprep.subr.bf16.mxu0 0
      %568 = vmatpush1.bf16.msra.mxu0 %v549
      %569 = vmatprep.subr.bf16.mxu0 0
      %570 = vmatpush2.bf16.msra.mxu0 0
      %571 = vmatprep.subr.bf16.mxu0 0
      %572 = vmatpush2.bf16.msra.mxu0 0
      %573 = vmatprep.subr.bf16.mxu0 0
      %574 = vmatpush2.bf16.msra.mxu0 0
      %575 = vmatprep.subr.bf16.mxu0 0
      %576 = vmatpush2.bf16.msra.mxu0 0
      %577 = vmatprep.subr.bf16.mxu0 0
      %578 = vmatpush2.bf16.msra.mxu0 0
      %579 = vmatprep.subr.bf16.mxu0 0
      %580 = vmatpush2.bf16.msra.mxu0 0
      %581 = vmatprep.subr.bf16.mxu0 0
      %582 = vmatpush2.bf16.msra.mxu0 0
      %583 = vmatprep.subr.bf16.mxu0 0
      %584 = vmatpush2.bf16.msra.mxu0 0
      %585 = vmatprep.mubr.bf16.mxu0 0
      %586 = vmatmul.mubr.bf16.gmra.mxu0 %v499
      %v587 = vpop.f32.mrf.mxu0
      %v588 = vadd.f32 %v472, %v587
      %v589 = vpop.f32.mrf.mxu0
      %v590 = vpop.f32.mrf.mxu0
      %v591 = vpop.f32.mrf.mxu0
      %592 = vdwg.mxu0
      %v597 = vunpack.c.l.b16 %v449
      %v598 = vunpack.c.l.b16 %v450
      %v599 = vunpack.c.l.b16 %v451
      %v600 = vunpack.c.l.b16 %v452
      %v601 = vpack.c.b16 %v598, %v597
      %v602 = vpack.c.b16 %v600, %v599
      %605 = vmatprep.subr.bf16.mxu0 0
      %606 = vmatpush1.bf16.msra.mxu0 0
      %607 = vmatprep.subr.bf16.mxu0 0
      %608 = vmatpush1.bf16.msra.mxu0 0
      %609 = vmatprep.subr.bf16.mxu0 0
      %610 = vmatpush1.bf16.msra.mxu0 0
      %611 = vmatprep.subr.bf16.mxu0 0
      %612 = vmatpush1.bf16.msra.mxu0 0
      %613 = vmatprep.subr.bf16.mxu0 0
      %614 = vmatpush1.bf16.msra.mxu0 0
      %615 = vmatprep.subr.bf16.mxu0 0
      %616 = vmatpush1.bf16.msra.mxu0 0
      %617 = vmatprep.subr.bf16.mxu0 0
      %618 = vmatpush1.bf16.msra.mxu0 %v602
      %619 = vmatprep.subr.bf16.mxu0 0
      %620 = vmatpush1.bf16.msra.mxu0 %v601
      %621 = vmatprep.subr.bf16.mxu0 0
      %622 = vmatpush2.bf16.msra.mxu0 0
      %623 = vmatprep.subr.bf16.mxu0 0
      %624 = vmatpush2.bf16.msra.mxu0 0
      %625 = vmatprep.subr.bf16.mxu0 0
      %626 = vmatpush2.bf16.msra.mxu0 0
      %627 = vmatprep.subr.bf16.mxu0 0
      %628 = vmatpush2.bf16.msra.mxu0 0
      %629 = vmatprep.subr.bf16.mxu0 0
      %630 = vmatpush2.bf16.msra.mxu0 0
      %631 = vmatprep.subr.bf16.mxu0 0
      %632 = vmatpush2.bf16.msra.mxu0 0
      %633 = vmatprep.subr.bf16.mxu0 0
      %634 = vmatpush2.bf16.msra.mxu0 0
      %635 = vmatprep.subr.bf16.mxu0 0
      %636 = vmatpush2.bf16.msra.mxu0 0
      %637 = vmatprep.mubr.bf16.mxu0 0
      %638 = vmatmul.mubr.bf16.gmra.mxu0 %v499
      %v639 = vpop.f32.mrf.mxu0
      %v640 = vadd.f32 %v476, %v639
      %v641 = vpop.f32.mrf.mxu0
      %v642 = vpop.f32.mrf.mxu0
      %v643 = vpop.f32.mrf.mxu0
      %644 = vdwg.mxu0
      %v649 = vunpack.c.l.b16 %v453
      %v650 = vunpack.c.l.b16 %v454
      %v651 = vunpack.c.l.b16 %v455
      %v652 = vunpack.c.l.b16 %v456
      %v653 = vpack.c.b16 %v650, %v649
      %v654 = vpack.c.b16 %v652, %v651
      %657 = vmatprep.subr.bf16.mxu0 0
      %658 = vmatpush1.bf16.msra.mxu0 0
      %659 = vmatprep.subr.bf16.mxu0 0
      %660 = vmatpush1.bf16.msra.mxu0 0
      %661 = vmatprep.subr.bf16.mxu0 0
      %662 = vmatpush1.bf16.msra.mxu0 0
      %663 = vmatprep.subr.bf16.mxu0 0
      %664 = vmatpush1.bf16.msra.mxu0 0
      %665 = vmatprep.subr.bf16.mxu0 0
      %666 = vmatpush1.bf16.msra.mxu0 0
      %667 = vmatprep.subr.bf16.mxu0 0
      %668 = vmatpush1.bf16.msra.mxu0 0
      %669 = vmatprep.subr.bf16.mxu0 0
      %670 = vmatpush1.bf16.msra.mxu0 %v654
      %671 = vmatprep.subr.bf16.mxu0 0
      %672 = vmatpush1.bf16.msra.mxu0 %v653
      %673 = vmatprep.subr.bf16.mxu0 0
      %674 = vmatpush2.bf16.msra.mxu0 0
      %675 = vmatprep.subr.bf16.mxu0 0
      %676 = vmatpush2.bf16.msra.mxu0 0
      %677 = vmatprep.subr.bf16.mxu0 0
      %678 = vmatpush2.bf16.msra.mxu0 0
      %679 = vmatprep.subr.bf16.mxu0 0
      %680 = vmatpush2.bf16.msra.mxu0 0
      %681 = vmatprep.subr.bf16.mxu0 0
      %682 = vmatpush2.bf16.msra.mxu0 0
      %683 = vmatprep.subr.bf16.mxu0 0
      %684 = vmatpush2.bf16.msra.mxu0 0
      %685 = vmatprep.subr.bf16.mxu0 0
      %686 = vmatpush2.bf16.msra.mxu0 0
      %687 = vmatprep.subr.bf16.mxu0 0
      %688 = vmatpush2.bf16.msra.mxu0 0
      %689 = vmatprep.mubr.bf16.mxu0 0
      %690 = vmatmul.mubr.bf16.gmra.mxu0 %v499
      %v691 = vpop.f32.mrf.mxu0
      %v692 = vadd.f32 %v480, %v691
      %v693 = vpop.f32.mrf.mxu0
      %v694 = vpop.f32.mrf.mxu0
      %v695 = vpop.f32.mrf.mxu0
      %696 = vdwg.mxu0
      %v697 = vpack.c.bf16 %v536, %v536
      %v698 = vpack.c.bf16 %v588, %v588
      %v699 = vpack.c.bf16 %v640, %v640
      %v700 = vpack.c.bf16 %v692, %v692
      %v701 = vld [vmem:[%s4] sm:$0xf]
      %v702 = vld [vmem:[%s4 + $0x4] sm:$0xf]
      %v703 = vld [vmem:[%s4 + $0x8] sm:$0xf]
      %v704 = vld [vmem:[%s4 + $0xc] sm:$0xf]
      %v705 = vld [vmem:[%s4 + $0x10] sm:$0xf]
      %v706 = vld [vmem:[%s4 + $0x14] sm:$0xf]
      %v707 = vld [vmem:[%s4 + $0x18] sm:$0xf]
      %v708 = vld [vmem:[%s4 + $0x1c] sm:$0xf]
      %v709 = vld [vmem:[%s4 + $0x20] sm:$0xf]
      %v710 = vld [vmem:[%s4 + $0x24] sm:$0xf]
      %v711 = vld [vmem:[%s4 + $0x28] sm:$0xf]
      %v712 = vld [vmem:[%s4 + $0x2c] sm:$0xf]
      %v713 = vld [vmem:[%s4 + $0x30] sm:$0xf]
      %v714 = vld [vmem:[%s4 + $0x34] sm:$0xf]
      %v715 = vld [vmem:[%s4 + $0x38] sm:$0xf]
      %v716 = vld [vmem:[%s4 + $0x3c] sm:$0xf]
      %v717 = vld [vmem:[%s7] sm:$0x1]
      %v718 = vld [vmem:[%s7 + $0x1] sm:$0x1]
      %v719 = vld [vmem:[%s7 + $0x2] sm:$0x1]
      %v720 = vld [vmem:[%s7 + $0x3] sm:$0x1]
      %v725 = vlaneseq
      %v726 = vshrl.u32 %v725, 7
      %v727 = vsub.s32 0, %v726
      %v728 = vrot.slane %v717, %v727
      %v729 = vlaneseq
      %v730 = vshrl.u32 %v729, 7
      %v731 = vsub.s32 0, %v730
      %v732 = vrot.slane %v718, %v731
      %v733 = vlaneseq
      %v734 = vshrl.u32 %v733, 7
      %v735 = vsub.s32 0, %v734
      %v736 = vrot.slane %v719, %v735
      %v737 = vlaneseq
      %v738 = vshrl.u32 %v737, 7
      %v739 = vsub.s32 0, %v738
      %v740 = vrot.slane %v720, %v739
      %v749 = vunpack.c.l.b16 %v701
      %v750 = vunpack.c.l.b16 %v702
      %v751 = vunpack.c.l.b16 %v703
      %v752 = vunpack.c.l.b16 %v704
      %v753 = vpack.c.b16 %v750, %v749
      %v754 = vpack.c.b16 %v752, %v751
      %757 = vmatprep.subr.bf16.mxu0 0
      %758 = vmatpush1.bf16.msra.mxu0 0
      %759 = vmatprep.subr.bf16.mxu0 0
      %760 = vmatpush1.bf16.msra.mxu0 0
      %761 = vmatprep.subr.bf16.mxu0 0
      %762 = vmatpush1.bf16.msra.mxu0 0
      %763 = vmatprep.subr.bf16.mxu0 0
      %764 = vmatpush1.bf16.msra.mxu0 0
      %765 = vmatprep.subr.bf16.mxu0 0
      %766 = vmatpush1.bf16.msra.mxu0 0
      %767 = vmatprep.subr.bf16.mxu0 0
      %768 = vmatpush1.bf16.msra.mxu0 0
      %769 = vmatprep.subr.bf16.mxu0 0
      %770 = vmatpush1.bf16.msra.mxu0 %v754
      %771 = vmatprep.subr.bf16.mxu0 0
      %772 = vmatpush1.bf16.msra.mxu0 %v753
      %773 = vmatprep.subr.bf16.mxu0 0
      %774 = vmatpush2.bf16.msra.mxu0 0
      %775 = vmatprep.subr.bf16.mxu0 0
      %776 = vmatpush2.bf16.msra.mxu0 0
      %777 = vmatprep.subr.bf16.mxu0 0
      %778 = vmatpush2.bf16.msra.mxu0 0
      %779 = vmatprep.subr.bf16.mxu0 0
      %780 = vmatpush2.bf16.msra.mxu0 0
      %781 = vmatprep.subr.bf16.mxu0 0
      %782 = vmatpush2.bf16.msra.mxu0 0
      %783 = vmatprep.subr.bf16.mxu0 0
      %784 = vmatpush2.bf16.msra.mxu0 0
      %785 = vmatprep.subr.bf16.mxu0 0
      %786 = vmatpush2.bf16.msra.mxu0 0
      %787 = vmatprep.subr.bf16.mxu0 0
      %788 = vmatpush2.bf16.msra.mxu0 0
      %789 = vmatprep.mubr.bf16.mxu0 0
      %790 = vmatmul.mubr.bf16.gmra.mxu0 %v499
      %v791 = vpop.f32.mrf.mxu0
      %v792 = vadd.f32 %v728, %v791
      %v793 = vpop.f32.mrf.mxu0
      %v794 = vpop.f32.mrf.mxu0
      %v795 = vpop.f32.mrf.mxu0
      %796 = vdwg.mxu0
      %v801 = vunpack.c.l.b16 %v705
      %v802 = vunpack.c.l.b16 %v706
      %v803 = vunpack.c.l.b16 %v707
      %v804 = vunpack.c.l.b16 %v708
      %v805 = vpack.c.b16 %v802, %v801
      %v806 = vpack.c.b16 %v804, %v803
      %809 = vmatprep.subr.bf16.mxu0 0
      %810 = vmatpush1.bf16.msra.mxu0 0
      %811 = vmatprep.subr.bf16.mxu0 0
      %812 = vmatpush1.bf16.msra.mxu0 0
      %813 = vmatprep.subr.bf16.mxu0 0
      %814 = vmatpush1.bf16.msra.mxu0 0
      %815 = vmatprep.subr.bf16.mxu0 0
      %816 = vmatpush1.bf16.msra.mxu0 0
      %817 = vmatprep.subr.bf16.mxu0 0
      %818 = vmatpush1.bf16.msra.mxu0 0
      %819 = vmatprep.subr.bf16.mxu0 0
      %820 = vmatpush1.bf16.msra.mxu0 0
      %821 = vmatprep.subr.bf16.mxu0 0
      %822 = vmatpush1.bf16.msra.mxu0 %v806
      %823 = vmatprep.subr.bf16.mxu0 0
      %824 = vmatpush1.bf16.msra.mxu0 %v805
      %825 = vmatprep.subr.bf16.mxu0 0
      %826 = vmatpush2.bf16.msra.mxu0 0
      %827 = vmatprep.subr.bf16.mxu0 0
      %828 = vmatpush2.bf16.msra.mxu0 0
      %829 = vmatprep.subr.bf16.mxu0 0
      %830 = vmatpush2.bf16.msra.mxu0 0
      %831 = vmatprep.subr.bf16.mxu0 0
      %832 = vmatpush2.bf16.msra.mxu0 0
      %833 = vmatprep.subr.bf16.mxu0 0
      %834 = vmatpush2.bf16.msra.mxu0 0
      %835 = vmatprep.subr.bf16.mxu0 0
      %836 = vmatpush2.bf16.msra.mxu0 0
      %837 = vmatprep.subr.bf16.mxu0 0
      %838 = vmatpush2.bf16.msra.mxu0 0
      %839 = vmatprep.subr.bf16.mxu0 0
      %840 = vmatpush2.bf16.msra.mxu0 0
      %841 = vmatprep.mubr.bf16.mxu0 0
      %842 = vmatmul.mubr.bf16.gmra.mxu0 %v499
      %v843 = vpop.f32.mrf.mxu0
      %v844 = vadd.f32 %v732, %v843
      %v845 = vpop.f32.mrf.mxu0
      %v846 = vpop.f32.mrf.mxu0
      %v847 = vpop.f32.mrf.mxu0
      %848 = vdwg.mxu0
      %v853 = vunpack.c.l.b16 %v709
      %v854 = vunpack.c.l.b16 %v710
      %v855 = vunpack.c.l.b16 %v711
      %v856 = vunpack.c.l.b16 %v712
      %v857 = vpack.c.b16 %v854, %v853
      %v858 = vpack.c.b16 %v856, %v855
      %861 = vmatprep.subr.bf16.mxu0 0
      %862 = vmatpush1.bf16.msra.mxu0 0
      %863 = vmatprep.subr.bf16.mxu0 0
      %864 = vmatpush1.bf16.msra.mxu0 0
      %865 = vmatprep.subr.bf16.mxu0 0
      %866 = vmatpush1.bf16.msra.mxu0 0
      %867 = vmatprep.subr.bf16.mxu0 0
      %868 = vmatpush1.bf16.msra.mxu0 0
      %869 = vmatprep.subr.bf16.mxu0 0
      %870 = vmatpush1.bf16.msra.mxu0 0
      %871 = vmatprep.subr.bf16.mxu0 0
      %872 = vmatpush1.bf16.msra.mxu0 0
      %873 = vmatprep.subr.bf16.mxu0 0
      %874 = vmatpush1.bf16.msra.mxu0 %v858
      %875 = vmatprep.subr.bf16.mxu0 0
      %876 = vmatpush1.bf16.msra.mxu0 %v857
      %877 = vmatprep.subr.bf16.mxu0 0
      %878 = vmatpush2.bf16.msra.mxu0 0
      %879 = vmatprep.subr.bf16.mxu0 0
      %880 = vmatpush2.bf16.msra.mxu0 0
      %881 = vmatprep.subr.bf16.mxu0 0
      %882 = vmatpush2.bf16.msra.mxu0 0
      %883 = vmatprep.subr.bf16.mxu0 0
      %884 = vmatpush2.bf16.msra.mxu0 0
      %885 = vmatprep.subr.bf16.mxu0 0
      %886 = vmatpush2.bf16.msra.mxu0 0
      %887 = vmatprep.subr.bf16.mxu0 0
      %888 = vmatpush2.bf16.msra.mxu0 0
      %889 = vmatprep.subr.bf16.mxu0 0
      %890 = vmatpush2.bf16.msra.mxu0 0
      %891 = vmatprep.subr.bf16.mxu0 0
      %892 = vmatpush2.bf16.msra.mxu0 0
      %893 = vmatprep.mubr.bf16.mxu0 0
      %894 = vmatmul.mubr.bf16.gmra.mxu0 %v499
      %v895 = vpop.f32.mrf.mxu0
      %v896 = vadd.f32 %v736, %v895
      %v897 = vpop.f32.mrf.mxu0
      %v898 = vpop.f32.mrf.mxu0
      %v899 = vpop.f32.mrf.mxu0
      %900 = vdwg.mxu0
      %v905 = vunpack.c.l.b16 %v713
      %v906 = vunpack.c.l.b16 %v714
      %v907 = vunpack.c.l.b16 %v715
      %v908 = vunpack.c.l.b16 %v716
      %v909 = vpack.c.b16 %v906, %v905
      %v910 = vpack.c.b16 %v908, %v907
      %913 = vmatprep.subr.bf16.mxu0 0
      %914 = vmatpush1.bf16.msra.mxu0 0
      %915 = vmatprep.subr.bf16.mxu0 0
      %916 = vmatpush1.bf16.msra.mxu0 0
      %917 = vmatprep.subr.bf16.mxu0 0
      %918 = vmatpush1.bf16.msra.mxu0 0
      %919 = vmatprep.subr.bf16.mxu0 0
      %920 = vmatpush1.bf16.msra.mxu0 0
      %921 = vmatprep.subr.bf16.mxu0 0
      %922 = vmatpush1.bf16.msra.mxu0 0
      %923 = vmatprep.subr.bf16.mxu0 0
      %924 = vmatpush1.bf16.msra.mxu0 0
      %925 = vmatprep.subr.bf16.mxu0 0
      %926 = vmatpush1.bf16.msra.mxu0 %v910
      %927 = vmatprep.subr.bf16.mxu0 0
      %928 = vmatpush1.bf16.msra.mxu0 %v909
      %929 = vmatprep.subr.bf16.mxu0 0
      %930 = vmatpush2.bf16.msra.mxu0 0
      %931 = vmatprep.subr.bf16.mxu0 0
      %932 = vmatpush2.bf16.msra.mxu0 0
      %933 = vmatprep.subr.bf16.mxu0 0
      %934 = vmatpush2.bf16.msra.mxu0 0
      %935 = vmatprep.subr.bf16.mxu0 0
      %936 = vmatpush2.bf16.msra.mxu0 0
      %937 = vmatprep.subr.bf16.mxu0 0
      %938 = vmatpush2.bf16.msra.mxu0 0
      %939 = vmatprep.subr.bf16.mxu0 0
      %940 = vmatpush2.bf16.msra.mxu0 0
      %941 = vmatprep.subr.bf16.mxu0 0
      %942 = vmatpush2.bf16.msra.mxu0 0
      %943 = vmatprep.subr.bf16.mxu0 0
      %944 = vmatpush2.bf16.msra.mxu0 0
      %945 = vmatprep.mubr.bf16.mxu0 0
      %946 = vmatmul.mubr.bf16.gmra.mxu0 %v499
      %v947 = vpop.f32.mrf.mxu0
      %v948 = vadd.f32 %v740, %v947
      %v949 = vpop.f32.mrf.mxu0
      %v950 = vpop.f32.mrf.mxu0
      %v951 = vpop.f32.mrf.mxu0
      %952 = vdwg.mxu0
      %v953 = vpack.c.bf16 %v792, %v792
      %v954 = vpack.c.bf16 %v844, %v844
      %v955 = vpack.c.bf16 %v896, %v896
      %v956 = vpack.c.bf16 %v948, %v948
      %v957 = vld [vmem:[%s5] sm:$0xf]
      %v958 = vld [vmem:[%s5 + $0x4] sm:$0xf]
      %v959 = vld [vmem:[%s5 + $0x8] sm:$0xf]
      %v960 = vld [vmem:[%s5 + $0xc] sm:$0xf]
      %v961 = vld [vmem:[%s5 + $0x10] sm:$0xf]
      %v962 = vld [vmem:[%s5 + $0x14] sm:$0xf]
      %v963 = vld [vmem:[%s5 + $0x18] sm:$0xf]
      %v964 = vld [vmem:[%s5 + $0x1c] sm:$0xf]
      %v965 = vld [vmem:[%s5 + $0x20] sm:$0xf]
      %v966 = vld [vmem:[%s5 + $0x24] sm:$0xf]
      %v967 = vld [vmem:[%s5 + $0x28] sm:$0xf]
      %v968 = vld [vmem:[%s5 + $0x2c] sm:$0xf]
      %v969 = vld [vmem:[%s5 + $0x30] sm:$0xf]
      %v970 = vld [vmem:[%s5 + $0x34] sm:$0xf]
      %v971 = vld [vmem:[%s5 + $0x38] sm:$0xf]
      %v972 = vld [vmem:[%s5 + $0x3c] sm:$0xf]
      %v973 = vld [vmem:[%s8] sm:$0x1]
      %v974 = vld [vmem:[%s8 + $0x1] sm:$0x1]
      %v975 = vld [vmem:[%s8 + $0x2] sm:$0x1]
      %v976 = vld [vmem:[%s8 + $0x3] sm:$0x1]
      %v981 = vlaneseq
      %v982 = vshrl.u32 %v981, 7
      %v983 = vsub.s32 0, %v982
      %v984 = vrot.slane %v973, %v983
      %v985 = vlaneseq
      %v986 = vshrl.u32 %v985, 7
      %v987 = vsub.s32 0, %v986
      %v988 = vrot.slane %v974, %v987
      %v989 = vlaneseq
      %v990 = vshrl.u32 %v989, 7
      %v991 = vsub.s32 0, %v990
      %v992 = vrot.slane %v975, %v991
      %v993 = vlaneseq
      %v994 = vshrl.u32 %v993, 7
      %v995 = vsub.s32 0, %v994
      %v996 = vrot.slane %v976, %v995
      %v1005 = vunpack.c.l.b16 %v957
      %v1006 = vunpack.c.l.b16 %v958
      %v1007 = vunpack.c.l.b16 %v959
      %v1008 = vunpack.c.l.b16 %v960
      %v1009 = vpack.c.b16 %v1006, %v1005
      %v1010 = vpack.c.b16 %v1008, %v1007
      %1013 = vmatprep.subr.bf16.mxu0 0
      %1014 = vmatpush1.bf16.msra.mxu0 0
      %1015 = vmatprep.subr.bf16.mxu0 0
      %1016 = vmatpush1.bf16.msra.mxu0 0
      %1017 = vmatprep.subr.bf16.mxu0 0
      %1018 = vmatpush1.bf16.msra.mxu0 0
      %1019 = vmatprep.subr.bf16.mxu0 0
      %1020 = vmatpush1.bf16.msra.mxu0 0
      %1021 = vmatprep.subr.bf16.mxu0 0
      %1022 = vmatpush1.bf16.msra.mxu0 0
      %1023 = vmatprep.subr.bf16.mxu0 0
      %1024 = vmatpush1.bf16.msra.mxu0 0
      %1025 = vmatprep.subr.bf16.mxu0 0
      %1026 = vmatpush1.bf16.msra.mxu0 %v1010
      %1027 = vmatprep.subr.bf16.mxu0 0
      %1028 = vmatpush1.bf16.msra.mxu0 %v1009
      %1029 = vmatprep.subr.bf16.mxu0 0
      %1030 = vmatpush2.bf16.msra.mxu0 0
      %1031 = vmatprep.subr.bf16.mxu0 0
      %1032 = vmatpush2.bf16.msra.mxu0 0
      %1033 = vmatprep.subr.bf16.mxu0 0
      %1034 = vmatpush2.bf16.msra.mxu0 0
      %1035 = vmatprep.subr.bf16.mxu0 0
      %1036 = vmatpush2.bf16.msra.mxu0 0
      %1037 = vmatprep.subr.bf16.mxu0 0
      %1038 = vmatpush2.bf16.msra.mxu0 0
      %1039 = vmatprep.subr.bf16.mxu0 0
      %1040 = vmatpush2.bf16.msra.mxu0 0
      %1041 = vmatprep.subr.bf16.mxu0 0
      %1042 = vmatpush2.bf16.msra.mxu0 0
      %1043 = vmatprep.subr.bf16.mxu0 0
      %1044 = vmatpush2.bf16.msra.mxu0 0
      %1045 = vmatprep.mubr.bf16.mxu0 0
      %1046 = vmatmul.mubr.bf16.gmra.mxu0 %v499
      %v1047 = vpop.f32.mrf.mxu0
      %v1048 = vadd.f32 %v984, %v1047
      %v1049 = vpop.f32.mrf.mxu0
      %v1050 = vpop.f32.mrf.mxu0
      %v1051 = vpop.f32.mrf.mxu0
      %1052 = vdwg.mxu0
      %v1057 = vunpack.c.l.b16 %v961
      %v1058 = vunpack.c.l.b16 %v962
      %v1059 = vunpack.c.l.b16 %v963
      %v1060 = vunpack.c.l.b16 %v964
      %v1061 = vpack.c.b16 %v1058, %v1057
      %v1062 = vpack.c.b16 %v1060, %v1059
      %1065 = vmatprep.subr.bf16.mxu0 0
      %1066 = vmatpush1.bf16.msra.mxu0 0
      %1067 = vmatprep.subr.bf16.mxu0 0
      %1068 = vmatpush1.bf16.msra.mxu0 0
      %1069 = vmatprep.subr.bf16.mxu0 0
      %1070 = vmatpush1.bf16.msra.mxu0 0
      %1071 = vmatprep.subr.bf16.mxu0 0
      %1072 = vmatpush1.bf16.msra.mxu0 0
      %1073 = vmatprep.subr.bf16.mxu0 0
      %1074 = vmatpush1.bf16.msra.mxu0 0
      %1075 = vmatprep.subr.bf16.mxu0 0
      %1076 = vmatpush1.bf16.msra.mxu0 0
      %1077 = vmatprep.subr.bf16.mxu0 0
      %1078 = vmatpush1.bf16.msra.mxu0 %v1062
      %1079 = vmatprep.subr.bf16.mxu0 0
      %1080 = vmatpush1.bf16.msra.mxu0 %v1061
      %1081 = vmatprep.subr.bf16.mxu0 0
      %1082 = vmatpush2.bf16.msra.mxu0 0
      %1083 = vmatprep.subr.bf16.mxu0 0
      %1084 = vmatpush2.bf16.msra.mxu0 0
      %1085 = vmatprep.subr.bf16.mxu0 0
      %1086 = vmatpush2.bf16.msra.mxu0 0
      %1087 = vmatprep.subr.bf16.mxu0 0
      %1088 = vmatpush2.bf16.msra.mxu0 0
      %1089 = vmatprep.subr.bf16.mxu0 0
      %1090 = vmatpush2.bf16.msra.mxu0 0
      %1091 = vmatprep.subr.bf16.mxu0 0
      %1092 = vmatpush2.bf16.msra.mxu0 0
      %1093 = vmatprep.subr.bf16.mxu0 0
      %1094 = vmatpush2.bf16.msra.mxu0 0
      %1095 = vmatprep.subr.bf16.mxu0 0
      %1096 = vmatpush2.bf16.msra.mxu0 0
      %1097 = vmatprep.mubr.bf16.mxu0 0
      %1098 = vmatmul.mubr.bf16.gmra.mxu0 %v499
      %v1099 = vpop.f32.mrf.mxu0
      %v1100 = vadd.f32 %v988, %v1099
      %v1101 = vpop.f32.mrf.mxu0
      %v1102 = vpop.f32.mrf.mxu0
      %v1103 = vpop.f32.mrf.mxu0
      %1104 = vdwg.mxu0
      %v1109 = vunpack.c.l.b16 %v965
      %v1110 = vunpack.c.l.b16 %v966
      %v1111 = vunpack.c.l.b16 %v967
      %v1112 = vunpack.c.l.b16 %v968
      %v1113 = vpack.c.b16 %v1110, %v1109
      %v1114 = vpack.c.b16 %v1112, %v1111
      %1117 = vmatprep.subr.bf16.mxu0 0
      %1118 = vmatpush1.bf16.msra.mxu0 0
      %1119 = vmatprep.subr.bf16.mxu0 0
      %1120 = vmatpush1.bf16.msra.mxu0 0
      %1121 = vmatprep.subr.bf16.mxu0 0
      %1122 = vmatpush1.bf16.msra.mxu0 0
      %1123 = vmatprep.subr.bf16.mxu0 0
      %1124 = vmatpush1.bf16.msra.mxu0 0
      %1125 = vmatprep.subr.bf16.mxu0 0
      %1126 = vmatpush1.bf16.msra.mxu0 0
      %1127 = vmatprep.subr.bf16.mxu0 0
      %1128 = vmatpush1.bf16.msra.mxu0 0
      %1129 = vmatprep.subr.bf16.mxu0 0
      %1130 = vmatpush1.bf16.msra.mxu0 %v1114
      %1131 = vmatprep.subr.bf16.mxu0 0
      %1132 = vmatpush1.bf16.msra.mxu0 %v1113
      %1133 = vmatprep.subr.bf16.mxu0 0
      %1134 = vmatpush2.bf16.msra.mxu0 0
      %1135 = vmatprep.subr.bf16.mxu0 0
      %1136 = vmatpush2.bf16.msra.mxu0 0
      %1137 = vmatprep.subr.bf16.mxu0 0
      %1138 = vmatpush2.bf16.msra.mxu0 0
      %1139 = vmatprep.subr.bf16.mxu0 0
      %1140 = vmatpush2.bf16.msra.mxu0 0
      %1141 = vmatprep.subr.bf16.mxu0 0
      %1142 = vmatpush2.bf16.msra.mxu0 0
      %1143 = vmatprep.subr.bf16.mxu0 0
      %1144 = vmatpush2.bf16.msra.mxu0 0
      %1145 = vmatprep.subr.bf16.mxu0 0
      %1146 = vmatpush2.bf16.msra.mxu0 0
      %1147 = vmatprep.subr.bf16.mxu0 0
      %1148 = vmatpush2.bf16.msra.mxu0 0
      %1149 = vmatprep.mubr.bf16.mxu0 0
      %1150 = vmatmul.mubr.bf16.gmra.mxu0 %v499
      %v1151 = vpop.f32.mrf.mxu0
      %v1152 = vadd.f32 %v992, %v1151
      %v1153 = vpop.f32.mrf.mxu0
      %v1154 = vpop.f32.mrf.mxu0
      %v1155 = vpop.f32.mrf.mxu0
      %1156 = vdwg.mxu0
      %v1161 = vunpack.c.l.b16 %v969
      %v1162 = vunpack.c.l.b16 %v970
      %v1163 = vunpack.c.l.b16 %v971
      %v1164 = vunpack.c.l.b16 %v972
      %v1165 = vpack.c.b16 %v1162, %v1161
      %v1166 = vpack.c.b16 %v1164, %v1163
      %1169 = vmatprep.subr.bf16.mxu0 0
      %1170 = vmatpush1.bf16.msra.mxu0 0
      %1171 = vmatprep.subr.bf16.mxu0 0
      %1172 = vmatpush1.bf16.msra.mxu0 0
      %1173 = vmatprep.subr.bf16.mxu0 0
      %1174 = vmatpush1.bf16.msra.mxu0 0
      %1175 = vmatprep.subr.bf16.mxu0 0
      %1176 = vmatpush1.bf16.msra.mxu0 0
      %1177 = vmatprep.subr.bf16.mxu0 0
      %1178 = vmatpush1.bf16.msra.mxu0 0
      %1179 = vmatprep.subr.bf16.mxu0 0
      %1180 = vmatpush1.bf16.msra.mxu0 0
      %1181 = vmatprep.subr.bf16.mxu0 0
      %1182 = vmatpush1.bf16.msra.mxu0 %v1166
      %1183 = vmatprep.subr.bf16.mxu0 0
      %1184 = vmatpush1.bf16.msra.mxu0 %v1165
      %1185 = vmatprep.subr.bf16.mxu0 0
      %1186 = vmatpush2.bf16.msra.mxu0 0
      %1187 = vmatprep.subr.bf16.mxu0 0
      %1188 = vmatpush2.bf16.msra.mxu0 0
      %1189 = vmatprep.subr.bf16.mxu0 0
      %1190 = vmatpush2.bf16.msra.mxu0 0
      %1191 = vmatprep.subr.bf16.mxu0 0
      %1192 = vmatpush2.bf16.msra.mxu0 0
      %1193 = vmatprep.subr.bf16.mxu0 0
      %1194 = vmatpush2.bf16.msra.mxu0 0
      %1195 = vmatprep.subr.bf16.mxu0 0
      %1196 = vmatpush2.bf16.msra.mxu0 0
      %1197 = vmatprep.subr.bf16.mxu0 0
      %1198 = vmatpush2.bf16.msra.mxu0 0
      %1199 = vmatprep.subr.bf16.mxu0 0
      %1200 = vmatpush2.bf16.msra.mxu0 0
      %1201 = vmatprep.mubr.bf16.mxu0 0
      %1202 = vmatmul.mubr.bf16.gmra.mxu0 %v499
      %v1203 = vpop.f32.mrf.mxu0
      %v1204 = vadd.f32 %v996, %v1203
      %v1205 = vpop.f32.mrf.mxu0
      %v1206 = vpop.f32.mrf.mxu0
      %v1207 = vpop.f32.mrf.mxu0
      %1208 = vdwg.mxu0
      %v1209 = vpack.c.bf16 %v1048, %v1048
      %v1210 = vpack.c.bf16 %v1100, %v1100
      %v1211 = vpack.c.bf16 %v1152, %v1152
      %v1212 = vpack.c.bf16 %v1204, %v1204
      %vm1213 = vcmask 64512
      %v1215 = vsel %vm1213, %v697, 0
      %v1218 = vsel %vm1213, %v953, 0
      %1220 = vmatprep.subr.bf16.mxu0 0
      %1221 = vmatpush1.bf16.xpose.msra.mxu0 0
      %1222 = vmatprep.subr.bf16.mxu0 0
      %1223 = vmatpush1.bf16.xpose.msra.mxu0 0
      %1224 = vmatprep.subr.bf16.mxu0 0
      %1225 = vmatpush1.bf16.xpose.msra.mxu0 0
      %1226 = vmatprep.subr.bf16.mxu0 0
      %1227 = vmatpush1.bf16.xpose.msra.mxu0 0
      %1228 = vmatprep.subr.bf16.mxu0 0
      %1229 = vmatpush1.bf16.xpose.msra.mxu0 0
      %1230 = vmatprep.subr.bf16.mxu0 0
      %1231 = vmatpush1.bf16.xpose.msra.mxu0 0
      %1232 = vmatprep.subr.bf16.mxu0 0
      %1233 = vmatpush1.bf16.xpose.msra.mxu0 0
      %1234 = vmatprep.subr.bf16.mxu0 0
      %1235 = vmatpush1.bf16.xpose.msra.mxu0 %v1218
      %1236 = vmatprep.subr.bf16.mxu0 0
      %1237 = vmatpush2.bf16.xpose.msra.mxu0 0
      %1238 = vmatprep.subr.bf16.mxu0 0
      %1239 = vmatpush2.bf16.xpose.msra.mxu0 0
      %1240 = vmatprep.subr.bf16.mxu0 0
      %1241 = vmatpush2.bf16.xpose.msra.mxu0 0
      %1242 = vmatprep.subr.bf16.mxu0 0
      %1243 = vmatpush2.bf16.xpose.msra.mxu0 0
      %1244 = vmatprep.subr.bf16.mxu0 0
      %1245 = vmatpush2.bf16.xpose.msra.mxu0 0
      %1246 = vmatprep.subr.bf16.mxu0 0
      %1247 = vmatpush2.bf16.xpose.msra.mxu0 0
      %1248 = vmatprep.subr.bf16.mxu0 0
      %1249 = vmatpush2.bf16.xpose.msra.mxu0 0
      %1250 = vmatprep.subr.bf16.mxu0 0
      %1251 = vmatpush2.bf16.xpose.msra.mxu0 0
      %1252 = vmatprep.mubr.bf16.mxu0 0
      %1253 = vmatmul.mubr.bf16.gmra.mxu0 %v1215
      %v1254 = vpop.f32.mrf.mxu0
      %v1255 = vadd.f32 0.0, %v1254
      %v1256 = vpop.f32.mrf.mxu0
      %v1257 = vpop.f32.mrf.mxu0
      %v1258 = vpop.f32.mrf.mxu0
      %1259 = vdwg.mxu0
      %v1261 = vsel %vm1213, %v698, 0
      %v1264 = vsel %vm1213, %v954, 0
      %1266 = vmatprep.subr.bf16.mxu0 0
      %1267 = vmatpush1.bf16.xpose.msra.mxu0 0
      %1268 = vmatprep.subr.bf16.mxu0 0
      %1269 = vmatpush1.bf16.xpose.msra.mxu0 0
      %1270 = vmatprep.subr.bf16.mxu0 0
      %1271 = vmatpush1.bf16.xpose.msra.mxu0 0
      %1272 = vmatprep.subr.bf16.mxu0 0
      %1273 = vmatpush1.bf16.xpose.msra.mxu0 0
      %1274 = vmatprep.subr.bf16.mxu0 0
      %1275 = vmatpush1.bf16.xpose.msra.mxu0 0
      %1276 = vmatprep.subr.bf16.mxu0 0
      %1277 = vmatpush1.bf16.xpose.msra.mxu0 0
      %1278 = vmatprep.subr.bf16.mxu0 0
      %1279 = vmatpush1.bf16.xpose.msra.mxu0 0
      %1280 = vmatprep.subr.bf16.mxu0 0
      %1281 = vmatpush1.bf16.xpose.msra.mxu0 %v1264
      %1282 = vmatprep.subr.bf16.mxu0 0
      %1283 = vmatpush2.bf16.xpose.msra.mxu0 0
      %1284 = vmatprep.subr.bf16.mxu0 0
      %1285 = vmatpush2.bf16.xpose.msra.mxu0 0
      %1286 = vmatprep.subr.bf16.mxu0 0
      %1287 = vmatpush2.bf16.xpose.msra.mxu0 0
      %1288 = vmatprep.subr.bf16.mxu0 0
      %1289 = vmatpush2.bf16.xpose.msra.mxu0 0
      %1290 = vmatprep.subr.bf16.mxu0 0
      %1291 = vmatpush2.bf16.xpose.msra.mxu0 0
      %1292 = vmatprep.subr.bf16.mxu0 0
      %1293 = vmatpush2.bf16.xpose.msra.mxu0 0
      %1294 = vmatprep.subr.bf16.mxu0 0
      %1295 = vmatpush2.bf16.xpose.msra.mxu0 0
      %1296 = vmatprep.subr.bf16.mxu0 0
      %1297 = vmatpush2.bf16.xpose.msra.mxu0 0
      %1298 = vmatprep.mubr.bf16.mxu0 0
      %1299 = vmatmul.mubr.bf16.gmra.mxu0 %v1261
      %v1300 = vpop.f32.mrf.mxu0
      %v1301 = vadd.f32 0.0, %v1300
      %v1302 = vpop.f32.mrf.mxu0
      %v1303 = vpop.f32.mrf.mxu0
      %v1304 = vpop.f32.mrf.mxu0
      %1305 = vdwg.mxu0
      %v1307 = vsel %vm1213, %v699, 0
      %v1310 = vsel %vm1213, %v955, 0
      %1312 = vmatprep.subr.bf16.mxu0 0
      %1313 = vmatpush1.bf16.xpose.msra.mxu0 0
      %1314 = vmatprep.subr.bf16.mxu0 0
      %1315 = vmatpush1.bf16.xpose.msra.mxu0 0
      %1316 = vmatprep.subr.bf16.mxu0 0
      %1317 = vmatpush1.bf16.xpose.msra.mxu0 0
      %1318 = vmatprep.subr.bf16.mxu0 0
      %1319 = vmatpush1.bf16.xpose.msra.mxu0 0
      %1320 = vmatprep.subr.bf16.mxu0 0
      %1321 = vmatpush1.bf16.xpose.msra.mxu0 0
      %1322 = vmatprep.subr.bf16.mxu0 0
      %1323 = vmatpush1.bf16.xpose.msra.mxu0 0
      %1324 = vmatprep.subr.bf16.mxu0 0
      %1325 = vmatpush1.bf16.xpose.msra.mxu0 0
      %1326 = vmatprep.subr.bf16.mxu0 0
      %1327 = vmatpush1.bf16.xpose.msra.mxu0 %v1310
      %1328 = vmatprep.subr.bf16.mxu0 0
      %1329 = vmatpush2.bf16.xpose.msra.mxu0 0
      %1330 = vmatprep.subr.bf16.mxu0 0
      %1331 = vmatpush2.bf16.xpose.msra.mxu0 0
      %1332 = vmatprep.subr.bf16.mxu0 0
      %1333 = vmatpush2.bf16.xpose.msra.mxu0 0
      %1334 = vmatprep.subr.bf16.mxu0 0
      %1335 = vmatpush2.bf16.xpose.msra.mxu0 0
      %1336 = vmatprep.subr.bf16.mxu0 0
      %1337 = vmatpush2.bf16.xpose.msra.mxu0 0
      %1338 = vmatprep.subr.bf16.mxu0 0
      %1339 = vmatpush2.bf16.xpose.msra.mxu0 0
      %1340 = vmatprep.subr.bf16.mxu0 0
      %1341 = vmatpush2.bf16.xpose.msra.mxu0 0
      %1342 = vmatprep.subr.bf16.mxu0 0
      %1343 = vmatpush2.bf16.xpose.msra.mxu0 0
      %1344 = vmatprep.mubr.bf16.mxu0 0
      %1345 = vmatmul.mubr.bf16.gmra.mxu0 %v1307
      %v1346 = vpop.f32.mrf.mxu0
      %v1347 = vadd.f32 0.0, %v1346
      %v1348 = vpop.f32.mrf.mxu0
      %v1349 = vpop.f32.mrf.mxu0
      %v1350 = vpop.f32.mrf.mxu0
      %1351 = vdwg.mxu0
      %v1353 = vsel %vm1213, %v700, 0
      %v1356 = vsel %vm1213, %v956, 0
      %1358 = vmatprep.subr.bf16.mxu0 0
      %1359 = vmatpush1.bf16.xpose.msra.mxu0 0
      %1360 = vmatprep.subr.bf16.mxu0 0
      %1361 = vmatpush1.bf16.xpose.msra.mxu0 0
      %1362 = vmatprep.subr.bf16.mxu0 0
      %1363 = vmatpush1.bf16.xpose.msra.mxu0 0
      %1364 = vmatprep.subr.bf16.mxu0 0
      %1365 = vmatpush1.bf16.xpose.msra.mxu0 0
      %1366 = vmatprep.subr.bf16.mxu0 0
      %1367 = vmatpush1.bf16.xpose.msra.mxu0 0
      %1368 = vmatprep.subr.bf16.mxu0 0
      %1369 = vmatpush1.bf16.xpose.msra.mxu0 0
      %1370 = vmatprep.subr.bf16.mxu0 0
      %1371 = vmatpush1.bf16.xpose.msra.mxu0 0
      %1372 = vmatprep.subr.bf16.mxu0 0
      %1373 = vmatpush1.bf16.xpose.msra.mxu0 %v1356
      %1374 = vmatprep.subr.bf16.mxu0 0
      %1375 = vmatpush2.bf16.xpose.msra.mxu0 0
      %1376 = vmatprep.subr.bf16.mxu0 0
      %1377 = vmatpush2.bf16.xpose.msra.mxu0 0
      %1378 = vmatprep.subr.bf16.mxu0 0
      %1379 = vmatpush2.bf16.xpose.msra.mxu0 0
      %1380 = vmatprep.subr.bf16.mxu0 0
      %1381 = vmatpush2.bf16.xpose.msra.mxu0 0
      %1382 = vmatprep.subr.bf16.mxu0 0
      %1383 = vmatpush2.bf16.xpose.msra.mxu0 0
      %1384 = vmatprep.subr.bf16.mxu0 0
      %1385 = vmatpush2.bf16.xpose.msra.mxu0 0
      %1386 = vmatprep.subr.bf16.mxu0 0
      %1387 = vmatpush2.bf16.xpose.msra.mxu0 0
      %1388 = vmatprep.subr.bf16.mxu0 0
      %1389 = vmatpush2.bf16.xpose.msra.mxu0 0
      %1390 = vmatprep.mubr.bf16.mxu0 0
      %1391 = vmatmul.mubr.bf16.gmra.mxu0 %v1353
      %v1392 = vpop.f32.mrf.mxu0
      %v1393 = vadd.f32 0.0, %v1392
      %v1394 = vpop.f32.mrf.mxu0
      %v1395 = vpop.f32.mrf.mxu0
      %v1396 = vpop.f32.mrf.mxu0
      %1397 = vdwg.mxu0
      %v1398 = vmul.f32 %v1255, 0.35355338
      %v1399 = vmul.f32 %v1301, 0.35355338
      %v1400 = vmul.f32 %v1347, 0.35355338
      %v1401 = vmul.f32 %v1393, 0.35355338
      %v1402 = vld [vmem:[%s2] sm:$0xff]
      %v1403 = vadd.f32 %v1398, %v1402
      %v1404 = vadd.f32 %v1399, %v1402
      %v1405 = vadd.f32 %v1400, %v1402
      %v1406 = vadd.f32 %v1401, %v1402
      %v1407 = vsel %vm1213, %v1403, -inf
      %1408 = vmax.xlane.f32.xlu0 %v1407
      %v1409 = vpop.xlane.xlu0 %1408
      %v1410 = vsel %vm1213, %v1404, -inf
      %1411 = vmax.xlane.f32.xlu0 %v1410
      %v1412 = vpop.xlane.xlu0 %1411
      %v1413 = vsel %vm1213, %v1405, -inf
      %1414 = vmax.xlane.f32.xlu0 %v1413
      %v1415 = vpop.xlane.xlu0 %1414
      %v1416 = vsel %vm1213, %v1406, -inf
      %1417 = vmax.xlane.f32.xlu0 %v1416
      %v1418 = vpop.xlane.xlu0 %1417
      %v1419 = vsub.f32 %v1403, %v1409
      %v1420 = vsub.f32 %v1404, %v1412
      %v1421 = vsub.f32 %v1405, %v1415
      %v1422 = vsub.f32 %v1406, %v1418
      %v1423 = vmul.f32 %v1419, 1.442695
      %v1424 = vpow.pop %v1423
      %v1425 = vmul.f32 %v1420, 1.442695
      %v1426 = vpow.pop %v1425
      %v1427 = vmul.f32 %v1421, 1.442695
      %v1428 = vpow.pop %v1427
      %v1429 = vmul.f32 %v1422, 1.442695
      %v1430 = vpow.pop %v1429
      %v1431 = vsel %vm1213, %v1424, 0.0
      %1432 = vadd.xlane.f32.xlu0 %v1431
      %v1433 = vpop.xlane.xlu0 %1432
      %v1434 = vsel %vm1213, %v1426, 0.0
      %1435 = vadd.xlane.f32.xlu0 %v1434
      %v1436 = vpop.xlane.xlu0 %1435
      %v1437 = vsel %vm1213, %v1428, 0.0
      %1438 = vadd.xlane.f32.xlu0 %v1437
      %v1439 = vpop.xlane.xlu0 %1438
      %v1440 = vsel %vm1213, %v1430, 0.0
      %1441 = vadd.xlane.f32.xlu0 %v1440
      %v1442 = vpop.xlane.xlu0 %1441
      %v1443 = vrcp.pop %v1433
      %v1444 = vrcp.pop %v1436
      %v1445 = vrcp.pop %v1439
      %v1446 = vrcp.pop %v1442
      %v1447 = vmul.f32 %v1424, %v1443
      %v1448 = vmul.f32 %v1426, %v1444
      %v1449 = vmul.f32 %v1428, %v1445
      %v1450 = vmul.f32 %v1430, %v1446
      %v1451 = vpack.c.bf16 %v1447, %v1447
      %v1452 = vpack.c.bf16 %v1448, %v1448
      %v1453 = vpack.c.bf16 %v1449, %v1449
      %v1454 = vpack.c.bf16 %v1450, %v1450
      %v1456 = vsel %vm1213, %v1451, 0
      %vm1458 = vcmask 1043456
      %v1460 = vsel %vm1458, %v1209, 0
      %1462 = vmatprep.subr.bf16.mxu0 0
      %1463 = vmatpush1.bf16.msra.mxu0 0
      %1464 = vmatprep.subr.bf16.mxu0 0
      %1465 = vmatpush1.bf16.msra.mxu0 0
      %1466 = vmatprep.subr.bf16.mxu0 0
      %1467 = vmatpush1.bf16.msra.mxu0 0
      %1468 = vmatprep.subr.bf16.mxu0 0
      %1469 = vmatpush1.bf16.msra.mxu0 0
      %1470 = vmatprep.subr.bf16.mxu0 0
      %1471 = vmatpush1.bf16.msra.mxu0 0
      %1472 = vmatprep.subr.bf16.mxu0 0
      %1473 = vmatpush1.bf16.msra.mxu0 0
      %1474 = vmatprep.subr.bf16.mxu0 0
      %1475 = vmatpush1.bf16.msra.mxu0 0
      %1476 = vmatprep.subr.bf16.mxu0 0
      %1477 = vmatpush1.bf16.msra.mxu0 %v1460
      %1478 = vmatprep.subr.bf16.mxu0 0
      %1479 = vmatpush2.bf16.msra.mxu0 0
      %1480 = vmatprep.subr.bf16.mxu0 0
      %1481 = vmatpush2.bf16.msra.mxu0 0
      %1482 = vmatprep.subr.bf16.mxu0 0
      %1483 = vmatpush2.bf16.msra.mxu0 0
      %1484 = vmatprep.subr.bf16.mxu0 0
      %1485 = vmatpush2.bf16.msra.mxu0 0
      %1486 = vmatprep.subr.bf16.mxu0 0
      %1487 = vmatpush2.bf16.msra.mxu0 0
      %1488 = vmatprep.subr.bf16.mxu0 0
      %1489 = vmatpush2.bf16.msra.mxu0 0
      %1490 = vmatprep.subr.bf16.mxu0 0
      %1491 = vmatpush2.bf16.msra.mxu0 0
      %1492 = vmatprep.subr.bf16.mxu0 0
      %1493 = vmatpush2.bf16.msra.mxu0 0
      %1494 = vmatprep.mubr.bf16.mxu0 0
      %1495 = vmatmul.mubr.bf16.gmra.mxu0 %v1456
      %v1496 = vpop.f32.mrf.mxu0
      %v1497 = vadd.f32 0.0, %v1496
      %v1498 = vpop.f32.mrf.mxu0
      %v1499 = vpop.f32.mrf.mxu0
      %v1500 = vpop.f32.mrf.mxu0
      %1501 = vdwg.mxu0
      %v1503 = vsel %vm1213, %v1452, 0
      %v1506 = vsel %vm1458, %v1210, 0
      %1508 = vmatprep.subr.bf16.mxu0 0
      %1509 = vmatpush1.bf16.msra.mxu0 0
      %1510 = vmatprep.subr.bf16.mxu0 0
      %1511 = vmatpush1.bf16.msra.mxu0 0
      %1512 = vmatprep.subr.bf16.mxu0 0
      %1513 = vmatpush1.bf16.msra.mxu0 0
      %1514 = vmatprep.subr.bf16.mxu0 0
      %1515 = vmatpush1.bf16.msra.mxu0 0
      %1516 = vmatprep.subr.bf16.mxu0 0
      %1517 = vmatpush1.bf16.msra.mxu0 0
      %1518 = vmatprep.subr.bf16.mxu0 0
      %1519 = vmatpush1.bf16.msra.mxu0 0
      %1520 = vmatprep.subr.bf16.mxu0 0
      %1521 = vmatpush1.bf16.msra.mxu0 0
      %1522 = vmatprep.subr.bf16.mxu0 0
      %1523 = vmatpush1.bf16.msra.mxu0 %v1506
      %1524 = vmatprep.subr.bf16.mxu0 0
      %1525 = vmatpush2.bf16.msra.mxu0 0
      %1526 = vmatprep.subr.bf16.mxu0 0
      %1527 = vmatpush2.bf16.msra.mxu0 0
      %1528 = vmatprep.subr.bf16.mxu0 0
      %1529 = vmatpush2.bf16.msra.mxu0 0
      %1530 = vmatprep.subr.bf16.mxu0 0
      %1531 = vmatpush2.bf16.msra.mxu0 0
      %1532 = vmatprep.subr.bf16.mxu0 0
      %1533 = vmatpush2.bf16.msra.mxu0 0
      %1534 = vmatprep.subr.bf16.mxu0 0
      %1535 = vmatpush2.bf16.msra.mxu0 0
      %1536 = vmatprep.subr.bf16.mxu0 0
      %1537 = vmatpush2.bf16.msra.mxu0 0
      %1538 = vmatprep.subr.bf16.mxu0 0
      %1539 = vmatpush2.bf16.msra.mxu0 0
      %1540 = vmatprep.mubr.bf16.mxu0 0
      %1541 = vmatmul.mubr.bf16.gmra.mxu0 %v1503
      %v1542 = vpop.f32.mrf.mxu0
      %v1543 = vadd.f32 0.0, %v1542
      %v1544 = vpop.f32.mrf.mxu0
      %v1545 = vpop.f32.mrf.mxu0
      %v1546 = vpop.f32.mrf.mxu0
      %1547 = vdwg.mxu0
      %v1549 = vsel %vm1213, %v1453, 0
      %v1552 = vsel %vm1458, %v1211, 0
      %1554 = vmatprep.subr.bf16.mxu0 0
      %1555 = vmatpush1.bf16.msra.mxu0 0
      %1556 = vmatprep.subr.bf16.mxu0 0
      %1557 = vmatpush1.bf16.msra.mxu0 0
      %1558 = vmatprep.subr.bf16.mxu0 0
      %1559 = vmatpush1.bf16.msra.mxu0 0
      %1560 = vmatprep.subr.bf16.mxu0 0
      %1561 = vmatpush1.bf16.msra.mxu0 0
      %1562 = vmatprep.subr.bf16.mxu0 0
      %1563 = vmatpush1.bf16.msra.mxu0 0
      %1564 = vmatprep.subr.bf16.mxu0 0
      %1565 = vmatpush1.bf16.msra.mxu0 0
      %1566 = vmatprep.subr.bf16.mxu0 0
      %1567 = vmatpush1.bf16.msra.mxu0 0
      %1568 = vmatprep.subr.bf16.mxu0 0
      %1569 = vmatpush1.bf16.msra.mxu0 %v1552
      %1570 = vmatprep.subr.bf16.mxu0 0
      %1571 = vmatpush2.bf16.msra.mxu0 0
      %1572 = vmatprep.subr.bf16.mxu0 0
      %1573 = vmatpush2.bf16.msra.mxu0 0
      %1574 = vmatprep.subr.bf16.mxu0 0
      %1575 = vmatpush2.bf16.msra.mxu0 0
      %1576 = vmatprep.subr.bf16.mxu0 0
      %1577 = vmatpush2.bf16.msra.mxu0 0
      %1578 = vmatprep.subr.bf16.mxu0 0
      %1579 = vmatpush2.bf16.msra.mxu0 0
      %1580 = vmatprep.subr.bf16.mxu0 0
      %1581 = vmatpush2.bf16.msra.mxu0 0
      %1582 = vmatprep.subr.bf16.mxu0 0
      %1583 = vmatpush2.bf16.msra.mxu0 0
      %1584 = vmatprep.subr.bf16.mxu0 0
      %1585 = vmatpush2.bf16.msra.mxu0 0
      %1586 = vmatprep.mubr.bf16.mxu0 0
      %1587 = vmatmul.mubr.bf16.gmra.mxu0 %v1549
      %v1588 = vpop.f32.mrf.mxu0
      %v1589 = vadd.f32 0.0, %v1588
      %v1590 = vpop.f32.mrf.mxu0
      %v1591 = vpop.f32.mrf.mxu0
      %v1592 = vpop.f32.mrf.mxu0
      %1593 = vdwg.mxu0
      %v1595 = vsel %vm1213, %v1454, 0
      %v1598 = vsel %vm1458, %v1212, 0
      %1600 = vmatprep.subr.bf16.mxu0 0
      %1601 = vmatpush1.bf16.msra.mxu0 0
      %1602 = vmatprep.subr.bf16.mxu0 0
      %1603 = vmatpush1.bf16.msra.mxu0 0
      %1604 = vmatprep.subr.bf16.mxu0 0
      %1605 = vmatpush1.bf16.msra.mxu0 0
      %1606 = vmatprep.subr.bf16.mxu0 0
      %1607 = vmatpush1.bf16.msra.mxu0 0
      %1608 = vmatprep.subr.bf16.mxu0 0
      %1609 = vmatpush1.bf16.msra.mxu0 0
      %1610 = vmatprep.subr.bf16.mxu0 0
      %1611 = vmatpush1.bf16.msra.mxu0 0
      %1612 = vmatprep.subr.bf16.mxu0 0
      %1613 = vmatpush1.bf16.msra.mxu0 0
      %1614 = vmatprep.subr.bf16.mxu0 0
      %1615 = vmatpush1.bf16.msra.mxu0 %v1598
      %1616 = vmatprep.subr.bf16.mxu0 0
      %1617 = vmatpush2.bf16.msra.mxu0 0
      %1618 = vmatprep.subr.bf16.mxu0 0
      %1619 = vmatpush2.bf16.msra.mxu0 0
      %1620 = vmatprep.subr.bf16.mxu0 0
      %1621 = vmatpush2.bf16.msra.mxu0 0
      %1622 = vmatprep.subr.bf16.mxu0 0
      %1623 = vmatpush2.bf16.msra.mxu0 0
      %1624 = vmatprep.subr.bf16.mxu0 0
      %1625 = vmatpush2.bf16.msra.mxu0 0
      %1626 = vmatprep.subr.bf16.mxu0 0
      %1627 = vmatpush2.bf16.msra.mxu0 0
      %1628 = vmatprep.subr.bf16.mxu0 0
      %1629 = vmatpush2.bf16.msra.mxu0 0
      %1630 = vmatprep.subr.bf16.mxu0 0
      %1631 = vmatpush2.bf16.msra.mxu0 0
      %1632 = vmatprep.mubr.bf16.mxu0 0
      %1633 = vmatmul.mubr.bf16.gmra.mxu0 %v1595
      %v1634 = vpop.f32.mrf.mxu0
      %v1635 = vadd.f32 0.0, %v1634
      %v1636 = vpop.f32.mrf.mxu0
      %v1637 = vpop.f32.mrf.mxu0
      %v1638 = vpop.f32.mrf.mxu0
      %1639 = vdwg.mxu0
      %v1640 = vpack.c.bf16 %v1497, %v1497
      %v1641 = vpack.c.bf16 %v1543, %v1543
      %v1642 = vpack.c.bf16 %v1589, %v1589
      %v1643 = vpack.c.bf16 %v1635, %v1635
      %v1644 = vld [vmem:[%s9] sm:$0xf]
      %v1645 = vld [vmem:[%s9 + $0x4] sm:$0xf]
      %v1646 = vld [vmem:[%s9 + $0x8] sm:$0xf]
      %v1647 = vld [vmem:[%s9 + $0xc] sm:$0xf]
      %v1649 = vsel %vm1213, %v1640, 0
      %v1652 = vsel %vm1458, %v1644, 0
      %1654 = vmatprep.subr.bf16.mxu0 0
      %1655 = vmatpush1.bf16.msra.mxu0 0
      %1656 = vmatprep.subr.bf16.mxu0 0
      %1657 = vmatpush1.bf16.msra.mxu0 0
      %1658 = vmatprep.subr.bf16.mxu0 0
      %1659 = vmatpush1.bf16.msra.mxu0 0
      %1660 = vmatprep.subr.bf16.mxu0 0
      %1661 = vmatpush1.bf16.msra.mxu0 0
      %1662 = vmatprep.subr.bf16.mxu0 0
      %1663 = vmatpush1.bf16.msra.mxu0 0
      %1664 = vmatprep.subr.bf16.mxu0 0
      %1665 = vmatpush1.bf16.msra.mxu0 0
      %1666 = vmatprep.subr.bf16.mxu0 0
      %1667 = vmatpush1.bf16.msra.mxu0 0
      %1668 = vmatprep.subr.bf16.mxu0 0
      %1669 = vmatpush1.bf16.msra.mxu0 %v1652
      %1670 = vmatprep.subr.bf16.mxu0 0
      %1671 = vmatpush2.bf16.msra.mxu0 0
      %1672 = vmatprep.subr.bf16.mxu0 0
      %1673 = vmatpush2.bf16.msra.mxu0 0
      %1674 = vmatprep.subr.bf16.mxu0 0
      %1675 = vmatpush2.bf16.msra.mxu0 0
      %1676 = vmatprep.subr.bf16.mxu0 0
      %1677 = vmatpush2.bf16.msra.mxu0 0
      %1678 = vmatprep.subr.bf16.mxu0 0
      %1679 = vmatpush2.bf16.msra.mxu0 0
      %1680 = vmatprep.subr.bf16.mxu0 0
      %1681 = vmatpush2.bf16.msra.mxu0 0
      %1682 = vmatprep.subr.bf16.mxu0 0
      %1683 = vmatpush2.bf16.msra.mxu0 0
      %1684 = vmatprep.subr.bf16.mxu0 0
      %1685 = vmatpush2.bf16.msra.mxu0 0
      %1686 = vmatprep.mubr.bf16.mxu0 0
      %1687 = vmatmul.mubr.bf16.gmra.mxu0 %v1649
      %v1688 = vpop.f32.mrf.mxu0
      %v1689 = vadd.f32 0.0, %v1688
      %v1690 = vpop.f32.mrf.mxu0
      %v1691 = vpop.f32.mrf.mxu0
      %v1692 = vpop.f32.mrf.mxu0
      %1693 = vdwg.mxu0
      %v1695 = vsel %vm1213, %v1641, 0
      %v1698 = vsel %vm1458, %v1645, 0
      %1700 = vmatprep.subr.bf16.mxu0 0
      %1701 = vmatpush1.bf16.msra.mxu0 0
      %1702 = vmatprep.subr.bf16.mxu0 0
      %1703 = vmatpush1.bf16.msra.mxu0 0
      %1704 = vmatprep.subr.bf16.mxu0 0
      %1705 = vmatpush1.bf16.msra.mxu0 0
      %1706 = vmatprep.subr.bf16.mxu0 0
      %1707 = vmatpush1.bf16.msra.mxu0 0
      %1708 = vmatprep.subr.bf16.mxu0 0
      %1709 = vmatpush1.bf16.msra.mxu0 0
      %1710 = vmatprep.subr.bf16.mxu0 0
      %1711 = vmatpush1.bf16.msra.mxu0 0
      %1712 = vmatprep.subr.bf16.mxu0 0
      %1713 = vmatpush1.bf16.msra.mxu0 0
      %1714 = vmatprep.subr.bf16.mxu0 0
      %1715 = vmatpush1.bf16.msra.mxu0 %v1698
      %1716 = vmatprep.subr.bf16.mxu0 0
      %1717 = vmatpush2.bf16.msra.mxu0 0
      %1718 = vmatprep.subr.bf16.mxu0 0
      %1719 = vmatpush2.bf16.msra.mxu0 0
      %1720 = vmatprep.subr.bf16.mxu0 0
      %1721 = vmatpush2.bf16.msra.mxu0 0
      %1722 = vmatprep.subr.bf16.mxu0 0
      %1723 = vmatpush2.bf16.msra.mxu0 0
      %1724 = vmatprep.subr.bf16.mxu0 0
      %1725 = vmatpush2.bf16.msra.mxu0 0
      %1726 = vmatprep.subr.bf16.mxu0 0
      %1727 = vmatpush2.bf16.msra.mxu0 0
      %1728 = vmatprep.subr.bf16.mxu0 0
      %1729 = vmatpush2.bf16.msra.mxu0 0
      %1730 = vmatprep.subr.bf16.mxu0 0
      %1731 = vmatpush2.bf16.msra.mxu0 0
      %1732 = vmatprep.mubr.bf16.mxu0 0
      %1733 = vmatmul.mubr.bf16.gmra.mxu0 %v1695
      %v1734 = vpop.f32.mrf.mxu0
      %v1735 = vadd.f32 0.0, %v1734
      %v1736 = vpop.f32.mrf.mxu0
      %v1737 = vpop.f32.mrf.mxu0
      %v1738 = vpop.f32.mrf.mxu0
      %1739 = vdwg.mxu0
      %v1741 = vsel %vm1213, %v1642, 0
      %v1744 = vsel %vm1458, %v1646, 0
      %1746 = vmatprep.subr.bf16.mxu0 0
      %1747 = vmatpush1.bf16.msra.mxu0 0
      %1748 = vmatprep.subr.bf16.mxu0 0
      %1749 = vmatpush1.bf16.msra.mxu0 0
      %1750 = vmatprep.subr.bf16.mxu0 0
      %1751 = vmatpush1.bf16.msra.mxu0 0
      %1752 = vmatprep.subr.bf16.mxu0 0
      %1753 = vmatpush1.bf16.msra.mxu0 0
      %1754 = vmatprep.subr.bf16.mxu0 0
      %1755 = vmatpush1.bf16.msra.mxu0 0
      %1756 = vmatprep.subr.bf16.mxu0 0
      %1757 = vmatpush1.bf16.msra.mxu0 0
      %1758 = vmatprep.subr.bf16.mxu0 0
      %1759 = vmatpush1.bf16.msra.mxu0 0
      %1760 = vmatprep.subr.bf16.mxu0 0
      %1761 = vmatpush1.bf16.msra.mxu0 %v1744
      %1762 = vmatprep.subr.bf16.mxu0 0
      %1763 = vmatpush2.bf16.msra.mxu0 0
      %1764 = vmatprep.subr.bf16.mxu0 0
      %1765 = vmatpush2.bf16.msra.mxu0 0
      %1766 = vmatprep.subr.bf16.mxu0 0
      %1767 = vmatpush2.bf16.msra.mxu0 0
      %1768 = vmatprep.subr.bf16.mxu0 0
      %1769 = vmatpush2.bf16.msra.mxu0 0
      %1770 = vmatprep.subr.bf16.mxu0 0
      %1771 = vmatpush2.bf16.msra.mxu0 0
      %1772 = vmatprep.subr.bf16.mxu0 0
      %1773 = vmatpush2.bf16.msra.mxu0 0
      %1774 = vmatprep.subr.bf16.mxu0 0
      %1775 = vmatpush2.bf16.msra.mxu0 0
      %1776 = vmatprep.subr.bf16.mxu0 0
      %1777 = vmatpush2.bf16.msra.mxu0 0
      %1778 = vmatprep.mubr.bf16.mxu0 0
      %1779 = vmatmul.mubr.bf16.gmra.mxu0 %v1741
      %v1780 = vpop.f32.mrf.mxu0
      %v1781 = vadd.f32 0.0, %v1780
      %v1782 = vpop.f32.mrf.mxu0
      %v1783 = vpop.f32.mrf.mxu0
      %v1784 = vpop.f32.mrf.mxu0
      %1785 = vdwg.mxu0
      %v1787 = vsel %vm1213, %v1643, 0
      %v1790 = vsel %vm1458, %v1647, 0
      %1792 = vmatprep.subr.bf16.mxu0 0
      %1793 = vmatpush1.bf16.msra.mxu0 0
      %1794 = vmatprep.subr.bf16.mxu0 0
      %1795 = vmatpush1.bf16.msra.mxu0 0
      %1796 = vmatprep.subr.bf16.mxu0 0
      %1797 = vmatpush1.bf16.msra.mxu0 0
      %1798 = vmatprep.subr.bf16.mxu0 0
      %1799 = vmatpush1.bf16.msra.mxu0 0
      %1800 = vmatprep.subr.bf16.mxu0 0
      %1801 = vmatpush1.bf16.msra.mxu0 0
      %1802 = vmatprep.subr.bf16.mxu0 0
      %1803 = vmatpush1.bf16.msra.mxu0 0
      %1804 = vmatprep.subr.bf16.mxu0 0
      %1805 = vmatpush1.bf16.msra.mxu0 0
      %1806 = vmatprep.subr.bf16.mxu0 0
      %1807 = vmatpush1.bf16.msra.mxu0 %v1790
      %1808 = vmatprep.subr.bf16.mxu0 0
      %1809 = vmatpush2.bf16.msra.mxu0 0
      %1810 = vmatprep.subr.bf16.mxu0 0
      %1811 = vmatpush2.bf16.msra.mxu0 0
      %1812 = vmatprep.subr.bf16.mxu0 0
      %1813 = vmatpush2.bf16.msra.mxu0 0
      %1814 = vmatprep.subr.bf16.mxu0 0
      %1815 = vmatpush2.bf16.msra.mxu0 0
      %1816 = vmatprep.subr.bf16.mxu0 0
      %1817 = vmatpush2.bf16.msra.mxu0 0
      %1818 = vmatprep.subr.bf16.mxu0 0
      %1819 = vmatpush2.bf16.msra.mxu0 0
      %1820 = vmatprep.subr.bf16.mxu0 0
      %1821 = vmatpush2.bf16.msra.mxu0 0
      %1822 = vmatprep.subr.bf16.mxu0 0
      %1823 = vmatpush2.bf16.msra.mxu0 0
      %1824 = vmatprep.mubr.bf16.mxu0 0
      %1825 = vmatmul.mubr.bf16.gmra.mxu0 %v1787
      %v1826 = vpop.f32.mrf.mxu0
      %v1827 = vadd.f32 0.0, %v1826
      %v1828 = vpop.f32.mrf.mxu0
      %v1829 = vpop.f32.mrf.mxu0
      %v1830 = vpop.f32.mrf.mxu0
      %1831 = vdwg.mxu0
      %v1832 = vsel %vm497, %v1689, 0.0
      %v1833 = vsel %vm497, %v1735, 0.0
      %v1834 = vadd.f32 %v1832, %v1833
      %v1835 = vsel %vm497, %v1781, 0.0
      %v1836 = vadd.f32 %v1834, %v1835
      %v1837 = vsel %vm497, %v1827, 0.0
      %v1838 = vadd.f32 %v1836, %v1837
      %v1839 = vld [vmem:[%s10] sm:$0x1]
      %v1841 = vlaneseq
      %v1842 = vshrl.u32 %v1841, 7
      %v1843 = vsub.s32 0, %v1842
      %v1844 = vrot.slane %v1839, %v1843
      %v1846 = vadd.f32 %v1838, %v1844
      %v1847 = vadd.f32 %v439, %v1846
      %v1848 = vsel %vm497, %v1847, 0.0
      %1849 = vadd.xlane.f32.xlu0 %v1848
      %v1850 = vpop.xlane.xlu0 %1849
      %v1851 = vrcp.pop 32.0
      %v1852 = vmul.f32 %v1850, %v1851
      %v1853 = vsub.f32 %v1847, %v1852
      %v1854 = vmul.f32 %v1853, %v1853
      %v1855 = vsel %vm497, %v1854, 0.0
      %1856 = vadd.xlane.f32.xlu0 %v1855
      %v1857 = vpop.xlane.xlu0 %1856
      %v1858 = vmul.f32 %v1857, %v1851
      %v1859 = vadd.f32 %v1858, 1e-05
      %v1860 = vrsqrt.pop %v1859
      %v1861 = vmul.f32 %v1853, %v1860
      %v1862 = vld [vmem:[%s11] sm:$0x1]
      %v1864 = vlaneseq
      %v1865 = vshrl.u32 %v1864, 7
      %v1866 = vsub.s32 0, %v1865
      %v1867 = vrot.slane %v1862, %v1866
      %v1869 = vmul.f32 %v1861, %v1867
      %v1870 = vld [vmem:[%s12] sm:$0x1]
      %v1872 = vlaneseq
      %v1873 = vshrl.u32 %v1872, 7
      %v1874 = vsub.s32 0, %v1873
      %v1875 = vrot.slane %v1870, %v1874
      %v1877 = vadd.f32 %v1869, %v1875
      %v1878 = vpack.c.bf16 %v1877, %v1877
      %vm1879 = vcmask 257024
      %1880 = vst.msk [vmem:[%s435] sm:$0xf] %vm1879, %v1878
      %p1881 = scmp.lt.s32.totalorder %s24, 1
      %s1882 = scalar_select %p1881, %s24, 1
      %s1883 = smul.addr %s1882, 4
      %s1884 = scalar_lea.vmem %s13, %s1883
      // Predicated region
      $region73: #{decoder_forward.5} parent=71 // pred_check
        %p1885 = pneg %p320
      $region74: #{decoder_forward.5} parent=71 // pred_check_branch
        %1887 = sbr.rel (%p1885) target = $region76
      $region75: #{decoder_forward.5} parent=71 // pred_region
        _
      $region76: #{decoder_forward.5} parent=71 // pred_fallthru
        _
    $region72: #{decoder_forward.5} parent=5 // pred_fallthru
      _
    %p1888 = scmp.le.s32.totalorder 2, %s19
    // Predicated region
    $region77: #{decoder_forward.5} parent=5 // pred_check
      %p1889 = pneg %p1888
    $region78: #{decoder_forward.5} parent=5 // pred_check_branch
      %1891 = sbr.rel (%p1889) target = $region80
    $region79: #{decoder_forward.5} parent=5 // pred_region
      %s1892 = ssub.s32 %s19, 2
      // Predicated region
      $region81: #{decoder_forward.5} parent=79 // pred_check
        %p1893 = pneg %p326
      $region82: #{decoder_forward.5} parent=79 // pred_check_branch
        %1895 = sbr.rel (%p1893) target = $region84
      $region83: #{decoder_forward.5} parent=79 // pred_region
        %p1896 = scmp.lt.s32.totalorder %s25, 1
        %s1897 = scalar_select %p1896, %s25, 1
        %s1898 = smul.addr %s1897, 4
        %s1899 = scalar_lea.vmem %s13, %s1898
      $region84: #{decoder_forward.5} parent=79 // pred_fallthru
        _
    $region80: #{decoder_forward.5} parent=5 // pred_fallthru
      _
  $region6: #{decoder_forward.5} parent=0 // loop_footer
    %s23 = sadd.s32 1, %s19
  $region7: #{decoder_forward.5} parent=0 // loop_footer_branch
    %18 = sbr.rel target = $region3
  $region8: #{decoder_forward.5} parent=0 // loop_exit
    _

// kernel: decoder_forward.7
$region0: #{decoder_forward.7}
  #allocation0 [shape = 'u32[]', space=smem, size = 0x4, offset = 0x4, fixed_abs, tag = 'smem constant byte address 0x4 - core index']
  #allocation1 [shape = 'u32[144,128]{1,0:T(1,128)}', space=vmem, size = 0x12000, scoped, tag = 'internal scratch']
  %s0 = inlined_call_operand.vmem [shape: bf16[2,8,32], index: 0, kind: input, shape index: {}]
  %s1 = inlined_call_operand.vmem [shape: f32[8,8], index: 1, kind: input, shape index: {}]
  %s2 = inlined_call_operand.vmem [shape: bf16[4,32,8], index: 2, kind: input, shape index: {}]
  %s3 = inlined_call_operand.vmem [shape: bf16[4,32,8], index: 3, kind: input, shape index: {}]
  %s4 = inlined_call_operand.vmem [shape: bf16[4,32,8], index: 4, kind: input, shape index: {}]
  %s5 = inlined_call_operand.vmem [shape: f32[4,1,8], index: 5, kind: input, shape index: {}]
  %s6 = inlined_call_operand.vmem [shape: f32[4,1,8], index: 6, kind: input, shape index: {}]
  %s7 = inlined_call_operand.vmem [shape: f32[4,1,8], index: 7, kind: input, shape index: {}]
  %s8 = inlined_call_operand.vmem [shape: bf16[4,8,32], index: 8, kind: input, shape index: {}]
  %s9 = inlined_call_operand.vmem [shape: f32[1,32], index: 9, kind: input, shape index: {}]
  %s10 = inlined_call_operand.vmem [shape: f32[1,32], index: 10, kind: input, shape index: {}]
  %s11 = inlined_call_operand.vmem [shape: f32[1,32], index: 11, kind: input, shape index: {}]
  %s12 = inlined_call_operand.vmem [shape: bf16[2,8,32], index: 12, kind: output, shape index: {}]
  %s13 = sld [smem:[#allocation0]]
  $region81: #{decoder_forward.7} parent=0
    _
  %s15 = ssub.s32 1, %s13
  %s16 = scalar_select 0, %s15, %s13
  loop: start=0, step=1, limit=4
  $region2: #{decoder_forward.7} parent=0 // loop_pre_header
    _
  $region3: #{decoder_forward.7} parent=0 // loop_header
    %s18 = sphi 0, %s22
    %p19 = scmp.ge.s32.totalorder %s18, 4
    %s28 = sphi 0, %s30
    %s31 = sphi 0, %s28
    %s32 = sphi 0, %s31
    %s48 = sphi 0, %s32
    %s52 = sphi 0, %s52
    %s54 = sphi 0, %s52
    %s55 = sphi 0, %s54
    %s69 = sphi 0, %s55
    %s73 = sphi 0, %s73
    %s75 = sphi 0, %s73
    %s76 = sphi 0, %s75
    %s90 = sphi 0, %s76
    %s94 = sphi 0, %s94
    %s96 = sphi 0, %s94
    %s97 = sphi 0, %s96
    %s111 = sphi 0, %s97
    %s115 = sphi 0, %s115
    %s117 = sphi 0, %s115
    %s118 = sphi 0, %s117
    %s132 = sphi 0, %s118
    %s136 = sphi 0, %s136
    %s138 = sphi 0, %s136
    %s139 = sphi 0, %s138
    %s153 = sphi 0, %s139
    %s157 = sphi 0, %s157
    %s159 = sphi 0, %s157
    %s160 = sphi 0, %s159
    %s174 = sphi 0, %s160
    %s178 = sphi 0, %s178
    %s180 = sphi 0, %s178
    %s181 = sphi 0, %s180
    %s195 = sphi 0, %s181
    %s199 = sphi 0, %s199
    %s201 = sphi 0, %s199
    %s202 = sphi 0, %s201
    %s216 = sphi 0, %s202
    %s220 = sphi 0, %s220
    %s222 = sphi 0, %s220
    %s223 = sphi 0, %s222
    %s237 = sphi 0, %s223
    %s241 = sphi 0, %s241
    %s243 = sphi 0, %s241
    %s244 = sphi 0, %s243
    %s258 = sphi 0, %s244
    %s262 = sphi 0, %s262
    %s264 = sphi 0, %s262
    %s265 = sphi 0, %s264
    %s279 = sphi 0, %s265
    %s285 = sphi 0, %s287
    %s288 = sphi 0, %s285
    %s289 = sphi 0, %s288
    %s305 = sphi 0, %s289
  $region4: #{decoder_forward.7} parent=0 // loop_header_branch
    %21 = sbr.rel (%p19) target = $region8
  $region5: #{decoder_forward.7} parent=0 // loop_body
    %s23 = ssub.s32 %s18, 1
    %s24 = ssub.s32 %s18, 2
    %s25 = sadd.s32 %s18, 1
    %s26 = ssub.s32 %s18, %s25
    %p27 = scmp.eq.s32.totalorder %s26, 0
    %s29 = sadd.s32 %s28, 1
    %s30 = scalar_select %p27, %s28, %s29
    %p33 = pneg %p27
    %p34 = scmp.eq.s32.totalorder %s18, 1
    %p35 = por %p33, %p34
    %p36 = scmp.ne.s32.totalorder %s28, %s31
    %p37 = scmp.eq.s32.totalorder %s18, 0
    %p38 = por %p36, %p37
    %p39 = scmp.ne.s32.totalorder %s28, %s31
    %p40 = scmp.eq.s32.totalorder %s23, 1
    %p41 = por %p39, %p40
    %p42 = scmp.ne.s32.totalorder %s31, %s32
    %p43 = scmp.eq.s32.totalorder %s23, 0
    %p44 = por %p42, %p43
    %p45 = scmp.ne.s32.totalorder %s31, %s32
    %p46 = scmp.eq.s32.totalorder %s24, 1
    %p47 = por %p45, %p46
    %p49 = scmp.ne.s32.totalorder %s32, %s48
    %p50 = scmp.eq.s32.totalorder %s24, 0
    %p51 = por %p49, %p50
    %s53 = sadd.s32 %s52, 1
    %p56 = scmp.eq.s32.totalorder %s18, 1
    %p57 = scmp.ne.s32.totalorder %s52, %s54
    %p58 = scmp.eq.s32.totalorder %s18, 0
    %p59 = por %p57, %p58
    %p60 = scmp.ne.s32.totalorder %s52, %s54
    %p61 = scmp.eq.s32.totalorder %s23, 1
    %p62 = por %p60, %p61
    %p63 = scmp.ne.s32.totalorder %s54, %s55
    %p64 = scmp.eq.s32.totalorder %s23, 0
    %p65 = por %p63, %p64
    %p66 = scmp.ne.s32.totalorder %s54, %s55
    %p67 = scmp.eq.s32.totalorder %s24, 1
    %p68 = por %p66, %p67
    %p70 = scmp.ne.s32.totalorder %s55, %s69
    %p71 = scmp.eq.s32.totalorder %s24, 0
    %p72 = por %p70, %p71
    %s74 = sadd.s32 %s73, 1
    %p77 = scmp.eq.s32.totalorder %s18, 1
    %p78 = scmp.ne.s32.totalorder %s73, %s75
    %p79 = scmp.eq.s32.totalorder %s18, 0
    %p80 = por %p78, %p79
    %p81 = scmp.ne.s32.totalorder %s73, %s75
    %p82 = scmp.eq.s32.totalorder %s23, 1
    %p83 = por %p81, %p82
    %p84 = scmp.ne.s32.totalorder %s75, %s76
    %p85 = scmp.eq.s32.totalorder %s23, 0
    %p86 = por %p84, %p85
    %p87 = scmp.ne.s32.totalorder %s75, %s76
    %p88 = scmp.eq.s32.totalorder %s24, 1
    %p89 = por %p87, %p88
    %p91 = scmp.ne.s32.totalorder %s76, %s90
    %p92 = scmp.eq.s32.totalorder %s24, 0
    %p93 = por %p91, %p92
    %s95 = sadd.s32 %s94, 1
    %p98 = scmp.eq.s32.totalorder %s18, 1
    %p99 = scmp.ne.s32.totalorder %s94, %s96
    %p100 = scmp.eq.s32.totalorder %s18, 0
    %p101 = por %p99, %p100
    %p102 = scmp.ne.s32.totalorder %s94, %s96
    %p103 = scmp.eq.s32.totalorder %s23, 1
    %p104 = por %p102, %p103
    %p105 = scmp.ne.s32.totalorder %s96, %s97
    %p106 = scmp.eq.s32.totalorder %s23, 0
    %p107 = por %p105, %p106
    %p108 = scmp.ne.s32.totalorder %s96, %s97
    %p109 = scmp.eq.s32.totalorder %s24, 1
    %p110 = por %p108, %p109
    %p112 = scmp.ne.s32.totalorder %s97, %s111
    %p113 = scmp.eq.s32.totalorder %s24, 0
    %p114 = por %p112, %p113
    %s116 = sadd.s32 %s115, 1
    %p119 = scmp.eq.s32.totalorder %s18, 1
    %p120 = scmp.ne.s32.totalorder %s115, %s117
    %p121 = scmp.eq.s32.totalorder %s18, 0
    %p122 = por %p120, %p121
    %p123 = scmp.ne.s32.totalorder %s115, %s117
    %p124 = scmp.eq.s32.totalorder %s23, 1
    %p125 = por %p123, %p124
    %p126 = scmp.ne.s32.totalorder %s117, %s118
    %p127 = scmp.eq.s32.totalorder %s23, 0
    %p128 = por %p126, %p127
    %p129 = scmp.ne.s32.totalorder %s117, %s118
    %p130 = scmp.eq.s32.totalorder %s24, 1
    %p131 = por %p129, %p130
    %p133 = scmp.ne.s32.totalorder %s118, %s132
    %p134 = scmp.eq.s32.totalorder %s24, 0
    %p135 = por %p133, %p134
    %s137 = sadd.s32 %s136, 1
    %p140 = scmp.eq.s32.totalorder %s18, 1
    %p141 = scmp.ne.s32.totalorder %s136, %s138
    %p142 = scmp.eq.s32.totalorder %s18, 0
    %p143 = por %p141, %p142
    %p144 = scmp.ne.s32.totalorder %s136, %s138
    %p145 = scmp.eq.s32.totalorder %s23, 1
    %p146 = por %p144, %p145
    %p147 = scmp.ne.s32.totalorder %s138, %s139
    %p148 = scmp.eq.s32.totalorder %s23, 0
    %p149 = por %p147, %p148
    %p150 = scmp.ne.s32.totalorder %s138, %s139
    %p151 = scmp.eq.s32.totalorder %s24, 1
    %p152 = por %p150, %p151
    %p154 = scmp.ne.s32.totalorder %s139, %s153
    %p155 = scmp.eq.s32.totalorder %s24, 0
    %p156 = por %p154, %p155
    %s158 = sadd.s32 %s157, 1
    %p161 = scmp.eq.s32.totalorder %s18, 1
    %p162 = scmp.ne.s32.totalorder %s157, %s159
    %p163 = scmp.eq.s32.totalorder %s18, 0
    %p164 = por %p162, %p163
    %p165 = scmp.ne.s32.totalorder %s157, %s159
    %p166 = scmp.eq.s32.totalorder %s23, 1
    %p167 = por %p165, %p166
    %p168 = scmp.ne.s32.totalorder %s159, %s160
    %p169 = scmp.eq.s32.totalorder %s23, 0
    %p170 = por %p168, %p169
    %p171 = scmp.ne.s32.totalorder %s159, %s160
    %p172 = scmp.eq.s32.totalorder %s24, 1
    %p173 = por %p171, %p172
    %p175 = scmp.ne.s32.totalorder %s160, %s174
    %p176 = scmp.eq.s32.totalorder %s24, 0
    %p177 = por %p175, %p176
    %s179 = sadd.s32 %s178, 1
    %p182 = scmp.eq.s32.totalorder %s18, 1
    %p183 = scmp.ne.s32.totalorder %s178, %s180
    %p184 = scmp.eq.s32.totalorder %s18, 0
    %p185 = por %p183, %p184
    %p186 = scmp.ne.s32.totalorder %s178, %s180
    %p187 = scmp.eq.s32.totalorder %s23, 1
    %p188 = por %p186, %p187
    %p189 = scmp.ne.s32.totalorder %s180, %s181
    %p190 = scmp.eq.s32.totalorder %s23, 0
    %p191 = por %p189, %p190
    %p192 = scmp.ne.s32.totalorder %s180, %s181
    %p193 = scmp.eq.s32.totalorder %s24, 1
    %p194 = por %p192, %p193
    %p196 = scmp.ne.s32.totalorder %s181, %s195
    %p197 = scmp.eq.s32.totalorder %s24, 0
    %p198 = por %p196, %p197
    %s200 = sadd.s32 %s199, 1
    %p203 = scmp.eq.s32.totalorder %s18, 1
    %p204 = scmp.ne.s32.totalorder %s199, %s201
    %p205 = scmp.eq.s32.totalorder %s18, 0
    %p206 = por %p204, %p205
    %p207 = scmp.ne.s32.totalorder %s199, %s201
    %p208 = scmp.eq.s32.totalorder %s23, 1
    %p209 = por %p207, %p208
    %p210 = scmp.ne.s32.totalorder %s201, %s202
    %p211 = scmp.eq.s32.totalorder %s23, 0
    %p212 = por %p210, %p211
    %p213 = scmp.ne.s32.totalorder %s201, %s202
    %p214 = scmp.eq.s32.totalorder %s24, 1
    %p215 = por %p213, %p214
    %p217 = scmp.ne.s32.totalorder %s202, %s216
    %p218 = scmp.eq.s32.totalorder %s24, 0
    %p219 = por %p217, %p218
    %s221 = sadd.s32 %s220, 1
    %p224 = scmp.eq.s32.totalorder %s18, 1
    %p225 = scmp.ne.s32.totalorder %s220, %s222
    %p226 = scmp.eq.s32.totalorder %s18, 0
    %p227 = por %p225, %p226
    %p228 = scmp.ne.s32.totalorder %s220, %s222
    %p229 = scmp.eq.s32.totalorder %s23, 1
    %p230 = por %p228, %p229
    %p231 = scmp.ne.s32.totalorder %s222, %s223
    %p232 = scmp.eq.s32.totalorder %s23, 0
    %p233 = por %p231, %p232
    %p234 = scmp.ne.s32.totalorder %s222, %s223
    %p235 = scmp.eq.s32.totalorder %s24, 1
    %p236 = por %p234, %p235
    %p238 = scmp.ne.s32.totalorder %s223, %s237
    %p239 = scmp.eq.s32.totalorder %s24, 0
    %p240 = por %p238, %p239
    %s242 = sadd.s32 %s241, 1
    %p245 = scmp.eq.s32.totalorder %s18, 1
    %p246 = scmp.ne.s32.totalorder %s241, %s243
    %p247 = scmp.eq.s32.totalorder %s18, 0
    %p248 = por %p246, %p247
    %p249 = scmp.ne.s32.totalorder %s241, %s243
    %p250 = scmp.eq.s32.totalorder %s23, 1
    %p251 = por %p249, %p250
    %p252 = scmp.ne.s32.totalorder %s243, %s244
    %p253 = scmp.eq.s32.totalorder %s23, 0
    %p254 = por %p252, %p253
    %p255 = scmp.ne.s32.totalorder %s243, %s244
    %p256 = scmp.eq.s32.totalorder %s24, 1
    %p257 = por %p255, %p256
    %p259 = scmp.ne.s32.totalorder %s244, %s258
    %p260 = scmp.eq.s32.totalorder %s24, 0
    %p261 = por %p259, %p260
    %s263 = sadd.s32 %s262, 1
    %p266 = scmp.eq.s32.totalorder %s18, 1
    %p267 = scmp.ne.s32.totalorder %s262, %s264
    %p268 = scmp.eq.s32.totalorder %s18, 0
    %p269 = por %p267, %p268
    %p270 = scmp.ne.s32.totalorder %s262, %s264
    %p271 = scmp.eq.s32.totalorder %s23, 1
    %p272 = por %p270, %p271
    %p273 = scmp.ne.s32.totalorder %s264, %s265
    %p274 = scmp.eq.s32.totalorder %s23, 0
    %p275 = por %p273, %p274
    %p276 = scmp.ne.s32.totalorder %s264, %s265
    %p277 = scmp.eq.s32.totalorder %s24, 1
    %p278 = por %p276, %p277
    %p280 = scmp.ne.s32.totalorder %s265, %s279
    %p281 = scmp.eq.s32.totalorder %s24, 0
    %p282 = por %p280, %p281
    %s283 = ssub.s32 %s18, %s25
    %p284 = scmp.eq.s32.totalorder %s283, 0
    %s286 = sadd.s32 %s285, 1
    %s287 = scalar_select %p284, %s285, %s286
    %p290 = pneg %p284
    %p291 = scmp.eq.s32.totalorder %s18, 1
    %p292 = por %p290, %p291
    %p293 = scmp.ne.s32.totalorder %s285, %s288
    %p294 = scmp.eq.s32.totalorder %s18, 0
    %p295 = por %p293, %p294
    %p296 = scmp.ne.s32.totalorder %s285, %s288
    %p297 = scmp.eq.s32.totalorder %s23, 1
    %p298 = por %p296, %p297
    %p299 = scmp.ne.s32.totalorder %s288, %s289
    %p300 = scmp.eq.s32.totalorder %s23, 0
    %p301 = por %p299, %p300
    %p302 = scmp.ne.s32.totalorder %s288, %s289
    %p303 = scmp.eq.s32.totalorder %s24, 1
    %p304 = por %p302, %p303
    %p306 = scmp.ne.s32.totalorder %s289, %s305
    %p307 = scmp.eq.s32.totalorder %s24, 0
    %p308 = por %p306, %p307
    %p309 = scmp.le.s32.totalorder 1, %s18
    %p310 = scmp.lt.s32.totalorder %s18, 3
    %p311 = pnand %p309, %p310
    %p312 = pneg %p311
    // Predicated region
    $region9: #{decoder_forward.7} parent=5 // pred_check
      _
    $region10: #{decoder_forward.7} parent=5 // pred_check_branch
      %314 = sbr.rel (%p311) target = $region12
    $region11: #{decoder_forward.7} parent=5 // pred_region
      %s315 = ssub.s32 %s18, 1
      // Predicated region
      $region13: #{decoder_forward.7} parent=11 // pred_check
        %p316 = pneg %p65
      $region14: #{decoder_forward.7} parent=11 // pred_check_branch
        %318 = sbr.rel (%p316) target = $region16
      $region15: #{decoder_forward.7} parent=11 // pred_region
        _
      $region16: #{decoder_forward.7} parent=11 // pred_fallthru
        _
      // Predicated region
      $region17: #{decoder_forward.7} parent=11 // pred_check
        %p319 = pneg %p86
      $region18: #{decoder_forward.7} parent=11 // pred_check_branch
        %321 = sbr.rel (%p319) target = $region20
      $region19: #{decoder_forward.7} parent=11 // pred_region
        _
      $region20: #{decoder_forward.7} parent=11 // pred_fallthru
        _
      // Predicated region
      $region21: #{decoder_forward.7} parent=11 // pred_check
        %p322 = pneg %p107
      $region22: #{decoder_forward.7} parent=11 // pred_check_branch
        %324 = sbr.rel (%p322) target = $region24
      $region23: #{decoder_forward.7} parent=11 // pred_region
        _
      $region24: #{decoder_forward.7} parent=11 // pred_fallthru
        _
      // Predicated region
      $region25: #{decoder_forward.7} parent=11 // pred_check
        %p325 = pneg %p128
      $region26: #{decoder_forward.7} parent=11 // pred_check_branch
        %327 = sbr.rel (%p325) target = $region28
      $region27: #{decoder_forward.7} parent=11 // pred_region
        _
      $region28: #{decoder_forward.7} parent=11 // pred_fallthru
        _
      // Predicated region
      $region29: #{decoder_forward.7} parent=11 // pred_check
        %p328 = pneg %p149
      $region30: #{decoder_forward.7} parent=11 // pred_check_branch
        %330 = sbr.rel (%p328) target = $region32
      $region31: #{decoder_forward.7} parent=11 // pred_region
        _
      $region32: #{decoder_forward.7} parent=11 // pred_fallthru
        _
      // Predicated region
      $region33: #{decoder_forward.7} parent=11 // pred_check
        %p331 = pneg %p170
      $region34: #{decoder_forward.7} parent=11 // pred_check_branch
        %333 = sbr.rel (%p331) target = $region36
      $region35: #{decoder_forward.7} parent=11 // pred_region
        _
      $region36: #{decoder_forward.7} parent=11 // pred_fallthru
        _
      // Predicated region
      $region37: #{decoder_forward.7} parent=11 // pred_check
        %p334 = pneg %p191
      $region38: #{decoder_forward.7} parent=11 // pred_check_branch
        %336 = sbr.rel (%p334) target = $region40
      $region39: #{decoder_forward.7} parent=11 // pred_region
        _
      $region40: #{decoder_forward.7} parent=11 // pred_fallthru
        _
      // Predicated region
      $region41: #{decoder_forward.7} parent=11 // pred_check
        %p337 = pneg %p212
      $region42: #{decoder_forward.7} parent=11 // pred_check_branch
        %339 = sbr.rel (%p337) target = $region44
      $region43: #{decoder_forward.7} parent=11 // pred_region
        _
      $region44: #{decoder_forward.7} parent=11 // pred_fallthru
        _
      // Predicated region
      $region45: #{decoder_forward.7} parent=11 // pred_check
        %p340 = pneg %p233
      $region46: #{decoder_forward.7} parent=11 // pred_check_branch
        %342 = sbr.rel (%p340) target = $region48
      $region47: #{decoder_forward.7} parent=11 // pred_region
        _
      $region48: #{decoder_forward.7} parent=11 // pred_fallthru
        _
      // Predicated region
      $region49: #{decoder_forward.7} parent=11 // pred_check
        %p343 = pneg %p254
      $region50: #{decoder_forward.7} parent=11 // pred_check_branch
        %345 = sbr.rel (%p343) target = $region52
      $region51: #{decoder_forward.7} parent=11 // pred_region
        _
      $region52: #{decoder_forward.7} parent=11 // pred_fallthru
        _
      // Predicated region
      $region53: #{decoder_forward.7} parent=11 // pred_check
        %p346 = pneg %p275
      $region54: #{decoder_forward.7} parent=11 // pred_check_branch
        %348 = sbr.rel (%p346) target = $region56
      $region55: #{decoder_forward.7} parent=11 // pred_region
        _
      $region56: #{decoder_forward.7} parent=11 // pred_fallthru
        _
    $region12: #{decoder_forward.7} parent=5 // pred_fallthru
      _
    %p349 = scmp.lt.s32.totalorder %s18, 2
    // Predicated region
    $region57: #{decoder_forward.7} parent=5 // pred_check
      %p350 = pneg %p349
    $region58: #{decoder_forward.7} parent=5 // pred_check_branch
      %352 = sbr.rel (%p350) target = $region60
    $region59: #{decoder_forward.7} parent=5 // pred_region
      // Predicated region
      $region61: #{decoder_forward.7} parent=59 // pred_check
        %p353 = pneg %p38
      $region62: #{decoder_forward.7} parent=59 // pred_check_branch
        %355 = sbr.rel (%p353) target = $region64
      $region63: #{decoder_forward.7} parent=59 // pred_region
        %p356 = scmp.lt.s32.totalorder %s18, 1
        %s357 = scalar_select %p356, %s18, 1
        %s358 = smul.addr %s357, 4
        %s359 = scalar_lea.vmem %s0, %s358
      $region64: #{decoder_forward.7} parent=59 // pred_fallthru
        _
    $region60: #{decoder_forward.7} parent=5 // pred_fallthru
      _
    %p360 = scmp.le.s32.totalorder 1, %s18
    %p361 = scmp.lt.s32.totalorder %s18, 3
    %p362 = pnand %p360, %p361
    %p363 = pneg %p362
    // Predicated region
    $region65: #{decoder_forward.7} parent=5 // pred_check
      _
    $region66: #{decoder_forward.7} parent=5 // pred_check_branch
      %365 = sbr.rel (%p362) target = $region68
    $region67: #{decoder_forward.7} parent=5 // pred_region
      %s366 = ssub.s32 %s18, 1
      %p367 = scmp.lt.s32.totalorder %s23, 1
      %s368 = scalar_select %p367, %s23, 1
      %s369 = smul.addr %s368, 4
      %s370 = scalar_lea.vmem %s0, %s369
      %p371 = pneg %p44
      %p372 = pneg %p41
      %p373 = pneg %p65
      %p374 = pneg %p62
      %p375 = pneg %p86
      %p376 = pneg %p83
      %p377 = pneg %p107
      %p378 = pneg %p104
      %p379 = pneg %p128
      %p380 = pneg %p125
      %p381 = pneg %p149
      %p382 = pneg %p146
      %p383 = pneg %p170
      %p384 = pneg %p167
      %p385 = pneg %p191
      %p386 = pneg %p188
      %p387 = pneg %p212
      %p388 = pneg %p209
      %p389 = pneg %p233
      %p390 = pneg %p230
      %p391 = pneg %p254
      %p392 = pneg %p251
      %p393 = pneg %p275
      %p394 = pneg %p272
      %p395 = pneg %p301
      %p396 = pneg %p298
      %p397 = scmp.lt.s32.totalorder %s23, 1
      %s398 = scalar_select %p397, %s23, 1
      %s399 = smul.addr %s398, 4
      %s400 = scalar_lea.vmem %s12, %s399
      %p401 = scmp.lt.s32.totalorder %s23, 1
      %s402 = scalar_select %p401, %s23, 1
      %s403 = smul.addr %s402, 4
      %s404 = scalar_lea.vmem %s0, %s403
      %p405 = scmp.lt.s32.totalorder %s23, 1
      %s406 = scalar_select %p405, %s23, 1
      %s407 = smul.addr %s406, 4
      %s408 = scalar_lea.vmem %s12, %s407
      %v410 = vld [vmem:[%s404] sm:$0xf]
      %v411 = vunpack.c.l.bf16 %v410
      %v412 = vld [vmem:[%s2] sm:$0xf]
      %v413 = vld [vmem:[%s2 + $0x4] sm:$0xf]
      %v414 = vld [vmem:[%s2 + $0x8] sm:$0xf]
      %v415 = vld [vmem:[%s2 + $0xc] sm:$0xf]
      %v416 = vld [vmem:[%s2 + $0x10] sm:$0xf]
      %v417 = vld [vmem:[%s2 + $0x14] sm:$0xf]
      %v418 = vld [vmem:[%s2 + $0x18] sm:$0xf]
      %v419 = vld [vmem:[%s2 + $0x1c] sm:$0xf]
      %v420 = vld [vmem:[%s2 + $0x20] sm:$0xf]
      %v421 = vld [vmem:[%s2 + $0x24] sm:$0xf]
      %v422 = vld [vmem:[%s2 + $0x28] sm:$0xf]
      %v423 = vld [vmem:[%s2 + $0x2c] sm:$0xf]
      %v424 = vld [vmem:[%s2 + $0x30] sm:$0xf]
      %v425 = vld [vmem:[%s2 + $0x34] sm:$0xf]
      %v426 = vld [vmem:[%s2 + $0x38] sm:$0xf]
      %v427 = vld [vmem:[%s2 + $0x3c] sm:$0xf]
      %v428 = vld [vmem:[%s5] sm:$0x1]
      %v429 = vld [vmem:[%s5 + $0x1] sm:$0x1]
      %v430 = vld [vmem:[%s5 + $0x2] sm:$0x1]
      %v431 = vld [vmem:[%s5 + $0x3] sm:$0x1]
      %v436 = vlaneseq
      %v437 = vshrl.u32 %v436, 7
      %v438 = vsub.s32 0, %v437
      %v439 = vrot.slane %v428, %v438
      %v440 = vlaneseq
      %v441 = vshrl.u32 %v440, 7
      %v442 = vsub.s32 0, %v441
      %v443 = vrot.slane %v429, %v442
      %v444 = vlaneseq
      %v445 = vshrl.u32 %v444, 7
      %v446 = vsub.s32 0, %v445
      %v447 = vrot.slane %v430, %v446
      %v448 = vlaneseq
      %v449 = vshrl.u32 %v448, 7
      %v450 = vsub.s32 0, %v449
      %v451 = vrot.slane %v431, %v450
      %v460 = vunpack.c.l.b16 %v412
      %v461 = vunpack.c.l.b16 %v413
      %v462 = vunpack.c.l.b16 %v414
      %v463 = vunpack.c.l.b16 %v415
      %v464 = vpack.c.b16 %v461, %v460
      %v465 = vpack.c.b16 %v463, %v462
      %vm468 = vcmask 261120
      %v470 = vsel %vm468, %v410, 0
      %472 = vmatprep.subr.bf16.mxu0 0
      %473 = vmatpush1.bf16.msra.mxu0 0
      %474 = vmatprep.subr.bf16.mxu0 0
      %475 = vmatpush1.bf16.msra.mxu0 0
      %476 = vmatprep.subr.bf16.mxu0 0
      %477 = vmatpush1.bf16.msra.mxu0 0
      %478 = vmatprep.subr.bf16.mxu0 0
      %479 = vmatpush1.bf16.msra.mxu0 0
      %480 = vmatprep.subr.bf16.mxu0 0
      %481 = vmatpush1.bf16.msra.mxu0 0
      %482 = vmatprep.subr.bf16.mxu0 0
      %483 = vmatpush1.bf16.msra.mxu0 0
      %484 = vmatprep.subr.bf16.mxu0 0
      %485 = vmatpush1.bf16.msra.mxu0 %v465
      %486 = vmatprep.subr.bf16.mxu0 0
      %487 = vmatpush1.bf16.msra.mxu0 %v464
      %488 = vmatprep.subr.bf16.mxu0 0
      %489 = vmatpush2.bf16.msra.mxu0 0
      %490 = vmatprep.subr.bf16.mxu0 0
      %491 = vmatpush2.bf16.msra.mxu0 0
      %492 = vmatprep.subr.bf16.mxu0 0
      %493 = vmatpush2.bf16.msra.mxu0 0
      %494 = vmatprep.subr.bf16.mxu0 0
      %495 = vmatpush2.bf16.msra.mxu0 0
      %496 = vmatprep.subr.bf16.mxu0 0
      %497 = vmatpush2.bf16.msra.mxu0 0
      %498 = vmatprep.subr.bf16.mxu0 0
      %499 = vmatpush2.bf16.msra.mxu0 0
      %500 = vmatprep.subr.bf16.mxu0 0
      %501 = vmatpush2.bf16.msra.mxu0 0
      %502 = vmatprep.subr.bf16.mxu0 0
      %503 = vmatpush2.bf16.msra.mxu0 0
      %504 = vmatprep.mubr.bf16.mxu0 0
      %505 = vmatmul.mubr.bf16.gmra.mxu0 %v470
      %v506 = vpop.f32.mrf.mxu0
      %v507 = vadd.f32 %v439, %v506
      %v508 = vpop.f32.mrf.mxu0
      %v509 = vpop.f32.mrf.mxu0
      %v510 = vpop.f32.mrf.mxu0
      %511 = vdwg.mxu0
      %v516 = vunpack.c.l.b16 %v416
      %v517 = vunpack.c.l.b16 %v417
      %v518 = vunpack.c.l.b16 %v418
      %v519 = vunpack.c.l.b16 %v419
      %v520 = vpack.c.b16 %v517, %v516
      %v521 = vpack.c.b16 %v519, %v518
      %524 = vmatprep.subr.bf16.mxu0 0
      %525 = vmatpush1.bf16.msra.mxu0 0
      %526 = vmatprep.subr.bf16.mxu0 0
      %527 = vmatpush1.bf16.msra.mxu0 0
      %528 = vmatprep.subr.bf16.mxu0 0
      %529 = vmatpush1.bf16.msra.mxu0 0
      %530 = vmatprep.subr.bf16.mxu0 0
      %531 = vmatpush1.bf16.msra.mxu0 0
      %532 = vmatprep.subr.bf16.mxu0 0
      %533 = vmatpush1.bf16.msra.mxu0 0
      %534 = vmatprep.subr.bf16.mxu0 0
      %535 = vmatpush1.bf16.msra.mxu0 0
      %536 = vmatprep.subr.bf16.mxu0 0
      %537 = vmatpush1.bf16.msra.mxu0 %v521
      %538 = vmatprep.subr.bf16.mxu0 0
      %539 = vmatpush1.bf16.msra.mxu0 %v520
      %540 = vmatprep.subr.bf16.mxu0 0
      %541 = vmatpush2.bf16.msra.mxu0 0
      %542 = vmatprep.subr.bf16.mxu0 0
      %543 = vmatpush2.bf16.msra.mxu0 0
      %544 = vmatprep.subr.bf16.mxu0 0
      %545 = vmatpush2.bf16.msra.mxu0 0
      %546 = vmatprep.subr.bf16.mxu0 0
      %547 = vmatpush2.bf16.msra.mxu0 0
      %548 = vmatprep.subr.bf16.mxu0 0
      %549 = vmatpush2.bf16.msra.mxu0 0
      %550 = vmatprep.subr.bf16.mxu0 0
      %551 = vmatpush2.bf16.msra.mxu0 0
      %552 = vmatprep.subr.bf16.mxu0 0
      %553 = vmatpush2.bf16.msra.mxu0 0
      %554 = vmatprep.subr.bf16.mxu0 0
      %555 = vmatpush2.bf16.msra.mxu0 0
      %556 = vmatprep.mubr.bf16.mxu0 0
      %557 = vmatmul.mubr.bf16.gmra.mxu0 %v470
      %v558 = vpop.f32.mrf.mxu0
      %v559 = vadd.f32 %v443, %v558
      %v560 = vpop.f32.mrf.mxu0
      %v561 = vpop.f32.mrf.mxu0
      %v562 = vpop.f32.mrf.mxu0
      %563 = vdwg.mxu0
      %v568 = vunpack.c.l.b16 %v420
      %v569 = vunpack.c.l.b16 %v421
      %v570 = vunpack.c.l.b16 %v422
      %v571 = vunpack.c.l.b16 %v423
      %v572 = vpack.c.b16 %v569, %v568
      %v573 = vpack.c.b16 %v571, %v570
      %576 = vmatprep.subr.bf16.mxu0 0
      %577 = vmatpush1.bf16.msra.mxu0 0
      %578 = vmatprep.subr.bf16.mxu0 0
      %579 = vmatpush1.bf16.msra.mxu0 0
      %580 = vmatprep.subr.bf16.mxu0 0
      %581 = vmatpush1.bf16.msra.mxu0 0
      %582 = vmatprep.subr.bf16.mxu0 0
      %583 = vmatpush1.bf16.msra.mxu0 0
      %584 = vmatprep.subr.bf16.mxu0 0
      %585 = vmatpush1.bf16.msra.mxu0 0
      %586 = vmatprep.subr.bf16.mxu0 0
      %587 = vmatpush1.bf16.msra.mxu0 0
      %588 = vmatprep.subr.bf16.mxu0 0
      %589 = vmatpush1.bf16.msra.mxu0 %v573
      %590 = vmatprep.subr.bf16.mxu0 0
      %591 = vmatpush1.bf16.msra.mxu0 %v572
      %592 = vmatprep.subr.bf16.mxu0 0
      %593 = vmatpush2.bf16.msra.mxu0 0
      %594 = vmatprep.subr.bf16.mxu0 0
      %595 = vmatpush2.bf16.msra.mxu0 0
      %596 = vmatprep.subr.bf16.mxu0 0
      %597 = vmatpush2.bf16.msra.mxu0 0
      %598 = vmatprep.subr.bf16.mxu0 0
      %599 = vmatpush2.bf16.msra.mxu0 0
      %600 = vmatprep.subr.bf16.mxu0 0
      %601 = vmatpush2.bf16.msra.mxu0 0
      %602 = vmatprep.subr.bf16.mxu0 0
      %603 = vmatpush2.bf16.msra.mxu0 0
      %604 = vmatprep.subr.bf16.mxu0 0
      %605 = vmatpush2.bf16.msra.mxu0 0
      %606 = vmatprep.subr.bf16.mxu0 0
      %607 = vmatpush2.bf16.msra.mxu0 0
      %608 = vmatprep.mubr.bf16.mxu0 0
      %609 = vmatmul.mubr.bf16.gmra.mxu0 %v470
      %v610 = vpop.f32.mrf.mxu0
      %v611 = vadd.f32 %v447, %v610
      %v612 = vpop.f32.mrf.mxu0
      %v613 = vpop.f32.mrf.mxu0
      %v614 = vpop.f32.mrf.mxu0
      %615 = vdwg.mxu0
      %v620 = vunpack.c.l.b16 %v424
      %v621 = vunpack.c.l.b16 %v425
      %v622 = vunpack.c.l.b16 %v426
      %v623 = vunpack.c.l.b16 %v427
      %v624 = vpack.c.b16 %v621, %v620
      %v625 = vpack.c.b16 %v623, %v622
      %628 = vmatprep.subr.bf16.mxu0 0
      %629 = vmatpush1.bf16.msra.mxu0 0
      %630 = vmatprep.subr.bf16.mxu0 0
      %631 = vmatpush1.bf16.msra.mxu0 0
      %632 = vmatprep.subr.bf16.mxu0 0
      %633 = vmatpush1.bf16.msra.mxu0 0
      %634 = vmatprep.subr.bf16.mxu0 0
      %635 = vmatpush1.bf16.msra.mxu0 0
      %636 = vmatprep.subr.bf16.mxu0 0
      %637 = vmatpush1.bf16.msra.mxu0 0
      %638 = vmatprep.subr.bf16.mxu0 0
      %639 = vmatpush1.bf16.msra.mxu0 0
      %640 = vmatprep.subr.bf16.mxu0 0
      %641 = vmatpush1.bf16.msra.mxu0 %v625
      %642 = vmatprep.subr.bf16.mxu0 0
      %643 = vmatpush1.bf16.msra.mxu0 %v624
      %644 = vmatprep.subr.bf16.mxu0 0
      %645 = vmatpush2.bf16.msra.mxu0 0
      %646 = vmatprep.subr.bf16.mxu0 0
      %647 = vmatpush2.bf16.msra.mxu0 0
      %648 = vmatprep.subr.bf16.mxu0 0
      %649 = vmatpush2.bf16.msra.mxu0 0
      %650 = vmatprep.subr.bf16.mxu0 0
      %651 = vmatpush2.bf16.msra.mxu0 0
      %652 = vmatprep.subr.bf16.mxu0 0
      %653 = vmatpush2.bf16.msra.mxu0 0
      %654 = vmatprep.subr.bf16.mxu0 0
      %655 = vmatpush2.bf16.msra.mxu0 0
      %656 = vmatprep.subr.bf16.mxu0 0
      %657 = vmatpush2.bf16.msra.mxu0 0
      %658 = vmatprep.subr.bf16.mxu0 0
      %659 = vmatpush2.bf16.msra.mxu0 0
      %660 = vmatprep.mubr.bf16.mxu0 0
      %661 = vmatmul.mubr.bf16.gmra.mxu0 %v470
      %v662 = vpop.f32.mrf.mxu0
      %v663 = vadd.f32 %v451, %v662
      %v664 = vpop.f32.mrf.mxu0
      %v665 = vpop.f32.mrf.mxu0
      %v666 = vpop.f32.mrf.mxu0
      %667 = vdwg.mxu0
      %v668 = vpack.c.bf16 %v507, %v507
      %v669 = vpack.c.bf16 %v559, %v559
      %v670 = vpack.c.bf16 %v611, %v611
      %v671 = vpack.c.bf16 %v663, %v663
      %v672 = vld [vmem:[%s3] sm:$0xf]
      %v673 = vld [vmem:[%s3 + $0x4] sm:$0xf]
      %v674 = vld [vmem:[%s3 + $0x8] sm:$0xf]
      %v675 = vld [vmem:[%s3 + $0xc] sm:$0xf]
      %v676 = vld [vmem:[%s3 + $0x10] sm:$0xf]
      %v677 = vld [vmem:[%s3 + $0x14] sm:$0xf]
      %v678 = vld [vmem:[%s3 + $0x18] sm:$0xf]
      %v679 = vld [vmem:[%s3 + $0x1c] sm:$0xf]
      %v680 = vld [vmem:[%s3 + $0x20] sm:$0xf]
      %v681 = vld [vmem:[%s3 + $0x24] sm:$0xf]
      %v682 = vld [vmem:[%s3 + $0x28] sm:$0xf]
      %v683 = vld [vmem:[%s3 + $0x2c] sm:$0xf]
      %v684 = vld [vmem:[%s3 + $0x30] sm:$0xf]
      %v685 = vld [vmem:[%s3 + $0x34] sm:$0xf]
      %v686 = vld [vmem:[%s3 + $0x38] sm:$0xf]
      %v687 = vld [vmem:[%s3 + $0x3c] sm:$0xf]
      %v688 = vld [vmem:[%s6] sm:$0x1]
      %v689 = vld [vmem:[%s6 + $0x1] sm:$0x1]
      %v690 = vld [vmem:[%s6 + $0x2] sm:$0x1]
      %v691 = vld [vmem:[%s6 + $0x3] sm:$0x1]
      %v696 = vlaneseq
      %v697 = vshrl.u32 %v696, 7
      %v698 = vsub.s32 0, %v697
      %v699 = vrot.slane %v688, %v698
      %v700 = vlaneseq
      %v701 = vshrl.u32 %v700, 7
      %v702 = vsub.s32 0, %v701
      %v703 = vrot.slane %v689, %v702
      %v704 = vlaneseq
      %v705 = vshrl.u32 %v704, 7
      %v706 = vsub.s32 0, %v705
      %v707 = vrot.slane %v690, %v706
      %v708 = vlaneseq
      %v709 = vshrl.u32 %v708, 7
      %v710 = vsub.s32 0, %v709
      %v711 = vrot.slane %v691, %v710
      %v720 = vunpack.c.l.b16 %v672
      %v721 = vunpack.c.l.b16 %v673
      %v722 = vunpack.c.l.b16 %v674
      %v723 = vunpack.c.l.b16 %v675
      %v724 = vpack.c.b16 %v721, %v720
      %v725 = vpack.c.b16 %v723, %v722
      %728 = vmatprep.subr.bf16.mxu0 0
      %729 = vmatpush1.bf16.msra.mxu0 0
      %730 = vmatprep.subr.bf16.mxu0 0
      %731 = vmatpush1.bf16.msra.mxu0 0
      %732 = vmatprep.subr.bf16.mxu0 0
      %733 = vmatpush1.bf16.msra.mxu0 0
      %734 = vmatprep.subr.bf16.mxu0 0
      %735 = vmatpush1.bf16.msra.mxu0 0
      %736 = vmatprep.subr.bf16.mxu0 0
      %737 = vmatpush1.bf16.msra.mxu0 0
      %738 = vmatprep.subr.bf16.mxu0 0
      %739 = vmatpush1.bf16.msra.mxu0 0
      %740 = vmatprep.subr.bf16.mxu0 0
      %741 = vmatpush1.bf16.msra.mxu0 %v725
      %742 = vmatprep.subr.bf16.mxu0 0
      %743 = vmatpush1.bf16.msra.mxu0 %v724
      %744 = vmatprep.subr.bf16.mxu0 0
      %745 = vmatpush2.bf16.msra.mxu0 0
      %746 = vmatprep.subr.bf16.mxu0 0
      %747 = vmatpush2.bf16.msra.mxu0 0
      %748 = vmatprep.subr.bf16.mxu0 0
      %749 = vmatpush2.bf16.msra.mxu0 0
      %750 = vmatprep.subr.bf16.mxu0 0
      %751 = vmatpush2.bf16.msra.mxu0 0
      %752 = vmatprep.subr.bf16.mxu0 0
      %753 = vmatpush2.bf16.msra.mxu0 0
      %754 = vmatprep.subr.bf16.mxu0 0
      %755 = vmatpush2.bf16.msra.mxu0 0
      %756 = vmatprep.subr.bf16.mxu0 0
      %757 = vmatpush2.bf16.msra.mxu0 0
      %758 = vmatprep.subr.bf16.mxu0 0
      %759 = vmatpush2.bf16.msra.mxu0 0
      %760 = vmatprep.mubr.bf16.mxu0 0
      %761 = vmatmul.mubr.bf16.gmra.mxu0 %v470
      %v762 = vpop.f32.mrf.mxu0
      %v763 = vadd.f32 %v699, %v762
      %v764 = vpop.f32.mrf.mxu0
      %v765 = vpop.f32.mrf.mxu0
      %v766 = vpop.f32.mrf.mxu0
      %767 = vdwg.mxu0
      %v772 = vunpack.c.l.b16 %v676
      %v773 = vunpack.c.l.b16 %v677
      %v774 = vunpack.c.l.b16 %v678
      %v775 = vunpack.c.l.b16 %v679
      %v776 = vpack.c.b16 %v773, %v772
      %v777 = vpack.c.b16 %v775, %v774
      %780 = vmatprep.subr.bf16.mxu0 0
      %781 = vmatpush1.bf16.msra.mxu0 0
      %782 = vmatprep.subr.bf16.mxu0 0
      %783 = vmatpush1.bf16.msra.mxu0 0
      %784 = vmatprep.subr.bf16.mxu0 0
      %785 = vmatpush1.bf16.msra.mxu0 0
      %786 = vmatprep.subr.bf16.mxu0 0
      %787 = vmatpush1.bf16.msra.mxu0 0
      %788 = vmatprep.subr.bf16.mxu0 0
      %789 = vmatpush1.bf16.msra.mxu0 0
      %790 = vmatprep.subr.bf16.mxu0 0
      %791 = vmatpush1.bf16.msra.mxu0 0
      %792 = vmatprep.subr.bf16.mxu0 0
      %793 = vmatpush1.bf16.msra.mxu0 %v777
      %794 = vmatprep.subr.bf16.mxu0 0
      %795 = vmatpush1.bf16.msra.mxu0 %v776
      %796 = vmatprep.subr.bf16.mxu0 0
      %797 = vmatpush2.bf16.msra.mxu0 0
      %798 = vmatprep.subr.bf16.mxu0 0
      %799 = vmatpush2.bf16.msra.mxu0 0
      %800 = vmatprep.subr.bf16.mxu0 0
      %801 = vmatpush2.bf16.msra.mxu0 0
      %802 = vmatprep.subr.bf16.mxu0 0
      %803 = vmatpush2.bf16.msra.mxu0 0
      %804 = vmatprep.subr.bf16.mxu0 0
      %805 = vmatpush2.bf16.msra.mxu0 0
      %806 = vmatprep.subr.bf16.mxu0 0
      %807 = vmatpush2.bf16.msra.mxu0 0
      %808 = vmatprep.subr.bf16.mxu0 0
      %809 = vmatpush2.bf16.msra.mxu0 0
      %810 = vmatprep.subr.bf16.mxu0 0
      %811 = vmatpush2.bf16.msra.mxu0 0
      %812 = vmatprep.mubr.bf16.mxu0 0
      %813 = vmatmul.mubr.bf16.gmra.mxu0 %v470
      %v814 = vpop.f32.mrf.mxu0
      %v815 = vadd.f32 %v703, %v814
      %v816 = vpop.f32.mrf.mxu0
      %v817 = vpop.f32.mrf.mxu0
      %v818 = vpop.f32.mrf.mxu0
      %819 = vdwg.mxu0
      %v824 = vunpack.c.l.b16 %v680
      %v825 = vunpack.c.l.b16 %v681
      %v826 = vunpack.c.l.b16 %v682
      %v827 = vunpack.c.l.b16 %v683
      %v828 = vpack.c.b16 %v825, %v824
      %v829 = vpack.c.b16 %v827, %v826
      %832 = vmatprep.subr.bf16.mxu0 0
      %833 = vmatpush1.bf16.msra.mxu0 0
      %834 = vmatprep.subr.bf16.mxu0 0
      %835 = vmatpush1.bf16.msra.mxu0 0
      %836 = vmatprep.subr.bf16.mxu0 0
      %837 = vmatpush1.bf16.msra.mxu0 0
      %838 = vmatprep.subr.bf16.mxu0 0
      %839 = vmatpush1.bf16.msra.mxu0 0
      %840 = vmatprep.subr.bf16.mxu0 0
      %841 = vmatpush1.bf16.msra.mxu0 0
      %842 = vmatprep.subr.bf16.mxu0 0
      %843 = vmatpush1.bf16.msra.mxu0 0
      %844 = vmatprep.subr.bf16.mxu0 0
      %845 = vmatpush1.bf16.msra.mxu0 %v829
      %846 = vmatprep.subr.bf16.mxu0 0
      %847 = vmatpush1.bf16.msra.mxu0 %v828
      %848 = vmatprep.subr.bf16.mxu0 0
      %849 = vmatpush2.bf16.msra.mxu0 0
      %850 = vmatprep.subr.bf16.mxu0 0
      %851 = vmatpush2.bf16.msra.mxu0 0
      %852 = vmatprep.subr.bf16.mxu0 0
      %853 = vmatpush2.bf16.msra.mxu0 0
      %854 = vmatprep.subr.bf16.mxu0 0
      %855 = vmatpush2.bf16.msra.mxu0 0
      %856 = vmatprep.subr.bf16.mxu0 0
      %857 = vmatpush2.bf16.msra.mxu0 0
      %858 = vmatprep.subr.bf16.mxu0 0
      %859 = vmatpush2.bf16.msra.mxu0 0
      %860 = vmatprep.subr.bf16.mxu0 0
      %861 = vmatpush2.bf16.msra.mxu0 0
      %862 = vmatprep.subr.bf16.mxu0 0
      %863 = vmatpush2.bf16.msra.mxu0 0
      %864 = vmatprep.mubr.bf16.mxu0 0
      %865 = vmatmul.mubr.bf16.gmra.mxu0 %v470
      %v866 = vpop.f32.mrf.mxu0
      %v867 = vadd.f32 %v707, %v866
      %v868 = vpop.f32.mrf.mxu0
      %v869 = vpop.f32.mrf.mxu0
      %v870 = vpop.f32.mrf.mxu0
      %871 = vdwg.mxu0
      %v876 = vunpack.c.l.b16 %v684
      %v877 = vunpack.c.l.b16 %v685
      %v878 = vunpack.c.l.b16 %v686
      %v879 = vunpack.c.l.b16 %v687
      %v880 = vpack.c.b16 %v877, %v876
      %v881 = vpack.c.b16 %v879, %v878
      %884 = vmatprep.subr.bf16.mxu0 0
      %885 = vmatpush1.bf16.msra.mxu0 0
      %886 = vmatprep.subr.bf16.mxu0 0
      %887 = vmatpush1.bf16.msra.mxu0 0
      %888 = vmatprep.subr.bf16.mxu0 0
      %889 = vmatpush1.bf16.msra.mxu0 0
      %890 = vmatprep.subr.bf16.mxu0 0
      %891 = vmatpush1.bf16.msra.mxu0 0
      %892 = vmatprep.subr.bf16.mxu0 0
      %893 = vmatpush1.bf16.msra.mxu0 0
      %894 = vmatprep.subr.bf16.mxu0 0
      %895 = vmatpush1.bf16.msra.mxu0 0
      %896 = vmatprep.subr.bf16.mxu0 0
      %897 = vmatpush1.bf16.msra.mxu0 %v881
      %898 = vmatprep.subr.bf16.mxu0 0
      %899 = vmatpush1.bf16.msra.mxu0 %v880
      %900 = vmatprep.subr.bf16.mxu0 0
      %901 = vmatpush2.bf16.msra.mxu0 0
      %902 = vmatprep.subr.bf16.mxu0 0
      %903 = vmatpush2.bf16.msra.mxu0 0
      %904 = vmatprep.subr.bf16.mxu0 0
      %905 = vmatpush2.bf16.msra.mxu0 0
      %906 = vmatprep.subr.bf16.mxu0 0
      %907 = vmatpush2.bf16.msra.mxu0 0
      %908 = vmatprep.subr.bf16.mxu0 0
      %909 = vmatpush2.bf16.msra.mxu0 0
      %910 = vmatprep.subr.bf16.mxu0 0
      %911 = vmatpush2.bf16.msra.mxu0 0
      %912 = vmatprep.subr.bf16.mxu0 0
      %913 = vmatpush2.bf16.msra.mxu0 0
      %914 = vmatprep.subr.bf16.mxu0 0
      %915 = vmatpush2.bf16.msra.mxu0 0
      %916 = vmatprep.mubr.bf16.mxu0 0
      %917 = vmatmul.mubr.bf16.gmra.mxu0 %v470
      %v918 = vpop.f32.mrf.mxu0
      %v919 = vadd.f32 %v711, %v918
      %v920 = vpop.f32.mrf.mxu0
      %v921 = vpop.f32.mrf.mxu0
      %v922 = vpop.f32.mrf.mxu0
      %923 = vdwg.mxu0
      %v924 = vpack.c.bf16 %v763, %v763
      %v925 = vpack.c.bf16 %v815, %v815
      %v926 = vpack.c.bf16 %v867, %v867
      %v927 = vpack.c.bf16 %v919, %v919
      %v928 = vld [vmem:[%s4] sm:$0xf]
      %v929 = vld [vmem:[%s4 + $0x4] sm:$0xf]
      %v930 = vld [vmem:[%s4 + $0x8] sm:$0xf]
      %v931 = vld [vmem:[%s4 + $0xc] sm:$0xf]
      %v932 = vld [vmem:[%s4 + $0x10] sm:$0xf]
      %v933 = vld [vmem:[%s4 + $0x14] sm:$0xf]
      %v934 = vld [vmem:[%s4 + $0x18] sm:$0xf]
      %v935 = vld [vmem:[%s4 + $0x1c] sm:$0xf]
      %v936 = vld [vmem:[%s4 + $0x20] sm:$0xf]
      %v937 = vld [vmem:[%s4 + $0x24] sm:$0xf]
      %v938 = vld [vmem:[%s4 + $0x28] sm:$0xf]
      %v939 = vld [vmem:[%s4 + $0x2c] sm:$0xf]
      %v940 = vld [vmem:[%s4 + $0x30] sm:$0xf]
      %v941 = vld [vmem:[%s4 + $0x34] sm:$0xf]
      %v942 = vld [vmem:[%s4 + $0x38] sm:$0xf]
      %v943 = vld [vmem:[%s4 + $0x3c] sm:$0xf]
      %v944 = vld [vmem:[%s7] sm:$0x1]
      %v945 = vld [vmem:[%s7 + $0x1] sm:$0x1]
      %v946 = vld [vmem:[%s7 + $0x2] sm:$0x1]
      %v947 = vld [vmem:[%s7 + $0x3] sm:$0x1]
      %v952 = vlaneseq
      %v953 = vshrl.u32 %v952, 7
      %v954 = vsub.s32 0, %v953
      %v955 = vrot.slane %v944, %v954
      %v956 = vlaneseq
      %v957 = vshrl.u32 %v956, 7
      %v958 = vsub.s32 0, %v957
      %v959 = vrot.slane %v945, %v958
      %v960 = vlaneseq
      %v961 = vshrl.u32 %v960, 7
      %v962 = vsub.s32 0, %v961
      %v963 = vrot.slane %v946, %v962
      %v964 = vlaneseq
      %v965 = vshrl.u32 %v964, 7
      %v966 = vsub.s32 0, %v965
      %v967 = vrot.slane %v947, %v966
      %v976 = vunpack.c.l.b16 %v928
      %v977 = vunpack.c.l.b16 %v929
      %v978 = vunpack.c.l.b16 %v930
      %v979 = vunpack.c.l.b16 %v931
      %v980 = vpack.c.b16 %v977, %v976
      %v981 = vpack.c.b16 %v979, %v978
      %984 = vmatprep.subr.bf16.mxu0 0
      %985 = vmatpush1.bf16.msra.mxu0 0
      %986 = vmatprep.subr.bf16.mxu0 0
      %987 = vmatpush1.bf16.msra.mxu0 0
      %988 = vmatprep.subr.bf16.mxu0 0
      %989 = vmatpush1.bf16.msra.mxu0 0
      %990 = vmatprep.subr.bf16.mxu0 0
      %991 = vmatpush1.bf16.msra.mxu0 0
      %992 = vmatprep.subr.bf16.mxu0 0
      %993 = vmatpush1.bf16.msra.mxu0 0
      %994 = vmatprep.subr.bf16.mxu0 0
      %995 = vmatpush1.bf16.msra.mxu0 0
      %996 = vmatprep.subr.bf16.mxu0 0
      %997 = vmatpush1.bf16.msra.mxu0 %v981
      %998 = vmatprep.subr.bf16.mxu0 0
      %999 = vmatpush1.bf16.msra.mxu0 %v980
      %1000 = vmatprep.subr.bf16.mxu0 0
      %1001 = vmatpush2.bf16.msra.mxu0 0
      %1002 = vmatprep.subr.bf16.mxu0 0
      %1003 = vmatpush2.bf16.msra.mxu0 0
      %1004 = vmatprep.subr.bf16.mxu0 0
      %1005 = vmatpush2.bf16.msra.mxu0 0
      %1006 = vmatprep.subr.bf16.mxu0 0
      %1007 = vmatpush2.bf16.msra.mxu0 0
      %1008 = vmatprep.subr.bf16.mxu0 0
      %1009 = vmatpush2.bf16.msra.mxu0 0
      %1010 = vmatprep.subr.bf16.mxu0 0
      %1011 = vmatpush2.bf16.msra.mxu0 0
      %1012 = vmatprep.subr.bf16.mxu0 0
      %1013 = vmatpush2.bf16.msra.mxu0 0
      %1014 = vmatprep.subr.bf16.mxu0 0
      %1015 = vmatpush2.bf16.msra.mxu0 0
      %1016 = vmatprep.mubr.bf16.mxu0 0
      %1017 = vmatmul.mubr.bf16.gmra.mxu0 %v470
      %v1018 = vpop.f32.mrf.mxu0
      %v1019 = vadd.f32 %v955, %v1018
      %v1020 = vpop.f32.mrf.mxu0
      %v1021 = vpop.f32.mrf.mxu0
      %v1022 = vpop.f32.mrf.mxu0
      %1023 = vdwg.mxu0
      %v1028 = vunpack.c.l.b16 %v932
      %v1029 = vunpack.c.l.b16 %v933
      %v1030 = vunpack.c.l.b16 %v934
      %v1031 = vunpack.c.l.b16 %v935
      %v1032 = vpack.c.b16 %v1029, %v1028
      %v1033 = vpack.c.b16 %v1031, %v1030
      %1036 = vmatprep.subr.bf16.mxu0 0
      %1037 = vmatpush1.bf16.msra.mxu0 0
      %1038 = vmatprep.subr.bf16.mxu0 0
      %1039 = vmatpush1.bf16.msra.mxu0 0
      %1040 = vmatprep.subr.bf16.mxu0 0
      %1041 = vmatpush1.bf16.msra.mxu0 0
      %1042 = vmatprep.subr.bf16.mxu0 0
      %1043 = vmatpush1.bf16.msra.mxu0 0
      %1044 = vmatprep.subr.bf16.mxu0 0
      %1045 = vmatpush1.bf16.msra.mxu0 0
      %1046 = vmatprep.subr.bf16.mxu0 0
      %1047 = vmatpush1.bf16.msra.mxu0 0
      %1048 = vmatprep.subr.bf16.mxu0 0
      %1049 = vmatpush1.bf16.msra.mxu0 %v1033
      %1050 = vmatprep.subr.bf16.mxu0 0
      %1051 = vmatpush1.bf16.msra.mxu0 %v1032
      %1052 = vmatprep.subr.bf16.mxu0 0
      %1053 = vmatpush2.bf16.msra.mxu0 0
      %1054 = vmatprep.subr.bf16.mxu0 0
      %1055 = vmatpush2.bf16.msra.mxu0 0
      %1056 = vmatprep.subr.bf16.mxu0 0
      %1057 = vmatpush2.bf16.msra.mxu0 0
      %1058 = vmatprep.subr.bf16.mxu0 0
      %1059 = vmatpush2.bf16.msra.mxu0 0
      %1060 = vmatprep.subr.bf16.mxu0 0
      %1061 = vmatpush2.bf16.msra.mxu0 0
      %1062 = vmatprep.subr.bf16.mxu0 0
      %1063 = vmatpush2.bf16.msra.mxu0 0
      %1064 = vmatprep.subr.bf16.mxu0 0
      %1065 = vmatpush2.bf16.msra.mxu0 0
      %1066 = vmatprep.subr.bf16.mxu0 0
      %1067 = vmatpush2.bf16.msra.mxu0 0
      %1068 = vmatprep.mubr.bf16.mxu0 0
      %1069 = vmatmul.mubr.bf16.gmra.mxu0 %v470
      %v1070 = vpop.f32.mrf.mxu0
      %v1071 = vadd.f32 %v959, %v1070
      %v1072 = vpop.f32.mrf.mxu0
      %v1073 = vpop.f32.mrf.mxu0
      %v1074 = vpop.f32.mrf.mxu0
      %1075 = vdwg.mxu0
      %v1080 = vunpack.c.l.b16 %v936
      %v1081 = vunpack.c.l.b16 %v937
      %v1082 = vunpack.c.l.b16 %v938
      %v1083 = vunpack.c.l.b16 %v939
      %v1084 = vpack.c.b16 %v1081, %v1080
      %v1085 = vpack.c.b16 %v1083, %v1082
      %1088 = vmatprep.subr.bf16.mxu0 0
      %1089 = vmatpush1.bf16.msra.mxu0 0
      %1090 = vmatprep.subr.bf16.mxu0 0
      %1091 = vmatpush1.bf16.msra.mxu0 0
      %1092 = vmatprep.subr.bf16.mxu0 0
      %1093 = vmatpush1.bf16.msra.mxu0 0
      %1094 = vmatprep.subr.bf16.mxu0 0
      %1095 = vmatpush1.bf16.msra.mxu0 0
      %1096 = vmatprep.subr.bf16.mxu0 0
      %1097 = vmatpush1.bf16.msra.mxu0 0
      %1098 = vmatprep.subr.bf16.mxu0 0
      %1099 = vmatpush1.bf16.msra.mxu0 0
      %1100 = vmatprep.subr.bf16.mxu0 0
      %1101 = vmatpush1.bf16.msra.mxu0 %v1085
      %1102 = vmatprep.subr.bf16.mxu0 0
      %1103 = vmatpush1.bf16.msra.mxu0 %v1084
      %1104 = vmatprep.subr.bf16.mxu0 0
      %1105 = vmatpush2.bf16.msra.mxu0 0
      %1106 = vmatprep.subr.bf16.mxu0 0
      %1107 = vmatpush2.bf16.msra.mxu0 0
      %1108 = vmatprep.subr.bf16.mxu0 0
      %1109 = vmatpush2.bf16.msra.mxu0 0
      %1110 = vmatprep.subr.bf16.mxu0 0
      %1111 = vmatpush2.bf16.msra.mxu0 0
      %1112 = vmatprep.subr.bf16.mxu0 0
      %1113 = vmatpush2.bf16.msra.mxu0 0
      %1114 = vmatprep.subr.bf16.mxu0 0
      %1115 = vmatpush2.bf16.msra.mxu0 0
      %1116 = vmatprep.subr.bf16.mxu0 0
      %1117 = vmatpush2.bf16.msra.mxu0 0
      %1118 = vmatprep.subr.bf16.mxu0 0
      %1119 = vmatpush2.bf16.msra.mxu0 0
      %1120 = vmatprep.mubr.bf16.mxu0 0
      %1121 = vmatmul.mubr.bf16.gmra.mxu0 %v470
      %v1122 = vpop.f32.mrf.mxu0
      %v1123 = vadd.f32 %v963, %v1122
      %v1124 = vpop.f32.mrf.mxu0
      %v1125 = vpop.f32.mrf.mxu0
      %v1126 = vpop.f32.mrf.mxu0
      %1127 = vdwg.mxu0
      %v1132 = vunpack.c.l.b16 %v940
      %v1133 = vunpack.c.l.b16 %v941
      %v1134 = vunpack.c.l.b16 %v942
      %v1135 = vunpack.c.l.b16 %v943
      %v1136 = vpack.c.b16 %v1133, %v1132
      %v1137 = vpack.c.b16 %v1135, %v1134
      %1140 = vmatprep.subr.bf16.mxu0 0
      %1141 = vmatpush1.bf16.msra.mxu0 0
      %1142 = vmatprep.subr.bf16.mxu0 0
      %1143 = vmatpush1.bf16.msra.mxu0 0
      %1144 = vmatprep.subr.bf16.mxu0 0
      %1145 = vmatpush1.bf16.msra.mxu0 0
      %1146 = vmatprep.subr.bf16.mxu0 0
      %1147 = vmatpush1.bf16.msra.mxu0 0
      %1148 = vmatprep.subr.bf16.mxu0 0
      %1149 = vmatpush1.bf16.msra.mxu0 0
      %1150 = vmatprep.subr.bf16.mxu0 0
      %1151 = vmatpush1.bf16.msra.mxu0 0
      %1152 = vmatprep.subr.bf16.mxu0 0
      %1153 = vmatpush1.bf16.msra.mxu0 %v1137
      %1154 = vmatprep.subr.bf16.mxu0 0
      %1155 = vmatpush1.bf16.msra.mxu0 %v1136
      %1156 = vmatprep.subr.bf16.mxu0 0
      %1157 = vmatpush2.bf16.msra.mxu0 0
      %1158 = vmatprep.subr.bf16.mxu0 0
      %1159 = vmatpush2.bf16.msra.mxu0 0
      %1160 = vmatprep.subr.bf16.mxu0 0
      %1161 = vmatpush2.bf16.msra.mxu0 0
      %1162 = vmatprep.subr.bf16.mxu0 0
      %1163 = vmatpush2.bf16.msra.mxu0 0
      %1164 = vmatprep.subr.bf16.mxu0 0
      %1165 = vmatpush2.bf16.msra.mxu0 0
      %1166 = vmatprep.subr.bf16.mxu0 0
      %1167 = vmatpush2.bf16.msra.mxu0 0
      %1168 = vmatprep.subr.bf16.mxu0 0
      %1169 = vmatpush2.bf16.msra.mxu0 0
      %1170 = vmatprep.subr.bf16.mxu0 0
      %1171 = vmatpush2.bf16.msra.mxu0 0
      %1172 = vmatprep.mubr.bf16.mxu0 0
      %1173 = vmatmul.mubr.bf16.gmra.mxu0 %v470
      %v1174 = vpop.f32.mrf.mxu0
      %v1175 = vadd.f32 %v967, %v1174
      %v1176 = vpop.f32.mrf.mxu0
      %v1177 = vpop.f32.mrf.mxu0
      %v1178 = vpop.f32.mrf.mxu0
      %1179 = vdwg.mxu0
      %v1180 = vpack.c.bf16 %v1019, %v1019
      %v1181 = vpack.c.bf16 %v1071, %v1071
      %v1182 = vpack.c.bf16 %v1123, %v1123
      %v1183 = vpack.c.bf16 %v1175, %v1175
      %vm1184 = vcmask 64512
      %v1186 = vsel %vm1184, %v668, 0
      %v1189 = vsel %vm1184, %v924, 0
      %1191 = vmatprep.subr.bf16.mxu0 0
      %1192 = vmatpush1.bf16.xpose.msra.mxu0 0
      %1193 = vmatprep.subr.bf16.mxu0 0
      %1194 = vmatpush1.bf16.xpose.msra.mxu0 0
      %1195 = vmatprep.subr.bf16.mxu0 0
      %1196 = vmatpush1.bf16.xpose.msra.mxu0 0
      %1197 = vmatprep.subr.bf16.mxu0 0
      %1198 = vmatpush1.bf16.xpose.msra.mxu0 0
      %1199 = vmatprep.subr.bf16.mxu0 0
      %1200 = vmatpush1.bf16.xpose.msra.mxu0 0
      %1201 = vmatprep.subr.bf16.mxu0 0
      %1202 = vmatpush1.bf16.xpose.msra.mxu0 0
      %1203 = vmatprep.subr.bf16.mxu0 0
      %1204 = vmatpush1.bf16.xpose.msra.mxu0 0
      %1205 = vmatprep.subr.bf16.mxu0 0
      %1206 = vmatpush1.bf16.xpose.msra.mxu0 %v1189
      %1207 = vmatprep.subr.bf16.mxu0 0
      %1208 = vmatpush2.bf16.xpose.msra.mxu0 0
      %1209 = vmatprep.subr.bf16.mxu0 0
      %1210 = vmatpush2.bf16.xpose.msra.mxu0 0
      %1211 = vmatprep.subr.bf16.mxu0 0
      %1212 = vmatpush2.bf16.xpose.msra.mxu0 0
      %1213 = vmatprep.subr.bf16.mxu0 0
      %1214 = vmatpush2.bf16.xpose.msra.mxu0 0
      %1215 = vmatprep.subr.bf16.mxu0 0
      %1216 = vmatpush2.bf16.xpose.msra.mxu0 0
      %1217 = vmatprep.subr.bf16.mxu0 0
      %1218 = vmatpush2.bf16.xpose.msra.mxu0 0
      %1219 = vmatprep.subr.bf16.mxu0 0
      %1220 = vmatpush2.bf16.xpose.msra.mxu0 0
      %1221 = vmatprep.subr.bf16.mxu0 0
      %1222 = vmatpush2.bf16.xpose.msra.mxu0 0
      %1223 = vmatprep.mubr.bf16.mxu0 0
      %1224 = vmatmul.mubr.bf16.gmra.mxu0 %v1186
      %v1225 = vpop.f32.mrf.mxu0
      %v1226 = vadd.f32 0.0, %v1225
      %v1227 = vpop.f32.mrf.mxu0
      %v1228 = vpop.f32.mrf.mxu0
      %v1229 = vpop.f32.mrf.mxu0
      %1230 = vdwg.mxu0
      %v1232 = vsel %vm1184, %v669, 0
      %v1235 = vsel %vm1184, %v925, 0
      %1237 = vmatprep.subr.bf16.mxu0 0
      %1238 = vmatpush1.bf16.xpose.msra.mxu0 0
      %1239 = vmatprep.subr.bf16.mxu0 0
      %1240 = vmatpush1.bf16.xpose.msra.mxu0 0
      %1241 = vmatprep.subr.bf16.mxu0 0
      %1242 = vmatpush1.bf16.xpose.msra.mxu0 0
      %1243 = vmatprep.subr.bf16.mxu0 0
      %1244 = vmatpush1.bf16.xpose.msra.mxu0 0
      %1245 = vmatprep.subr.bf16.mxu0 0
      %1246 = vmatpush1.bf16.xpose.msra.mxu0 0
      %1247 = vmatprep.subr.bf16.mxu0 0
      %1248 = vmatpush1.bf16.xpose.msra.mxu0 0
      %1249 = vmatprep.subr.bf16.mxu0 0
      %1250 = vmatpush1.bf16.xpose.msra.mxu0 0
      %1251 = vmatprep.subr.bf16.mxu0 0
      %1252 = vmatpush1.bf16.xpose.msra.mxu0 %v1235
      %1253 = vmatprep.subr.bf16.mxu0 0
      %1254 = vmatpush2.bf16.xpose.msra.mxu0 0
      %1255 = vmatprep.subr.bf16.mxu0 0
      %1256 = vmatpush2.bf16.xpose.msra.mxu0 0
      %1257 = vmatprep.subr.bf16.mxu0 0
      %1258 = vmatpush2.bf16.xpose.msra.mxu0 0
      %1259 = vmatprep.subr.bf16.mxu0 0
      %1260 = vmatpush2.bf16.xpose.msra.mxu0 0
      %1261 = vmatprep.subr.bf16.mxu0 0
      %1262 = vmatpush2.bf16.xpose.msra.mxu0 0
      %1263 = vmatprep.subr.bf16.mxu0 0
      %1264 = vmatpush2.bf16.xpose.msra.mxu0 0
      %1265 = vmatprep.subr.bf16.mxu0 0
      %1266 = vmatpush2.bf16.xpose.msra.mxu0 0
      %1267 = vmatprep.subr.bf16.mxu0 0
      %1268 = vmatpush2.bf16.xpose.msra.mxu0 0
      %1269 = vmatprep.mubr.bf16.mxu0 0
      %1270 = vmatmul.mubr.bf16.gmra.mxu0 %v1232
      %v1271 = vpop.f32.mrf.mxu0
      %v1272 = vadd.f32 0.0, %v1271
      %v1273 = vpop.f32.mrf.mxu0
      %v1274 = vpop.f32.mrf.mxu0
      %v1275 = vpop.f32.mrf.mxu0
      %1276 = vdwg.mxu0
      %v1278 = vsel %vm1184, %v670, 0
      %v1281 = vsel %vm1184, %v926, 0
      %1283 = vmatprep.subr.bf16.mxu0 0
      %1284 = vmatpush1.bf16.xpose.msra.mxu0 0
      %1285 = vmatprep.subr.bf16.mxu0 0
      %1286 = vmatpush1.bf16.xpose.msra.mxu0 0
      %1287 = vmatprep.subr.bf16.mxu0 0
      %1288 = vmatpush1.bf16.xpose.msra.mxu0 0
      %1289 = vmatprep.subr.bf16.mxu0 0
      %1290 = vmatpush1.bf16.xpose.msra.mxu0 0
      %1291 = vmatprep.subr.bf16.mxu0 0
      %1292 = vmatpush1.bf16.xpose.msra.mxu0 0
      %1293 = vmatprep.subr.bf16.mxu0 0
      %1294 = vmatpush1.bf16.xpose.msra.mxu0 0
      %1295 = vmatprep.subr.bf16.mxu0 0
      %1296 = vmatpush1.bf16.xpose.msra.mxu0 0
      %1297 = vmatprep.subr.bf16.mxu0 0
      %1298 = vmatpush1.bf16.xpose.msra.mxu0 %v1281
      %1299 = vmatprep.subr.bf16.mxu0 0
      %1300 = vmatpush2.bf16.xpose.msra.mxu0 0
      %1301 = vmatprep.subr.bf16.mxu0 0
      %1302 = vmatpush2.bf16.xpose.msra.mxu0 0
      %1303 = vmatprep.subr.bf16.mxu0 0
      %1304 = vmatpush2.bf16.xpose.msra.mxu0 0
      %1305 = vmatprep.subr.bf16.mxu0 0
      %1306 = vmatpush2.bf16.xpose.msra.mxu0 0
      %1307 = vmatprep.subr.bf16.mxu0 0
      %1308 = vmatpush2.bf16.xpose.msra.mxu0 0
      %1309 = vmatprep.subr.bf16.mxu0 0
      %1310 = vmatpush2.bf16.xpose.msra.mxu0 0
      %1311 = vmatprep.subr.bf16.mxu0 0
      %1312 = vmatpush2.bf16.xpose.msra.mxu0 0
      %1313 = vmatprep.subr.bf16.mxu0 0
      %1314 = vmatpush2.bf16.xpose.msra.mxu0 0
      %1315 = vmatprep.mubr.bf16.mxu0 0
      %1316 = vmatmul.mubr.bf16.gmra.mxu0 %v1278
      %v1317 = vpop.f32.mrf.mxu0
      %v1318 = vadd.f32 0.0, %v1317
      %v1319 = vpop.f32.mrf.mxu0
      %v1320 = vpop.f32.mrf.mxu0
      %v1321 = vpop.f32.mrf.mxu0
      %1322 = vdwg.mxu0
      %v1324 = vsel %vm1184, %v671, 0
      %v1327 = vsel %vm1184, %v927, 0
      %1329 = vmatprep.subr.bf16.mxu0 0
      %1330 = vmatpush1.bf16.xpose.msra.mxu0 0
      %1331 = vmatprep.subr.bf16.mxu0 0
      %1332 = vmatpush1.bf16.xpose.msra.mxu0 0
      %1333 = vmatprep.subr.bf16.mxu0 0
      %1334 = vmatpush1.bf16.xpose.msra.mxu0 0
      %1335 = vmatprep.subr.bf16.mxu0 0
      %1336 = vmatpush1.bf16.xpose.msra.mxu0 0
      %1337 = vmatprep.subr.bf16.mxu0 0
      %1338 = vmatpush1.bf16.xpose.msra.mxu0 0
      %1339 = vmatprep.subr.bf16.mxu0 0
      %1340 = vmatpush1.bf16.xpose.msra.mxu0 0
      %1341 = vmatprep.subr.bf16.mxu0 0
      %1342 = vmatpush1.bf16.xpose.msra.mxu0 0
      %1343 = vmatprep.subr.bf16.mxu0 0
      %1344 = vmatpush1.bf16.xpose.msra.mxu0 %v1327
      %1345 = vmatprep.subr.bf16.mxu0 0
      %1346 = vmatpush2.bf16.xpose.msra.mxu0 0
      %1347 = vmatprep.subr.bf16.mxu0 0
      %1348 = vmatpush2.bf16.xpose.msra.mxu0 0
      %1349 = vmatprep.subr.bf16.mxu0 0
      %1350 = vmatpush2.bf16.xpose.msra.mxu0 0
      %1351 = vmatprep.subr.bf16.mxu0 0
      %1352 = vmatpush2.bf16.xpose.msra.mxu0 0
      %1353 = vmatprep.subr.bf16.mxu0 0
      %1354 = vmatpush2.bf16.xpose.msra.mxu0 0
      %1355 = vmatprep.subr.bf16.mxu0 0
      %1356 = vmatpush2.bf16.xpose.msra.mxu0 0
      %1357 = vmatprep.subr.bf16.mxu0 0
      %1358 = vmatpush2.bf16.xpose.msra.mxu0 0
      %1359 = vmatprep.subr.bf16.mxu0 0
      %1360 = vmatpush2.bf16.xpose.msra.mxu0 0
      %1361 = vmatprep.mubr.bf16.mxu0 0
      %1362 = vmatmul.mubr.bf16.gmra.mxu0 %v1324
      %v1363 = vpop.f32.mrf.mxu0
      %v1364 = vadd.f32 0.0, %v1363
      %v1365 = vpop.f32.mrf.mxu0
      %v1366 = vpop.f32.mrf.mxu0
      %v1367 = vpop.f32.mrf.mxu0
      %1368 = vdwg.mxu0
      %v1369 = vmul.f32 %v1226, 0.35355338
      %v1370 = vmul.f32 %v1272, 0.35355338
      %v1371 = vmul.f32 %v1318, 0.35355338
      %v1372 = vmul.f32 %v1364, 0.35355338
      %v1373 = vld [vmem:[%s1] sm:$0xff]
      %v1374 = vadd.f32 %v1369, %v1373
      %v1375 = vadd.f32 %v1370, %v1373
      %v1376 = vadd.f32 %v1371, %v1373
      %v1377 = vadd.f32 %v1372, %v1373
      %v1378 = vsel %vm1184, %v1374, -inf
      %1379 = vmax.xlane.f32.xlu0 %v1378
      %v1380 = vpop.xlane.xlu0 %1379
      %v1381 = vsel %vm1184, %v1375, -inf
      %1382 = vmax.xlane.f32.xlu0 %v1381
      %v1383 = vpop.xlane.xlu0 %1382
      %v1384 = vsel %vm1184, %v1376, -inf
      %1385 = vmax.xlane.f32.xlu0 %v1384
      %v1386 = vpop.xlane.xlu0 %1385
      %v1387 = vsel %vm1184, %v1377, -inf
      %1388 = vmax.xlane.f32.xlu0 %v1387
      %v1389 = vpop.xlane.xlu0 %1388
      %v1390 = vsub.f32 %v1374, %v1380
      %v1391 = vsub.f32 %v1375, %v1383
      %v1392 = vsub.f32 %v1376, %v1386
      %v1393 = vsub.f32 %v1377, %v1389
      %v1394 = vmul.f32 %v1390, 1.442695
      %v1395 = vpow.pop %v1394
      %v1396 = vmul.f32 %v1391, 1.442695
      %v1397 = vpow.pop %v1396
      %v1398 = vmul.f32 %v1392, 1.442695
      %v1399 = vpow.pop %v1398
      %v1400 = vmul.f32 %v1393, 1.442695
      %v1401 = vpow.pop %v1400
      %v1402 = vsel %vm1184, %v1395, 0.0
      %1403 = vadd.xlane.f32.xlu0 %v1402
      %v1404 = vpop.xlane.xlu0 %1403
      %v1405 = vsel %vm1184, %v1397, 0.0
      %1406 = vadd.xlane.f32.xlu0 %v1405
      %v1407 = vpop.xlane.xlu0 %1406
      %v1408 = vsel %vm1184, %v1399, 0.0
      %1409 = vadd.xlane.f32.xlu0 %v1408
      %v1410 = vpop.xlane.xlu0 %1409
      %v1411 = vsel %vm1184, %v1401, 0.0
      %1412 = vadd.xlane.f32.xlu0 %v1411
      %v1413 = vpop.xlane.xlu0 %1412
      %v1414 = vrcp.pop %v1404
      %v1415 = vrcp.pop %v1407
      %v1416 = vrcp.pop %v1410
      %v1417 = vrcp.pop %v1413
      %v1418 = vmul.f32 %v1395, %v1414
      %v1419 = vmul.f32 %v1397, %v1415
      %v1420 = vmul.f32 %v1399, %v1416
      %v1421 = vmul.f32 %v1401, %v1417
      %v1422 = vpack.c.bf16 %v1418, %v1418
      %v1423 = vpack.c.bf16 %v1419, %v1419
      %v1424 = vpack.c.bf16 %v1420, %v1420
      %v1425 = vpack.c.bf16 %v1421, %v1421
      %v1427 = vsel %vm1184, %v1422, 0
      %vm1429 = vcmask 1043456
      %v1431 = vsel %vm1429, %v1180, 0
      %1433 = vmatprep.subr.bf16.mxu0 0
      %1434 = vmatpush1.bf16.msra.mxu0 0
      %1435 = vmatprep.subr.bf16.mxu0 0
      %1436 = vmatpush1.bf16.msra.mxu0 0
      %1437 = vmatprep.subr.bf16.mxu0 0
      %1438 = vmatpush1.bf16.msra.mxu0 0
      %1439 = vmatprep.subr.bf16.mxu0 0
      %1440 = vmatpush1.bf16.msra.mxu0 0
      %1441 = vmatprep.subr.bf16.mxu0 0
      %1442 = vmatpush1.bf16.msra.mxu0 0
      %1443 = vmatprep.subr.bf16.mxu0 0
      %1444 = vmatpush1.bf16.msra.mxu0 0
      %1445 = vmatprep.subr.bf16.mxu0 0
      %1446 = vmatpush1.bf16.msra.mxu0 0
      %1447 = vmatprep.subr.bf16.mxu0 0
      %1448 = vmatpush1.bf16.msra.mxu0 %v1431
      %1449 = vmatprep.subr.bf16.mxu0 0
      %1450 = vmatpush2.bf16.msra.mxu0 0
      %1451 = vmatprep.subr.bf16.mxu0 0
      %1452 = vmatpush2.bf16.msra.mxu0 0
      %1453 = vmatprep.subr.bf16.mxu0 0
      %1454 = vmatpush2.bf16.msra.mxu0 0
      %1455 = vmatprep.subr.bf16.mxu0 0
      %1456 = vmatpush2.bf16.msra.mxu0 0
      %1457 = vmatprep.subr.bf16.mxu0 0
      %1458 = vmatpush2.bf16.msra.mxu0 0
      %1459 = vmatprep.subr.bf16.mxu0 0
      %1460 = vmatpush2.bf16.msra.mxu0 0
      %1461 = vmatprep.subr.bf16.mxu0 0
      %1462 = vmatpush2.bf16.msra.mxu0 0
      %1463 = vmatprep.subr.bf16.mxu0 0
      %1464 = vmatpush2.bf16.msra.mxu0 0
      %1465 = vmatprep.mubr.bf16.mxu0 0
      %1466 = vmatmul.mubr.bf16.gmra.mxu0 %v1427
      %v1467 = vpop.f32.mrf.mxu0
      %v1468 = vadd.f32 0.0, %v1467
      %v1469 = vpop.f32.mrf.mxu0
      %v1470 = vpop.f32.mrf.mxu0
      %v1471 = vpop.f32.mrf.mxu0
      %1472 = vdwg.mxu0
      %v1474 = vsel %vm1184, %v1423, 0
      %v1477 = vsel %vm1429, %v1181, 0
      %1479 = vmatprep.subr.bf16.mxu0 0
      %1480 = vmatpush1.bf16.msra.mxu0 0
      %1481 = vmatprep.subr.bf16.mxu0 0
      %1482 = vmatpush1.bf16.msra.mxu0 0
      %1483 = vmatprep.subr.bf16.mxu0 0
      %1484 = vmatpush1.bf16.msra.mxu0 0
      %1485 = vmatprep.subr.bf16.mxu0 0
      %1486 = vmatpush1.bf16.msra.mxu0 0
      %1487 = vmatprep.subr.bf16.mxu0 0
      %1488 = vmatpush1.bf16.msra.mxu0 0
      %1489 = vmatprep.subr.bf16.mxu0 0
      %1490 = vmatpush1.bf16.msra.mxu0 0
      %1491 = vmatprep.subr.bf16.mxu0 0
      %1492 = vmatpush1.bf16.msra.mxu0 0
      %1493 = vmatprep.subr.bf16.mxu0 0
      %1494 = vmatpush1.bf16.msra.mxu0 %v1477
      %1495 = vmatprep.subr.bf16.mxu0 0
      %1496 = vmatpush2.bf16.msra.mxu0 0
      %1497 = vmatprep.subr.bf16.mxu0 0
      %1498 = vmatpush2.bf16.msra.mxu0 0
      %1499 = vmatprep.subr.bf16.mxu0 0
      %1500 = vmatpush2.bf16.msra.mxu0 0
      %1501 = vmatprep.subr.bf16.mxu0 0
      %1502 = vmatpush2.bf16.msra.mxu0 0
      %1503 = vmatprep.subr.bf16.mxu0 0
      %1504 = vmatpush2.bf16.msra.mxu0 0
      %1505 = vmatprep.subr.bf16.mxu0 0
      %1506 = vmatpush2.bf16.msra.mxu0 0
      %1507 = vmatprep.subr.bf16.mxu0 0
      %1508 = vmatpush2.bf16.msra.mxu0 0
      %1509 = vmatprep.subr.bf16.mxu0 0
      %1510 = vmatpush2.bf16.msra.mxu0 0
      %1511 = vmatprep.mubr.bf16.mxu0 0
      %1512 = vmatmul.mubr.bf16.gmra.mxu0 %v1474
      %v1513 = vpop.f32.mrf.mxu0
      %v1514 = vadd.f32 0.0, %v1513
      %v1515 = vpop.f32.mrf.mxu0
      %v1516 = vpop.f32.mrf.mxu0
      %v1517 = vpop.f32.mrf.mxu0
      %1518 = vdwg.mxu0
      %v1520 = vsel %vm1184, %v1424, 0
      %v1523 = vsel %vm1429, %v1182, 0
      %1525 = vmatprep.subr.bf16.mxu0 0
      %1526 = vmatpush1.bf16.msra.mxu0 0
      %1527 = vmatprep.subr.bf16.mxu0 0
      %1528 = vmatpush1.bf16.msra.mxu0 0
      %1529 = vmatprep.subr.bf16.mxu0 0
      %1530 = vmatpush1.bf16.msra.mxu0 0
      %1531 = vmatprep.subr.bf16.mxu0 0
      %1532 = vmatpush1.bf16.msra.mxu0 0
      %1533 = vmatprep.subr.bf16.mxu0 0
      %1534 = vmatpush1.bf16.msra.mxu0 0
      %1535 = vmatprep.subr.bf16.mxu0 0
      %1536 = vmatpush1.bf16.msra.mxu0 0
      %1537 = vmatprep.subr.bf16.mxu0 0
      %1538 = vmatpush1.bf16.msra.mxu0 0
      %1539 = vmatprep.subr.bf16.mxu0 0
      %1540 = vmatpush1.bf16.msra.mxu0 %v1523
      %1541 = vmatprep.subr.bf16.mxu0 0
      %1542 = vmatpush2.bf16.msra.mxu0 0
      %1543 = vmatprep.subr.bf16.mxu0 0
      %1544 = vmatpush2.bf16.msra.mxu0 0
      %1545 = vmatprep.subr.bf16.mxu0 0
      %1546 = vmatpush2.bf16.msra.mxu0 0
      %1547 = vmatprep.subr.bf16.mxu0 0
      %1548 = vmatpush2.bf16.msra.mxu0 0
      %1549 = vmatprep.subr.bf16.mxu0 0
      %1550 = vmatpush2.bf16.msra.mxu0 0
      %1551 = vmatprep.subr.bf16.mxu0 0
      %1552 = vmatpush2.bf16.msra.mxu0 0
      %1553 = vmatprep.subr.bf16.mxu0 0
      %1554 = vmatpush2.bf16.msra.mxu0 0
      %1555 = vmatprep.subr.bf16.mxu0 0
      %1556 = vmatpush2.bf16.msra.mxu0 0
      %1557 = vmatprep.mubr.bf16.mxu0 0
      %1558 = vmatmul.mubr.bf16.gmra.mxu0 %v1520
      %v1559 = vpop.f32.mrf.mxu0
      %v1560 = vadd.f32 0.0, %v1559
      %v1561 = vpop.f32.mrf.mxu0
      %v1562 = vpop.f32.mrf.mxu0
      %v1563 = vpop.f32.mrf.mxu0
      %1564 = vdwg.mxu0
      %v1566 = vsel %vm1184, %v1425, 0
      %v1569 = vsel %vm1429, %v1183, 0
      %1571 = vmatprep.subr.bf16.mxu0 0
      %1572 = vmatpush1.bf16.msra.mxu0 0
      %1573 = vmatprep.subr.bf16.mxu0 0
      %1574 = vmatpush1.bf16.msra.mxu0 0
      %1575 = vmatprep.subr.bf16.mxu0 0
      %1576 = vmatpush1.bf16.msra.mxu0 0
      %1577 = vmatprep.subr.bf16.mxu0 0
      %1578 = vmatpush1.bf16.msra.mxu0 0
      %1579 = vmatprep.subr.bf16.mxu0 0
      %1580 = vmatpush1.bf16.msra.mxu0 0
      %1581 = vmatprep.subr.bf16.mxu0 0
      %1582 = vmatpush1.bf16.msra.mxu0 0
      %1583 = vmatprep.subr.bf16.mxu0 0
      %1584 = vmatpush1.bf16.msra.mxu0 0
      %1585 = vmatprep.subr.bf16.mxu0 0
      %1586 = vmatpush1.bf16.msra.mxu0 %v1569
      %1587 = vmatprep.subr.bf16.mxu0 0
      %1588 = vmatpush2.bf16.msra.mxu0 0
      %1589 = vmatprep.subr.bf16.mxu0 0
      %1590 = vmatpush2.bf16.msra.mxu0 0
      %1591 = vmatprep.subr.bf16.mxu0 0
      %1592 = vmatpush2.bf16.msra.mxu0 0
      %1593 = vmatprep.subr.bf16.mxu0 0
      %1594 = vmatpush2.bf16.msra.mxu0 0
      %1595 = vmatprep.subr.bf16.mxu0 0
      %1596 = vmatpush2.bf16.msra.mxu0 0
      %1597 = vmatprep.subr.bf16.mxu0 0
      %1598 = vmatpush2.bf16.msra.mxu0 0
      %1599 = vmatprep.subr.bf16.mxu0 0
      %1600 = vmatpush2.bf16.msra.mxu0 0
      %1601 = vmatprep.subr.bf16.mxu0 0
      %1602 = vmatpush2.bf16.msra.mxu0 0
      %1603 = vmatprep.mubr.bf16.mxu0 0
      %1604 = vmatmul.mubr.bf16.gmra.mxu0 %v1566
      %v1605 = vpop.f32.mrf.mxu0
      %v1606 = vadd.f32 0.0, %v1605
      %v1607 = vpop.f32.mrf.mxu0
      %v1608 = vpop.f32.mrf.mxu0
      %v1609 = vpop.f32.mrf.mxu0
      %1610 = vdwg.mxu0
      %v1611 = vpack.c.bf16 %v1468, %v1468
      %v1612 = vpack.c.bf16 %v1514, %v1514
      %v1613 = vpack.c.bf16 %v1560, %v1560
      %v1614 = vpack.c.bf16 %v1606, %v1606
      %v1615 = vld [vmem:[%s8] sm:$0xf]
      %v1616 = vld [vmem:[%s8 + $0x4] sm:$0xf]
      %v1617 = vld [vmem:[%s8 + $0x8] sm:$0xf]
      %v1618 = vld [vmem:[%s8 + $0xc] sm:$0xf]
      %v1620 = vsel %vm1184, %v1611, 0
      %v1623 = vsel %vm1429, %v1615, 0
      %1625 = vmatprep.subr.bf16.mxu0 0
      %1626 = vmatpush1.bf16.msra.mxu0 0
      %1627 = vmatprep.subr.bf16.mxu0 0
      %1628 = vmatpush1.bf16.msra.mxu0 0
      %1629 = vmatprep.subr.bf16.mxu0 0
      %1630 = vmatpush1.bf16.msra.mxu0 0
      %1631 = vmatprep.subr.bf16.mxu0 0
      %1632 = vmatpush1.bf16.msra.mxu0 0
      %1633 = vmatprep.subr.bf16.mxu0 0
      %1634 = vmatpush1.bf16.msra.mxu0 0
      %1635 = vmatprep.subr.bf16.mxu0 0
      %1636 = vmatpush1.bf16.msra.mxu0 0
      %1637 = vmatprep.subr.bf16.mxu0 0
      %1638 = vmatpush1.bf16.msra.mxu0 0
      %1639 = vmatprep.subr.bf16.mxu0 0
      %1640 = vmatpush1.bf16.msra.mxu0 %v1623
      %1641 = vmatprep.subr.bf16.mxu0 0
      %1642 = vmatpush2.bf16.msra.mxu0 0
      %1643 = vmatprep.subr.bf16.mxu0 0
      %1644 = vmatpush2.bf16.msra.mxu0 0
      %1645 = vmatprep.subr.bf16.mxu0 0
      %1646 = vmatpush2.bf16.msra.mxu0 0
      %1647 = vmatprep.subr.bf16.mxu0 0
      %1648 = vmatpush2.bf16.msra.mxu0 0
      %1649 = vmatprep.subr.bf16.mxu0 0
      %1650 = vmatpush2.bf16.msra.mxu0 0
      %1651 = vmatprep.subr.bf16.mxu0 0
      %1652 = vmatpush2.bf16.msra.mxu0 0
      %1653 = vmatprep.subr.bf16.mxu0 0
      %1654 = vmatpush2.bf16.msra.mxu0 0
      %1655 = vmatprep.subr.bf16.mxu0 0
      %1656 = vmatpush2.bf16.msra.mxu0 0
      %1657 = vmatprep.mubr.bf16.mxu0 0
      %1658 = vmatmul.mubr.bf16.gmra.mxu0 %v1620
      %v1659 = vpop.f32.mrf.mxu0
      %v1660 = vadd.f32 0.0, %v1659
      %v1661 = vpop.f32.mrf.mxu0
      %v1662 = vpop.f32.mrf.mxu0
      %v1663 = vpop.f32.mrf.mxu0
      %1664 = vdwg.mxu0
      %v1666 = vsel %vm1184, %v1612, 0
      %v1669 = vsel %vm1429, %v1616, 0
      %1671 = vmatprep.subr.bf16.mxu0 0
      %1672 = vmatpush1.bf16.msra.mxu0 0
      %1673 = vmatprep.subr.bf16.mxu0 0
      %1674 = vmatpush1.bf16.msra.mxu0 0
      %1675 = vmatprep.subr.bf16.mxu0 0
      %1676 = vmatpush1.bf16.msra.mxu0 0
      %1677 = vmatprep.subr.bf16.mxu0 0
      %1678 = vmatpush1.bf16.msra.mxu0 0
      %1679 = vmatprep.subr.bf16.mxu0 0
      %1680 = vmatpush1.bf16.msra.mxu0 0
      %1681 = vmatprep.subr.bf16.mxu0 0
      %1682 = vmatpush1.bf16.msra.mxu0 0
      %1683 = vmatprep.subr.bf16.mxu0 0
      %1684 = vmatpush1.bf16.msra.mxu0 0
      %1685 = vmatprep.subr.bf16.mxu0 0
      %1686 = vmatpush1.bf16.msra.mxu0 %v1669
      %1687 = vmatprep.subr.bf16.mxu0 0
      %1688 = vmatpush2.bf16.msra.mxu0 0
      %1689 = vmatprep.subr.bf16.mxu0 0
      %1690 = vmatpush2.bf16.msra.mxu0 0
      %1691 = vmatprep.subr.bf16.mxu0 0
      %1692 = vmatpush2.bf16.msra.mxu0 0
      %1693 = vmatprep.subr.bf16.mxu0 0
      %1694 = vmatpush2.bf16.msra.mxu0 0
      %1695 = vmatprep.subr.bf16.mxu0 0
      %1696 = vmatpush2.bf16.msra.mxu0 0
      %1697 = vmatprep.subr.bf16.mxu0 0
      %1698 = vmatpush2.bf16.msra.mxu0 0
      %1699 = vmatprep.subr.bf16.mxu0 0
      %1700 = vmatpush2.bf16.msra.mxu0 0
      %1701 = vmatprep.subr.bf16.mxu0 0
      %1702 = vmatpush2.bf16.msra.mxu0 0
      %1703 = vmatprep.mubr.bf16.mxu0 0
      %1704 = vmatmul.mubr.bf16.gmra.mxu0 %v1666
      %v1705 = vpop.f32.mrf.mxu0
      %v1706 = vadd.f32 0.0, %v1705
      %v1707 = vpop.f32.mrf.mxu0
      %v1708 = vpop.f32.mrf.mxu0
      %v1709 = vpop.f32.mrf.mxu0
      %1710 = vdwg.mxu0
      %v1712 = vsel %vm1184, %v1613, 0
      %v1715 = vsel %vm1429, %v1617, 0
      %1717 = vmatprep.subr.bf16.mxu0 0
      %1718 = vmatpush1.bf16.msra.mxu0 0
      %1719 = vmatprep.subr.bf16.mxu0 0
      %1720 = vmatpush1.bf16.msra.mxu0 0
      %1721 = vmatprep.subr.bf16.mxu0 0
      %1722 = vmatpush1.bf16.msra.mxu0 0
      %1723 = vmatprep.subr.bf16.mxu0 0
      %1724 = vmatpush1.bf16.msra.mxu0 0
      %1725 = vmatprep.subr.bf16.mxu0 0
      %1726 = vmatpush1.bf16.msra.mxu0 0
      %1727 = vmatprep.subr.bf16.mxu0 0
      %1728 = vmatpush1.bf16.msra.mxu0 0
      %1729 = vmatprep.subr.bf16.mxu0 0
      %1730 = vmatpush1.bf16.msra.mxu0 0
      %1731 = vmatprep.subr.bf16.mxu0 0
      %1732 = vmatpush1.bf16.msra.mxu0 %v1715
      %1733 = vmatprep.subr.bf16.mxu0 0
      %1734 = vmatpush2.bf16.msra.mxu0 0
      %1735 = vmatprep.subr.bf16.mxu0 0
      %1736 = vmatpush2.bf16.msra.mxu0 0
      %1737 = vmatprep.subr.bf16.mxu0 0
      %1738 = vmatpush2.bf16.msra.mxu0 0
      %1739 = vmatprep.subr.bf16.mxu0 0
      %1740 = vmatpush2.bf16.msra.mxu0 0
      %1741 = vmatprep.subr.bf16.mxu0 0
      %1742 = vmatpush2.bf16.msra.mxu0 0
      %1743 = vmatprep.subr.bf16.mxu0 0
      %1744 = vmatpush2.bf16.msra.mxu0 0
      %1745 = vmatprep.subr.bf16.mxu0 0
      %1746 = vmatpush2.bf16.msra.mxu0 0
      %1747 = vmatprep.subr.bf16.mxu0 0
      %1748 = vmatpush2.bf16.msra.mxu0 0
      %1749 = vmatprep.mubr.bf16.mxu0 0
      %1750 = vmatmul.mubr.bf16.gmra.mxu0 %v1712
      %v1751 = vpop.f32.mrf.mxu0
      %v1752 = vadd.f32 0.0, %v1751
      %v1753 = vpop.f32.mrf.mxu0
      %v1754 = vpop.f32.mrf.mxu0
      %v1755 = vpop.f32.mrf.mxu0
      %1756 = vdwg.mxu0
      %v1758 = vsel %vm1184, %v1614, 0
      %v1761 = vsel %vm1429, %v1618, 0
      %1763 = vmatprep.subr.bf16.mxu0 0
      %1764 = vmatpush1.bf16.msra.mxu0 0
      %1765 = vmatprep.subr.bf16.mxu0 0
      %1766 = vmatpush1.bf16.msra.mxu0 0
      %1767 = vmatprep.subr.bf16.mxu0 0
      %1768 = vmatpush1.bf16.msra.mxu0 0
      %1769 = vmatprep.subr.bf16.mxu0 0
      %1770 = vmatpush1.bf16.msra.mxu0 0
      %1771 = vmatprep.subr.bf16.mxu0 0
      %1772 = vmatpush1.bf16.msra.mxu0 0
      %1773 = vmatprep.subr.bf16.mxu0 0
      %1774 = vmatpush1.bf16.msra.mxu0 0
      %1775 = vmatprep.subr.bf16.mxu0 0
      %1776 = vmatpush1.bf16.msra.mxu0 0
      %1777 = vmatprep.subr.bf16.mxu0 0
      %1778 = vmatpush1.bf16.msra.mxu0 %v1761
      %1779 = vmatprep.subr.bf16.mxu0 0
      %1780 = vmatpush2.bf16.msra.mxu0 0
      %1781 = vmatprep.subr.bf16.mxu0 0
      %1782 = vmatpush2.bf16.msra.mxu0 0
      %1783 = vmatprep.subr.bf16.mxu0 0
      %1784 = vmatpush2.bf16.msra.mxu0 0
      %1785 = vmatprep.subr.bf16.mxu0 0
      %1786 = vmatpush2.bf16.msra.mxu0 0
      %1787 = vmatprep.subr.bf16.mxu0 0
      %1788 = vmatpush2.bf16.msra.mxu0 0
      %1789 = vmatprep.subr.bf16.mxu0 0
      %1790 = vmatpush2.bf16.msra.mxu0 0
      %1791 = vmatprep.subr.bf16.mxu0 0
      %1792 = vmatpush2.bf16.msra.mxu0 0
      %1793 = vmatprep.subr.bf16.mxu0 0
      %1794 = vmatpush2.bf16.msra.mxu0 0
      %1795 = vmatprep.mubr.bf16.mxu0 0
      %1796 = vmatmul.mubr.bf16.gmra.mxu0 %v1758
      %v1797 = vpop.f32.mrf.mxu0
      %v1798 = vadd.f32 0.0, %v1797
      %v1799 = vpop.f32.mrf.mxu0
      %v1800 = vpop.f32.mrf.mxu0
      %v1801 = vpop.f32.mrf.mxu0
      %1802 = vdwg.mxu0
      %v1803 = vsel %vm468, %v1660, 0.0
      %v1804 = vsel %vm468, %v1706, 0.0
      %v1805 = vadd.f32 %v1803, %v1804
      %v1806 = vsel %vm468, %v1752, 0.0
      %v1807 = vadd.f32 %v1805, %v1806
      %v1808 = vsel %vm468, %v1798, 0.0
      %v1809 = vadd.f32 %v1807, %v1808
      %v1810 = vld [vmem:[%s9] sm:$0x1]
      %v1812 = vlaneseq
      %v1813 = vshrl.u32 %v1812, 7
      %v1814 = vsub.s32 0, %v1813
      %v1815 = vrot.slane %v1810, %v1814
      %v1817 = vadd.f32 %v1809, %v1815
      %v1818 = vadd.f32 %v411, %v1817
      %v1819 = vsel %vm468, %v1818, 0.0
      %1820 = vadd.xlane.f32.xlu0 %v1819
      %v1821 = vpop.xlane.xlu0 %1820
      %v1822 = vrcp.pop 32.0
      %v1823 = vmul.f32 %v1821, %v1822
      %v1824 = vsub.f32 %v1818, %v1823
      %v1825 = vmul.f32 %v1824, %v1824
      %v1826 = vsel %vm468, %v1825, 0.0
      %1827 = vadd.xlane.f32.xlu0 %v1826
      %v1828 = vpop.xlane.xlu0 %1827
      %v1829 = vmul.f32 %v1828, %v1822
      %v1830 = vadd.f32 %v1829, 1e-05
      %v1831 = vrsqrt.pop %v1830
      %v1832 = vmul.f32 %v1824, %v1831
      %v1833 = vld [vmem:[%s10] sm:$0x1]
      %v1835 = vlaneseq
      %v1836 = vshrl.u32 %v1835, 7
      %v1837 = vsub.s32 0, %v1836
      %v1838 = vrot.slane %v1833, %v1837
      %v1840 = vmul.f32 %v1832, %v1838
      %v1841 = vld [vmem:[%s11] sm:$0x1]
      %v1843 = vlaneseq
      %v1844 = vshrl.u32 %v1843, 7
      %v1845 = vsub.s32 0, %v1844
      %v1846 = vrot.slane %v1841, %v1845
      %v1848 = vadd.f32 %v1840, %v1846
      %v1849 = vpack.c.bf16 %v1848, %v1848
      %vm1850 = vcmask 257024
      %1851 = vst.msk [vmem:[%s408] sm:$0xf] %vm1850, %v1849
      %p1852 = scmp.lt.s32.totalorder %s23, 1
      %s1853 = scalar_select %p1852, %s23, 1
      %s1854 = smul.addr %s1853, 4
      %s1855 = scalar_lea.vmem %s12, %s1854
      // Predicated region
      $region69: #{decoder_forward.7} parent=67 // pred_check
        %p1856 = pneg %p298
      $region70: #{decoder_forward.7} parent=67 // pred_check_branch
        %1858 = sbr.rel (%p1856) target = $region72
      $region71: #{decoder_forward.7} parent=67 // pred_region
        _
      $region72: #{decoder_forward.7} parent=67 // pred_fallthru
        _
    $region68: #{decoder_forward.7} parent=5 // pred_fallthru
      _
    %p1859 = scmp.le.s32.totalorder 2, %s18
    // Predicated region
    $region73: #{decoder_forward.7} parent=5 // pred_check
      %p1860 = pneg %p1859
    $region74: #{decoder_forward.7} parent=5 // pred_check_branch
      %1862 = sbr.rel (%p1860) target = $region76
    $region75: #{decoder_forward.7} parent=5 // pred_region
      %s1863 = ssub.s32 %s18, 2
      // Predicated region
      $region77: #{decoder_forward.7} parent=75 // pred_check
        %p1864 = pneg %p304
      $region78: #{decoder_forward.7} parent=75 // pred_check_branch
        %1866 = sbr.rel (%p1864) target = $region80
      $region79: #{decoder_forward.7} parent=75 // pred_region
        %p1867 = scmp.lt.s32.totalorder %s24, 1
        %s1868 = scalar_select %p1867, %s24, 1
        %s1869 = smul.addr %s1868, 4
        %s1870 = scalar_lea.vmem %s12, %s1869
      $region80: #{decoder_forward.7} parent=75 // pred_fallthru
        _
    $region76: #{decoder_forward.7} parent=5 // pred_fallthru
      _
  $region6: #{decoder_forward.7} parent=0 // loop_footer
    %s22 = sadd.s32 1, %s18
  $region7: #{decoder_forward.7} parent=0 // loop_footer_branch
    %17 = sbr.rel target = $region3
  $region8: #{decoder_forward.7} parent=0 // loop_exit
    _

</llo_original>
